<compile_context>
chip_gen: v6e
topology: v6e:2x2x1
jax: 0.10.0
libtpu: 0.0.40
codegen_flags: <defaults>
</compile_context>

<pallas_src>
import jax
import jax.numpy as jnp
from jax.experimental import pallas as pl
from jax.experimental.pallas import tpu as pltpu

# ---------------- config (mirrors the relevant `opt` fields) ----------------
VOCAB_SIZE = 127            # opt.vocab_size -> embedding rows = 128
INPUT_ENCODING_SIZE = 32    # opt.input_encoding_size
RNN_SIZE = 32               # opt.rnn_size
NUM_LAYERS = 1              # opt.num_layers
SEQ_LENGTH = 8              # opt.seq_length
FC_FEAT_SIZE = 64           # opt.fc_feat_size
ATT_FEAT_SIZE = 48          # opt.att_feat_size
ATT_SIZE = 16               # opt.att_size
SAMPLE_RATE = 0             # opt.sample_rate -> always teacher forcing
USE_LINEAR = True           # opt.use_linear
V1 = VOCAB_SIZE + 1
E = INPUT_ENCODING_SIZE

# init_hidden copies relu(img_embed(fc)) into both h and c -> sizes must agree.
assert RNN_SIZE == INPUT_ENCODING_SIZE


# --------------------------- fused sequence kernel ---------------------------
def fused_seq_kernel(live_ref,
                     fc_ref, att2_ref, wimg_ref, bimg_ref, watt_ref, batt_ref,
                     concat_ref, tc_ref,
                     wa_ref, wh_ref, wv_ref,
                     wih_ref, whh_ref, bg_ref, wo_ref, bo_ref,
                     out_ref,
                     fc_s, att_s, attp_s, h_s, c_s, tcsum_s, hhist_s):
    t = pl.program_id(0)
    n_steps = pl.num_programs(0)
    Bs, Ls, Ed = att_s.shape

    # ---------------- step 0: feature embedding + state init -----------------
    @pl.when(t == 0)
    def _init():
        fc_e = jnp.maximum(
            jnp.dot(fc_ref[...], wimg_ref[...],
                    preferred_element_type=jnp.float32) + bimg_ref[...], 0.0)
        fc_s[...] = fc_e
        h_s[...] = fc_e                    # init_hidden: h = c = embedded fc
        c_s[...] = fc_e
        tcsum_s[...] = jnp.zeros_like(tcsum_s)
        hhist_s[...] = jnp.zeros_like(hhist_s)

        # relu(att_embed(att)) as one (B*L, Fa) x (Fa, E) MXU matmul
        att_e = jnp.maximum(
            jnp.dot(att2_ref[...], watt_ref[...],
                    preferred_element_type=jnp.float32) + batt_ref[...], 0.0)
        # step-invariant attention projection att @ Wa (also one 2-D matmul)
        att_p = jnp.dot(att_e, wa_ref[...], preferred_element_type=jnp.float32)
        for b in range(Bs):
            att_s[b] = att_e[b * Ls:(b + 1) * Ls, :]
            attp_s[b] = att_p[b * Ls:(b + 1) * Ls, :]

    live = live_ref[t] > 0

    concat_t = concat_ref[t]               # (B, E) = embed(it_t)
    tc_t = tc_ref[t]                       # (B, E) = embed_tc(it_t)
    fc_e = fc_s[...]
    h_prev = h_s[...]
    c_prev = c_s[...]

    # ---------- xt = embed(it) + softmax(fc * text_condition) (t >= 1) -------
    denom = jnp.full((Bs, Ed), jnp.maximum(t - 1, 1),
                     dtype=jnp.int32).astype(jnp.float32)
    mean_tc = tcsum_s[...] * pl.reciprocal(denom, approx=True)
    text_cond = jnp.where(t <= 1, tc_t, mean_tc)
    zmix = fc_e * text_cond
    zmax = jnp.max(zmix, axis=-1, keepdims=True)
    zexp = jnp.exp(zmix - zmax)
    zsm = zexp * pl.reciprocal(jnp.sum(zexp, axis=-1, keepdims=True), approx=True)
    xt = jnp.where(t == 0, fc_e, concat_t + zsm)

    # ------------------- soft attention over embedded att --------------------
    h_proj = jnp.dot(h_prev, wh_ref[...], preferred_element_type=jnp.float32)
    tanh_t = jnp.tanh(attp_s[...] + h_proj[:, None, :])            # (B, L, E)
    scores = jnp.sum(tanh_t * wv_ref[...][None, :, :], axis=-1)    # (B, L) lane-dense
    smax = jnp.max(scores, axis=-1, keepdims=True)
    sexp = jnp.exp(scores - smax)
    alpha = sexp * pl.reciprocal(jnp.sum(sexp, axis=-1, keepdims=True),
                                 approx=True)                       # (B, L)
    ctx = jnp.sum(alpha[:, :, None] * att_s[...], axis=1)           # (B, E)

    # --------------------------- LSTM cell on [xt; ctx] ----------------------
    zc = jnp.concatenate([xt, ctx], axis=-1)                        # (B, 2E)
    gates = (jnp.dot(zc, wih_ref[...], preferred_element_type=jnp.float32)
             + jnp.dot(h_prev, whh_ref[...], preferred_element_type=jnp.float32)
             + bg_ref[...])                                         # (B, 4E)
    i_g = jax.nn.sigmoid(gates[:, 0 * Ed:1 * Ed])
    f_g = jax.nn.sigmoid(gates[:, 1 * Ed:2 * Ed])
    g_g = jnp.tanh(gates[:, 2 * Ed:3 * Ed])
    o_g = jax.nn.sigmoid(gates[:, 3 * Ed:4 * Ed])
    c_new = f_g * c_prev + i_g * g_g
    h_new = o_g * jnp.tanh(c_new)

    @pl.when(live)
    def _update():
        h_s[...] = h_new
        c_s[...] = c_new
        tcsum_s[...] = tcsum_s[...] + tc_t      # running text-condition sum
        row = pl.multiple_of(t * Bs, Bs)
        hhist_s[pl.ds(row, Bs), :] = h_new

    # ------ last grid step: batched vocab projection + log_softmax -----------
    @pl.when(t == n_steps - 1)
    def _final():
        hh = hhist_s[...]                                           # (T*B, E)
        logits = jnp.dot(hh, wo_ref[...],
                         preferred_element_type=jnp.float32) + bo_ref[...]
        lmax = jnp.max(logits, axis=-1, keepdims=True)
        lse = lmax + jnp.log(jnp.sum(jnp.exp(logits - lmax), axis=-1,
                                     keepdims=True))
        out_ref[...] = logits - lse                                 # (T*B, V1)


# ------------------------------- parameters ---------------------------------
def init_params(key):
    ks = jax.random.split(key, 10)

    def xavier(k, shape):
        std = (2.0 / (shape[0] + shape[1])) ** 0.5
        return std * jax.random.normal(k, shape, jnp.float32)

    p = {}
    p['embed'] = 0.1 * jax.random.normal(ks[0], (V1, E), jnp.float32)       # nn.Embedding
    p['embed_tc'] = 0.1 * jax.random.normal(ks[1], (V1, E), jnp.float32)    # nn.Embedding
    p['w_img'] = xavier(ks[2], (FC_FEAT_SIZE, E))                           # img_embed (pre-transposed)
    p['b_img'] = jnp.zeros((1, E), jnp.float32)
    p['w_att'] = xavier(ks[3], (ATT_FEAT_SIZE, E))                          # att_embed (pre-transposed)
    p['b_att'] = jnp.zeros((1, E), jnp.float32)
    # soft-attention LSTM core
    p['att_wa'] = xavier(ks[4], (E, E))
    p['att_wh'] = xavier(ks[5], (E, E))
    p['att_wv'] = 0.1 * jax.random.normal(ks[6], (1, E), jnp.float32)
    p['w_ih'] = xavier(ks[7], (2 * E, 4 * E))
    p['w_hh'] = xavier(ks[8], (E, 4 * E))
    p['b_g'] = jnp.zeros((1, 4 * E), jnp.float32)
    p['w_o'] = xavier(ks[9], (E, V1))
    p['b_o'] = jnp.zeros((1, V1), jnp.float32)
    return p


# --------------------------------- forward ----------------------------------
def forward(params, fc_feats_raw, att_feats_raw, labels):
    B, Ffc = fc_feats_raw.shape
    _, L, Fa = att_feats_raw.shape
    S = labels.shape[1]
    T = S + 2
    E_, V1_ = params['w_o'].shape

    labels = labels.astype(jnp.int32)

    # per-step liveness (on-device replacement for the host-side early `break`)
    nz = (jnp.sum(labels, axis=0) != 0).astype(jnp.int32)                   # (S,)
    live = jnp.concatenate([jnp.ones((2,), jnp.int32), jnp.cumprod(nz)])    # (T,)

    # teacher-forced token ids per step (sample_rate == 0) and one-shot gathers
    it_seq = jnp.concatenate(
        [jnp.zeros((2, B), jnp.int32), jnp.transpose(labels)], axis=0)      # (T, B)
    concat_seq = jnp.take(params['embed'], it_seq, axis=0)                  # (T, B, E)
    tc_seq = jnp.take(params['embed_tc'], it_seq, axis=0)                   # (T, B, E)
    concat_seq = concat_seq.at[0].set(0.0)   # step 0 uses xt = fc_feats
    tc_seq = tc_seq.at[0].set(0.0)           # keep running tc-sum exact

    att2 = att_feats_raw.reshape(B * L, Fa)  # (B*L, Fa) for a single 2-D matmul

    def cmap2(t, lv):
        return (0, 0)

    def cmap3(t, lv):
        return (0, 0, 0)

    grid_spec = pltpu.PrefetchScalarGridSpec(
        num_scalar_prefetch=1,
        grid=(T,),
        in_specs=[
            pl.BlockSpec((B, Ffc), cmap2),            # fc_feats (raw)
            pl.BlockSpec((B * L, Fa), cmap2),         # att_feats (raw, flattened)
            pl.BlockSpec((Ffc, E_), cmap2),           # w_img
            pl.BlockSpec((1, E_), cmap2),             # b_img
            pl.BlockSpec((Fa, E_), cmap2),            # w_att
            pl.BlockSpec((1, E_), cmap2),             # b_att
            pl.BlockSpec((T, B, E_), cmap3),          # embed(it_t) per step
            pl.BlockSpec((T, B, E_), cmap3),          # embed_tc(it_t) per step
            pl.BlockSpec((E_, E_), cmap2),            # att_wa
            pl.BlockSpec((E_, E_), cmap2),            # att_wh
            pl.BlockSpec((1, E_), cmap2),             # att_wv
            pl.BlockSpec((2 * E_, 4 * E_), cmap2),    # w_ih
            pl.BlockSpec((E_, 4 * E_), cmap2),        # w_hh
            pl.BlockSpec((1, 4 * E_), cmap2),         # b_g
            pl.BlockSpec((E_, V1_), cmap2),           # w_o
            pl.BlockSpec((1, V1_), cmap2),            # b_o
        ],
        out_specs=pl.BlockSpec((T * B, V1_), cmap2),
        scratch_shapes=[
            pltpu.VMEM((B, E_), jnp.float32),         # fc_s  (embedded fc)
            pltpu.VMEM((B, L, E_), jnp.float32),      # att_s (embedded att)
            pltpu.VMEM((B, L, E_), jnp.float32),      # attp_s (att @ Wa, step-invariant)
            pltpu.VMEM((B, E_), jnp.float32),         # h_s
            pltpu.VMEM((B, E_), jnp.float32),         # c_s
            pltpu.VMEM((B, E_), jnp.float32),         # tcsum_s (running text-cond sum)
            pltpu.VMEM((T * B, E_), jnp.float32),     # hhist_s (per-step hidden states)
        ],
    )

    lp_flat = pl.pallas_call(
        fused_seq_kernel,
        grid_spec=grid_spec,
        out_shape=jax.ShapeDtypeStruct((T * B, V1_), jnp.float32),
        compiler_params=pltpu.CompilerParams(
            dimension_semantics=("arbitrary",)),
    )(live, fc_feats_raw, att2,
      params['w_img'], params['b_img'], params['w_att'], params['b_att'],
      concat_seq, tc_seq,
      params['att_wa'], params['att_wh'], params['att_wv'],
      params['w_ih'], params['w_hh'], params['b_g'],
      params['w_o'], params['b_o'])

    lp = lp_flat.reshape(T, B, V1_)[1:]                    # drop t == 0 (not emitted)
    lp = lp * live[1:, None, None].astype(jnp.float32)     # zero post-break steps
    return jnp.transpose(lp, (1, 0, 2))                    # (B, S+1, vocab+1)


if __name__ == "__main__":
    key = jax.random.PRNGKey(0)
    kp, kf, ka, kl = jax.random.split(key, 4)
    params = init_params(kp)

    B = 8
    fc = jax.random.normal(kf, (B, FC_FEAT_SIZE), jnp.float32)
    att = jax.random.normal(ka, (B, ATT_SIZE, ATT_FEAT_SIZE), jnp.float32)
    labels = jax.random.randint(kl, (B, SEQ_LENGTH), 1, VOCAB_SIZE + 1,
                                dtype=jnp.int32)

    fwd = jax.jit(forward)
    out = jax.block_until_ready(fwd(params, fc, att, labels))
    assert out.shape == (B, SEQ_LENGTH + 1, V1), out.shape
    assert bool(jnp.all(jnp.isfinite(out)))
    print("KERNEL_OK")
</pallas_src>

<mosaic_0001>
module attributes {stable_mosaic.version = 11 : i64} {
  func.func @fused_seq_kernel(%arg0: i32, %arg1: memref<10xi32, #tpu.memory_space<smem>>, %arg2: memref<8x64xf32, #tpu.memory_space<vmem>>, %arg3: memref<128x48xf32, #tpu.memory_space<vmem>>, %arg4: memref<64x32xf32, #tpu.memory_space<vmem>>, %arg5: memref<1x32xf32, #tpu.memory_space<vmem>>, %arg6: memref<48x32xf32, #tpu.memory_space<vmem>>, %arg7: memref<1x32xf32, #tpu.memory_space<vmem>>, %arg8: memref<10x8x32xf32, #tpu.memory_space<vmem>>, %arg9: memref<10x8x32xf32, #tpu.memory_space<vmem>>, %arg10: memref<32x32xf32, #tpu.memory_space<vmem>>, %arg11: memref<32x32xf32, #tpu.memory_space<vmem>>, %arg12: memref<1x32xf32, #tpu.memory_space<vmem>>, %arg13: memref<64x128xf32, #tpu.memory_space<vmem>>, %arg14: memref<32x128xf32, #tpu.memory_space<vmem>>, %arg15: memref<1x128xf32, #tpu.memory_space<vmem>>, %arg16: memref<32x128xf32, #tpu.memory_space<vmem>>, %arg17: memref<1x128xf32, #tpu.memory_space<vmem>>, %arg18: memref<80x128xf32, #tpu.memory_space<vmem>>, %arg19: memref<8x32xf32, #tpu.memory_space<vmem>>, %arg20: memref<8x16x32xf32, #tpu.memory_space<vmem>>, %arg21: memref<8x16x32xf32, #tpu.memory_space<vmem>>, %arg22: memref<8x32xf32, #tpu.memory_space<vmem>>, %arg23: memref<8x32xf32, #tpu.memory_space<vmem>>, %arg24: memref<8x32xf32, #tpu.memory_space<vmem>>, %arg25: memref<80x32xf32, #tpu.memory_space<vmem>>) attributes {dimension_semantics = [#tpu.dimension_semantics<arbitrary>], iteration_bounds = array<i64: 10>, scalar_prefetch = 1 : i64, scratch_operands = 7 : i64, tpu.core_type = #tpu.core_type<tc>, window_params = [{pipeline_mode = #tpu.pipeline_mode<synchronous>, transform_indices = @transform_0, window_bounds = array<i64: 8, 64>}, {pipeline_mode = #tpu.pipeline_mode<synchronous>, transform_indices = @transform_1, window_bounds = array<i64: 128, 48>}, {pipeline_mode = #tpu.pipeline_mode<synchronous>, transform_indices = @transform_2, window_bounds = array<i64: 64, 32>}, {pipeline_mode = #tpu.pipeline_mode<synchronous>, transform_indices = @transform_3, window_bounds = array<i64: 1, 32>}, {pipeline_mode = #tpu.pipeline_mode<synchronous>, transform_indices = @transform_4, window_bounds = array<i64: 48, 32>}, {pipeline_mode = #tpu.pipeline_mode<synchronous>, transform_indices = @transform_5, window_bounds = array<i64: 1, 32>}, {pipeline_mode = #tpu.pipeline_mode<synchronous>, transform_indices = @transform_6, window_bounds = array<i64: 10, 8, 32>}, {pipeline_mode = #tpu.pipeline_mode<synchronous>, transform_indices = @transform_7, window_bounds = array<i64: 10, 8, 32>}, {pipeline_mode = #tpu.pipeline_mode<synchronous>, transform_indices = @transform_8, window_bounds = array<i64: 32, 32>}, {pipeline_mode = #tpu.pipeline_mode<synchronous>, transform_indices = @transform_9, window_bounds = array<i64: 32, 32>}, {pipeline_mode = #tpu.pipeline_mode<synchronous>, transform_indices = @transform_10, window_bounds = array<i64: 1, 32>}, {pipeline_mode = #tpu.pipeline_mode<synchronous>, transform_indices = @transform_11, window_bounds = array<i64: 64, 128>}, {pipeline_mode = #tpu.pipeline_mode<synchronous>, transform_indices = @transform_12, window_bounds = array<i64: 32, 128>}, {pipeline_mode = #tpu.pipeline_mode<synchronous>, transform_indices = @transform_13, window_bounds = array<i64: 1, 128>}, {pipeline_mode = #tpu.pipeline_mode<synchronous>, transform_indices = @transform_14, window_bounds = array<i64: 32, 128>}, {pipeline_mode = #tpu.pipeline_mode<synchronous>, transform_indices = @transform_15, window_bounds = array<i64: 1, 128>}, {pipeline_mode = #tpu.pipeline_mode<synchronous>, transform_indices = @transform_16, window_bounds = array<i64: 80, 128>}]} {
    %c0_i32 = arith.constant 0 : i32
    %0 = arith.cmpi eq, %arg0, %c0_i32 : i32
    %1 = arith.extui %0 : i1 to i32
    %c0_i32_0 = arith.constant 0 : i32
    %2 = arith.cmpi ne, %1, %c0_i32_0 : i32
    scf.if %2 {
      %c0_45 = arith.constant 0 : index
      %c0_46 = arith.constant 0 : index
      %104 = vector.load %arg2[%c0_45, %c0_46] : memref<8x64xf32, #tpu.memory_space<vmem>>, vector<8x64xf32>
      %c0_47 = arith.constant 0 : index
      %c0_48 = arith.constant 0 : index
      %105 = vector.load %arg4[%c0_47, %c0_48] : memref<64x32xf32, #tpu.memory_space<vmem>>, vector<64x32xf32>
      %cst_49 = arith.constant dense<0.000000e+00> : vector<8x32xf32>
      %106 = tpu.matmul %104, %105, %cst_49 {dimension_numbers = #tpu.dot_dimension_numbers<[1], [0], [0], [1], [0, 0, 1, 1], [], []>} : vector<8x64xf32>, vector<64x32xf32>, vector<8x32xf32> -> vector<8x32xf32>
      %c0_50 = arith.constant 0 : index
      %c0_51 = arith.constant 0 : index
      %107 = vector.load %arg5[%c0_50, %c0_51] : memref<1x32xf32, #tpu.memory_space<vmem>>, vector<1x32xf32>
      %108 = vector.broadcast %107 : vector<1x32xf32> to vector<8x32xf32>
      %109 = arith.addf %106, %108 : vector<8x32xf32>
      %cst_52 = arith.constant 0.000000e+00 : f32
      %110 = vector.broadcast %cst_52 : f32 to vector<8x32xf32>
      %111 = arith.maximumf %109, %110 : vector<8x32xf32>
      %c0_53 = arith.constant 0 : index
      %c0_54 = arith.constant 0 : index
      %112 = vector.load %arg19[%c0_53, %c0_54] : memref<8x32xf32, #tpu.memory_space<vmem>>, vector<8x32xf32>
      tpu.vector_store %arg19[%c0_53, %c0_54], %111 {strides = array<i32>} : memref<8x32xf32, #tpu.memory_space<vmem>>, vector<8x32xf32>,
      %c0_55 = arith.constant 0 : index
      %c0_56 = arith.constant 0 : index
      %113 = vector.load %arg22[%c0_55, %c0_56] : memref<8x32xf32, #tpu.memory_space<vmem>>, vector<8x32xf32>
      tpu.vector_store %arg22[%c0_55, %c0_56], %111 {strides = array<i32>} : memref<8x32xf32, #tpu.memory_space<vmem>>, vector<8x32xf32>,
      %c0_57 = arith.constant 0 : index
      %c0_58 = arith.constant 0 : index
      %114 = vector.load %arg23[%c0_57, %c0_58] : memref<8x32xf32, #tpu.memory_space<vmem>>, vector<8x32xf32>
      tpu.vector_store %arg23[%c0_57, %c0_58], %111 {strides = array<i32>} : memref<8x32xf32, #tpu.memory_space<vmem>>, vector<8x32xf32>,
      %cst_59 = arith.constant 0.000000e+00 : f32
      %115 = vector.broadcast %cst_59 : f32 to vector<8x32xf32>
      %c0_60 = arith.constant 0 : index
      %c0_61 = arith.constant 0 : index
      %116 = vector.load %arg24[%c0_60, %c0_61] : memref<8x32xf32, #tpu.memory_space<vmem>>, vector<8x32xf32>
      tpu.vector_store %arg24[%c0_60, %c0_61], %115 {strides = array<i32>} : memref<8x32xf32, #tpu.memory_space<vmem>>, vector<8x32xf32>,
      %cst_62 = arith.constant 0.000000e+00 : f32
      %117 = vector.broadcast %cst_62 : f32 to vector<80x32xf32>
      %c0_63 = arith.constant 0 : index
      %c0_64 = arith.constant 0 : index
      %118 = vector.load %arg25[%c0_63, %c0_64] : memref<80x32xf32, #tpu.memory_space<vmem>>, vector<80x32xf32>
      tpu.vector_store %arg25[%c0_63, %c0_64], %117 {strides = array<i32>} : memref<80x32xf32, #tpu.memory_space<vmem>>, vector<80x32xf32>,
      %c0_65 = arith.constant 0 : index
      %c0_66 = arith.constant 0 : index
      %119 = vector.load %arg3[%c0_65, %c0_66] : memref<128x48xf32, #tpu.memory_space<vmem>>, vector<128x48xf32>
      %c0_67 = arith.constant 0 : index
      %c0_68 = arith.constant 0 : index
      %120 = vector.load %arg6[%c0_67, %c0_68] : memref<48x32xf32, #tpu.memory_space<vmem>>, vector<48x32xf32>
      %cst_69 = arith.constant dense<0.000000e+00> : vector<128x32xf32>
      %121 = tpu.matmul %119, %120, %cst_69 {dimension_numbers = #tpu.dot_dimension_numbers<[1], [0], [0], [1], [0, 0, 1, 1], [], []>} : vector<128x48xf32>, vector<48x32xf32>, vector<128x32xf32> -> vector<128x32xf32>
      %c0_70 = arith.constant 0 : index
      %c0_71 = arith.constant 0 : index
      %122 = vector.load %arg7[%c0_70, %c0_71] : memref<1x32xf32, #tpu.memory_space<vmem>>, vector<1x32xf32>
      %123 = vector.broadcast %122 : vector<1x32xf32> to vector<128x32xf32>
      %124 = arith.addf %121, %123 : vector<128x32xf32>
      %cst_72 = arith.constant 0.000000e+00 : f32
      %125 = vector.broadcast %cst_72 : f32 to vector<128x32xf32>
      %126 = arith.maximumf %124, %125 : vector<128x32xf32>
      %c0_73 = arith.constant 0 : index
      %c0_74 = arith.constant 0 : index
      %127 = vector.load %arg10[%c0_73, %c0_74] : memref<32x32xf32, #tpu.memory_space<vmem>>, vector<32x32xf32>
      %cst_75 = arith.constant dense<0.000000e+00> : vector<128x32xf32>
      %128 = tpu.matmul %126, %127, %cst_75 {dimension_numbers = #tpu.dot_dimension_numbers<[1], [0], [0], [1], [0, 0, 1, 1], [], []>} : vector<128x32xf32>, vector<32x32xf32>, vector<128x32xf32> -> vector<128x32xf32>
      %129 = vector.extract_strided_slice %126 {offsets = [0, 0], sizes = [16, 32], strides = [1, 1]} : vector<128x32xf32> to vector<16x32xf32>
      %c0_76 = arith.constant 0 : index
      %c0_77 = arith.constant 0 : index
      %c0_78 = arith.constant 0 : index
      %130 = vector.load %arg20[%c0_76, %c0_77, %c0_78] : memref<8x16x32xf32, #tpu.memory_space<vmem>>, vector<1x16x32xf32>
      %131 = vector.shape_cast %130 : vector<1x16x32xf32> to vector<16x32xf32>
      %132 = vector.shape_cast %129 : vector<16x32xf32> to vector<1x16x32xf32>
      tpu.vector_store %arg20[%c0_76, %c0_77, %c0_78], %132 {strides = array<i32>} : memref<8x16x32xf32, #tpu.memory_space<vmem>>, vector<1x16x32xf32>,
      %133 = vector.extract_strided_slice %128 {offsets = [0, 0], sizes = [16, 32], strides = [1, 1]} : vector<128x32xf32> to vector<16x32xf32>
      %c0_79 = arith.constant 0 : index
      %c0_80 = arith.constant 0 : index
      %c0_81 = arith.constant 0 : index
      %134 = vector.load %arg21[%c0_79, %c0_80, %c0_81] : memref<8x16x32xf32, #tpu.memory_space<vmem>>, vector<1x16x32xf32>
      %135 = vector.shape_cast %134 : vector<1x16x32xf32> to vector<16x32xf32>
      %136 = vector.shape_cast %133 : vector<16x32xf32> to vector<1x16x32xf32>
      tpu.vector_store %arg21[%c0_79, %c0_80, %c0_81], %136 {strides = array<i32>} : memref<8x16x32xf32, #tpu.memory_space<vmem>>, vector<1x16x32xf32>,
      %137 = vector.extract_strided_slice %126 {offsets = [16, 0], sizes = [16, 32], strides = [1, 1]} : vector<128x32xf32> to vector<16x32xf32>
      %c1 = arith.constant 1 : index
      %c0_82 = arith.constant 0 : index
      %c0_83 = arith.constant 0 : index
      %138 = vector.load %arg20[%c1, %c0_82, %c0_83] : memref<8x16x32xf32, #tpu.memory_space<vmem>>, vector<1x16x32xf32>
      %139 = vector.shape_cast %138 : vector<1x16x32xf32> to vector<16x32xf32>
      %140 = vector.shape_cast %137 : vector<16x32xf32> to vector<1x16x32xf32>
      tpu.vector_store %arg20[%c1, %c0_82, %c0_83], %140 {strides = array<i32>} : memref<8x16x32xf32, #tpu.memory_space<vmem>>, vector<1x16x32xf32>,
      %141 = vector.extract_strided_slice %128 {offsets = [16, 0], sizes = [16, 32], strides = [1, 1]} : vector<128x32xf32> to vector<16x32xf32>
      %c1_84 = arith.constant 1 : index
      %c0_85 = arith.constant 0 : index
      %c0_86 = arith.constant 0 : index
      %142 = vector.load %arg21[%c1_84, %c0_85, %c0_86] : memref<8x16x32xf32, #tpu.memory_space<vmem>>, vector<1x16x32xf32>
      %143 = vector.shape_cast %142 : vector<1x16x32xf32> to vector<16x32xf32>
      %144 = vector.shape_cast %141 : vector<16x32xf32> to vector<1x16x32xf32>
      tpu.vector_store %arg21[%c1_84, %c0_85, %c0_86], %144 {strides = array<i32>} : memref<8x16x32xf32, #tpu.memory_space<vmem>>, vector<1x16x32xf32>,
      %145 = vector.extract_strided_slice %126 {offsets = [32, 0], sizes = [16, 32], strides = [1, 1]} : vector<128x32xf32> to vector<16x32xf32>
      %c2 = arith.constant 2 : index
      %c0_87 = arith.constant 0 : index
      %c0_88 = arith.constant 0 : index
      %146 = vector.load %arg20[%c2, %c0_87, %c0_88] : memref<8x16x32xf32, #tpu.memory_space<vmem>>, vector<1x16x32xf32>
      %147 = vector.shape_cast %146 : vector<1x16x32xf32> to vector<16x32xf32>
      %148 = vector.shape_cast %145 : vector<16x32xf32> to vector<1x16x32xf32>
      tpu.vector_store %arg20[%c2, %c0_87, %c0_88], %148 {strides = array<i32>} : memref<8x16x32xf32, #tpu.memory_space<vmem>>, vector<1x16x32xf32>,
      %149 = vector.extract_strided_slice %128 {offsets = [32, 0], sizes = [16, 32], strides = [1, 1]} : vector<128x32xf32> to vector<16x32xf32>
      %c2_89 = arith.constant 2 : index
      %c0_90 = arith.constant 0 : index
      %c0_91 = arith.constant 0 : index
      %150 = vector.load %arg21[%c2_89, %c0_90, %c0_91] : memref<8x16x32xf32, #tpu.memory_space<vmem>>, vector<1x16x32xf32>
      %151 = vector.shape_cast %150 : vector<1x16x32xf32> to vector<16x32xf32>
      %152 = vector.shape_cast %149 : vector<16x32xf32> to vector<1x16x32xf32>
      tpu.vector_store %arg21[%c2_89, %c0_90, %c0_91], %152 {strides = array<i32>} : memref<8x16x32xf32, #tpu.memory_space<vmem>>, vector<1x16x32xf32>,
      %153 = vector.extract_strided_slice %126 {offsets = [48, 0], sizes = [16, 32], strides = [1, 1]} : vector<128x32xf32> to vector<16x32xf32>
      %c3 = arith.constant 3 : index
      %c0_92 = arith.constant 0 : index
      %c0_93 = arith.constant 0 : index
      %154 = vector.load %arg20[%c3, %c0_92, %c0_93] : memref<8x16x32xf32, #tpu.memory_space<vmem>>, vector<1x16x32xf32>
      %155 = vector.shape_cast %154 : vector<1x16x32xf32> to vector<16x32xf32>
      %156 = vector.shape_cast %153 : vector<16x32xf32> to vector<1x16x32xf32>
      tpu.vector_store %arg20[%c3, %c0_92, %c0_93], %156 {strides = array<i32>} : memref<8x16x32xf32, #tpu.memory_space<vmem>>, vector<1x16x32xf32>,
      %157 = vector.extract_strided_slice %128 {offsets = [48, 0], sizes = [16, 32], strides = [1, 1]} : vector<128x32xf32> to vector<16x32xf32>
      %c3_94 = arith.constant 3 : index
      %c0_95 = arith.constant 0 : index
      %c0_96 = arith.constant 0 : index
      %158 = vector.load %arg21[%c3_94, %c0_95, %c0_96] : memref<8x16x32xf32, #tpu.memory_space<vmem>>, vector<1x16x32xf32>
      %159 = vector.shape_cast %158 : vector<1x16x32xf32> to vector<16x32xf32>
      %160 = vector.shape_cast %157 : vector<16x32xf32> to vector<1x16x32xf32>
      tpu.vector_store %arg21[%c3_94, %c0_95, %c0_96], %160 {strides = array<i32>} : memref<8x16x32xf32, #tpu.memory_space<vmem>>, vector<1x16x32xf32>,
      %161 = vector.extract_strided_slice %126 {offsets = [64, 0], sizes = [16, 32], strides = [1, 1]} : vector<128x32xf32> to vector<16x32xf32>
      %c4 = arith.constant 4 : index
      %c0_97 = arith.constant 0 : index
      %c0_98 = arith.constant 0 : index
      %162 = vector.load %arg20[%c4, %c0_97, %c0_98] : memref<8x16x32xf32, #tpu.memory_space<vmem>>, vector<1x16x32xf32>
      %163 = vector.shape_cast %162 : vector<1x16x32xf32> to vector<16x32xf32>
      %164 = vector.shape_cast %161 : vector<16x32xf32> to vector<1x16x32xf32>
      tpu.vector_store %arg20[%c4, %c0_97, %c0_98], %164 {strides = array<i32>} : memref<8x16x32xf32, #tpu.memory_space<vmem>>, vector<1x16x32xf32>,
      %165 = vector.extract_strided_slice %128 {offsets = [64, 0], sizes = [16, 32], strides = [1, 1]} : vector<128x32xf32> to vector<16x32xf32>
      %c4_99 = arith.constant 4 : index
      %c0_100 = arith.constant 0 : index
      %c0_101 = arith.constant 0 : index
      %166 = vector.load %arg21[%c4_99, %c0_100, %c0_101] : memref<8x16x32xf32, #tpu.memory_space<vmem>>, vector<1x16x32xf32>
      %167 = vector.shape_cast %166 : vector<1x16x32xf32> to vector<16x32xf32>
      %168 = vector.shape_cast %165 : vector<16x32xf32> to vector<1x16x32xf32>
      tpu.vector_store %arg21[%c4_99, %c0_100, %c0_101], %168 {strides = array<i32>} : memref<8x16x32xf32, #tpu.memory_space<vmem>>, vector<1x16x32xf32>,
      %169 = vector.extract_strided_slice %126 {offsets = [80, 0], sizes = [16, 32], strides = [1, 1]} : vector<128x32xf32> to vector<16x32xf32>
      %c5 = arith.constant 5 : index
      %c0_102 = arith.constant 0 : index
      %c0_103 = arith.constant 0 : index
      %170 = vector.load %arg20[%c5, %c0_102, %c0_103] : memref<8x16x32xf32, #tpu.memory_space<vmem>>, vector<1x16x32xf32>
      %171 = vector.shape_cast %170 : vector<1x16x32xf32> to vector<16x32xf32>
      %172 = vector.shape_cast %169 : vector<16x32xf32> to vector<1x16x32xf32>
      tpu.vector_store %arg20[%c5, %c0_102, %c0_103], %172 {strides = array<i32>} : memref<8x16x32xf32, #tpu.memory_space<vmem>>, vector<1x16x32xf32>,
      %173 = vector.extract_strided_slice %128 {offsets = [80, 0], sizes = [16, 32], strides = [1, 1]} : vector<128x32xf32> to vector<16x32xf32>
      %c5_104 = arith.constant 5 : index
      %c0_105 = arith.constant 0 : index
      %c0_106 = arith.constant 0 : index
      %174 = vector.load %arg21[%c5_104, %c0_105, %c0_106] : memref<8x16x32xf32, #tpu.memory_space<vmem>>, vector<1x16x32xf32>
      %175 = vector.shape_cast %174 : vector<1x16x32xf32> to vector<16x32xf32>
      %176 = vector.shape_cast %173 : vector<16x32xf32> to vector<1x16x32xf32>
      tpu.vector_store %arg21[%c5_104, %c0_105, %c0_106], %176 {strides = array<i32>} : memref<8x16x32xf32, #tpu.memory_space<vmem>>, vector<1x16x32xf32>,
      %177 = vector.extract_strided_slice %126 {offsets = [96, 0], sizes = [16, 32], strides = [1, 1]} : vector<128x32xf32> to vector<16x32xf32>
      %c6 = arith.constant 6 : index
      %c0_107 = arith.constant 0 : index
      %c0_108 = arith.constant 0 : index
      %178 = vector.load %arg20[%c6, %c0_107, %c0_108] : memref<8x16x32xf32, #tpu.memory_space<vmem>>, vector<1x16x32xf32>
      %179 = vector.shape_cast %178 : vector<1x16x32xf32> to vector<16x32xf32>
      %180 = vector.shape_cast %177 : vector<16x32xf32> to vector<1x16x32xf32>
      tpu.vector_store %arg20[%c6, %c0_107, %c0_108], %180 {strides = array<i32>} : memref<8x16x32xf32, #tpu.memory_space<vmem>>, vector<1x16x32xf32>,
      %181 = vector.extract_strided_slice %128 {offsets = [96, 0], sizes = [16, 32], strides = [1, 1]} : vector<128x32xf32> to vector<16x32xf32>
      %c6_109 = arith.constant 6 : index
      %c0_110 = arith.constant 0 : index
      %c0_111 = arith.constant 0 : index
      %182 = vector.load %arg21[%c6_109, %c0_110, %c0_111] : memref<8x16x32xf32, #tpu.memory_space<vmem>>, vector<1x16x32xf32>
      %183 = vector.shape_cast %182 : vector<1x16x32xf32> to vector<16x32xf32>
      %184 = vector.shape_cast %181 : vector<16x32xf32> to vector<1x16x32xf32>
      tpu.vector_store %arg21[%c6_109, %c0_110, %c0_111], %184 {strides = array<i32>} : memref<8x16x32xf32, #tpu.memory_space<vmem>>, vector<1x16x32xf32>,
      %185 = vector.extract_strided_slice %126 {offsets = [112, 0], sizes = [16, 32], strides = [1, 1]} : vector<128x32xf32> to vector<16x32xf32>
      %c7 = arith.constant 7 : index
      %c0_112 = arith.constant 0 : index
      %c0_113 = arith.constant 0 : index
      %186 = vector.load %arg20[%c7, %c0_112, %c0_113] : memref<8x16x32xf32, #tpu.memory_space<vmem>>, vector<1x16x32xf32>
      %187 = vector.shape_cast %186 : vector<1x16x32xf32> to vector<16x32xf32>
      %188 = vector.shape_cast %185 : vector<16x32xf32> to vector<1x16x32xf32>
      tpu.vector_store %arg20[%c7, %c0_112, %c0_113], %188 {strides = array<i32>} : memref<8x16x32xf32, #tpu.memory_space<vmem>>, vector<1x16x32xf32>,
      %189 = vector.extract_strided_slice %128 {offsets = [112, 0], sizes = [16, 32], strides = [1, 1]} : vector<128x32xf32> to vector<16x32xf32>
      %c7_114 = arith.constant 7 : index
      %c0_115 = arith.constant 0 : index
      %c0_116 = arith.constant 0 : index
      %190 = vector.load %arg21[%c7_114, %c0_115, %c0_116] : memref<8x16x32xf32, #tpu.memory_space<vmem>>, vector<1x16x32xf32>
      %191 = vector.shape_cast %190 : vector<1x16x32xf32> to vector<16x32xf32>
      %192 = vector.shape_cast %189 : vector<16x32xf32> to vector<1x16x32xf32>
      tpu.vector_store %arg21[%c7_114, %c0_115, %c0_116], %192 {strides = array<i32>} : memref<8x16x32xf32, #tpu.memory_space<vmem>>, vector<1x16x32xf32>,
    } else {
    }
    %3 = arith.index_cast %arg0 : i32 to index
    %4 = memref.load %arg1[%3] : memref<10xi32, #tpu.memory_space<smem>>
    %c0_i32_1 = arith.constant 0 : i32
    %5 = arith.cmpi sgt, %4, %c0_i32_1 : i32
    %6 = arith.index_cast %arg0 : i32 to index
    %c0 = arith.constant 0 : index
    %c0_2 = arith.constant 0 : index
    %7 = vector.load %arg8[%6, %c0, %c0_2] : memref<10x8x32xf32, #tpu.memory_space<vmem>>, vector<1x8x32xf32>
    %8 = vector.shape_cast %7 : vector<1x8x32xf32> to vector<8x32xf32>
    %9 = arith.index_cast %arg0 : i32 to index
    %c0_3 = arith.constant 0 : index
    %c0_4 = arith.constant 0 : index
    %10 = vector.load %arg9[%9, %c0_3, %c0_4] : memref<10x8x32xf32, #tpu.memory_space<vmem>>, vector<1x8x32xf32>
    %11 = vector.shape_cast %10 : vector<1x8x32xf32> to vector<8x32xf32>
    %c0_5 = arith.constant 0 : index
    %c0_6 = arith.constant 0 : index
    %12 = vector.load %arg19[%c0_5, %c0_6] : memref<8x32xf32, #tpu.memory_space<vmem>>, vector<8x32xf32>
    %c0_7 = arith.constant 0 : index
    %c0_8 = arith.constant 0 : index
    %13 = vector.load %arg22[%c0_7, %c0_8] : memref<8x32xf32, #tpu.memory_space<vmem>>, vector<8x32xf32>
    %c0_9 = arith.constant 0 : index
    %c0_10 = arith.constant 0 : index
    %14 = vector.load %arg23[%c0_9, %c0_10] : memref<8x32xf32, #tpu.memory_space<vmem>>, vector<8x32xf32>
    %c1_i32 = arith.constant 1 : i32
    %15 = arith.subi %arg0, %c1_i32 : i32
    %c1_i32_11 = arith.constant 1 : i32
    %16 = arith.maxsi %15, %c1_i32_11 : i32
    %17 = vector.broadcast %16 : i32 to vector<8x32xi32>
    %18 = arith.sitofp %17 : vector<8x32xi32> to vector<8x32xf32>
    %c0_12 = arith.constant 0 : index
    %c0_13 = arith.constant 0 : index
    %19 = vector.load %arg24[%c0_12, %c0_13] : memref<8x32xf32, #tpu.memory_space<vmem>>, vector<8x32xf32>
    %20 = tpu.reciprocal %18 {approx = true} : vector<8x32xf32> -> vector<8x32xf32>
    %21 = arith.mulf %19, %20 : vector<8x32xf32>
    %c1_i32_14 = arith.constant 1 : i32
    %22 = arith.cmpi sle, %arg0, %c1_i32_14 : i32
    %23 = arith.select %22, %11, %21 : vector<8x32xf32>
    %24 = arith.mulf %12, %23 : vector<8x32xf32>
    %cst = arith.constant dense<0xFF800000> : vector<8xf32>
    %25 = vector.multi_reduction <maximumf>, %24, %cst [1] : vector<8x32xf32> to vector<8xf32>
    %26 = vector.shape_cast %25 : vector<8xf32> to vector<8x1xf32>
    %27 = vector.broadcast %26 : vector<8x1xf32> to vector<8x32xf32>
    %28 = arith.subf %24, %27 : vector<8x32xf32>
    %29 = math.exp %28 : vector<8x32xf32>
    %cst_15 = arith.constant dense<0.000000e+00> : vector<8xf32>
    %30 = vector.multi_reduction <add>, %29, %cst_15 [1] : vector<8x32xf32> to vector<8xf32>
    %31 = vector.shape_cast %30 : vector<8xf32> to vector<8x1xf32>
    %32 = tpu.reciprocal %31 {approx = true} : vector<8x1xf32> -> vector<8x1xf32>
    %33 = vector.broadcast %32 : vector<8x1xf32> to vector<8x32xf32>
    %34 = arith.mulf %29, %33 : vector<8x32xf32>
    %c0_i32_16 = arith.constant 0 : i32
    %35 = arith.cmpi eq, %arg0, %c0_i32_16 : i32
    %36 = arith.addf %8, %34 : vector<8x32xf32>
    %37 = arith.select %35, %12, %36 : vector<8x32xf32>
    %c0_17 = arith.constant 0 : index
    %c0_18 = arith.constant 0 : index
    %38 = vector.load %arg11[%c0_17, %c0_18] : memref<32x32xf32, #tpu.memory_space<vmem>>, vector<32x32xf32>
    %cst_19 = arith.constant dense<0.000000e+00> : vector<8x32xf32>
    %39 = tpu.matmul %13, %38, %cst_19 {dimension_numbers = #tpu.dot_dimension_numbers<[1], [0], [0], [1], [0, 0, 1, 1], [], []>} : vector<8x32xf32>, vector<32x32xf32>, vector<8x32xf32> -> vector<8x32xf32>
    %c0_20 = arith.constant 0 : index
    %c0_21 = arith.constant 0 : index
    %c0_22 = arith.constant 0 : index
    %40 = vector.load %arg21[%c0_20, %c0_21, %c0_22] : memref<8x16x32xf32, #tpu.memory_space<vmem>>, vector<8x16x32xf32>
    %41 = vector.shape_cast %39 : vector<8x32xf32> to vector<8x1x32xf32>
    %42 = vector.broadcast %41 : vector<8x1x32xf32> to vector<8x16x32xf32>
    %43 = arith.addf %40, %42 : vector<8x16x32xf32>
    %44 = math.tanh %43 : vector<8x16x32xf32>
    %c0_23 = arith.constant 0 : index
    %c0_24 = arith.constant 0 : index
    %45 = vector.load %arg12[%c0_23, %c0_24] : memref<1x32xf32, #tpu.memory_space<vmem>>, vector<1x32xf32>
    %46 = vector.shape_cast %45 : vector<1x32xf32> to vector<1x1x32xf32>
    %47 = vector.broadcast %46 : vector<1x1x32xf32> to vector<8x16x32xf32>
    %48 = arith.mulf %44, %47 : vector<8x16x32xf32>
    %cst_25 = arith.constant dense<0.000000e+00> : vector<8x16xf32>
    %49 = vector.multi_reduction <add>, %48, %cst_25 [2] : vector<8x16x32xf32> to vector<8x16xf32>
    %cst_26 = arith.constant dense<0xFF800000> : vector<8xf32>
    %50 = vector.multi_reduction <maximumf>, %49, %cst_26 [1] : vector<8x16xf32> to vector<8xf32>
    %51 = vector.shape_cast %50 : vector<8xf32> to vector<8x1xf32>
    %52 = vector.broadcast %51 : vector<8x1xf32> to vector<8x16xf32>
    %53 = arith.subf %49, %52 : vector<8x16xf32>
    %54 = math.exp %53 : vector<8x16xf32>
    %cst_27 = arith.constant dense<0.000000e+00> : vector<8xf32>
    %55 = vector.multi_reduction <add>, %54, %cst_27 [1] : vector<8x16xf32> to vector<8xf32>
    %56 = vector.shape_cast %55 : vector<8xf32> to vector<8x1xf32>
    %57 = tpu.reciprocal %56 {approx = true} : vector<8x1xf32> -> vector<8x1xf32>
    %58 = vector.broadcast %57 : vector<8x1xf32> to vector<8x16xf32>
    %59 = arith.mulf %54, %58 : vector<8x16xf32>
    %60 = vector.shape_cast %59 : vector<8x16xf32> to vector<8x16x1xf32>
    %c0_28 = arith.constant 0 : index
    %c0_29 = arith.constant 0 : index
    %c0_30 = arith.constant 0 : index
    %61 = vector.load %arg20[%c0_28, %c0_29, %c0_30] : memref<8x16x32xf32, #tpu.memory_space<vmem>>, vector<8x16x32xf32>
    %62 = vector.broadcast %60 : vector<8x16x1xf32> to vector<8x16x32xf32>
    %63 = arith.mulf %62, %61 : vector<8x16x32xf32>
    %cst_31 = arith.constant dense<0.000000e+00> : vector<8x32xf32>
    %64 = vector.multi_reduction <add>, %63, %cst_31 [1] : vector<8x16x32xf32> to vector<8x32xf32>
    %65 = tpu.concatenate %37, %64 in 1 : vector<8x32xf32>, vector<8x32xf32> -> vector<8x64xf32>
    %c0_32 = arith.constant 0 : index
    %c0_33 = arith.constant 0 : index
    %66 = vector.load %arg13[%c0_32, %c0_33] : memref<64x128xf32, #tpu.memory_space<vmem>>, vector<64x128xf32>
    %cst_34 = arith.constant dense<0.000000e+00> : vector<8x128xf32>
    %67 = tpu.matmul %65, %66, %cst_34 {dimension_numbers = #tpu.dot_dimension_numbers<[1], [0], [0], [1], [0, 0, 1, 1], [], []>} : vector<8x64xf32>, vector<64x128xf32>, vector<8x128xf32> -> vector<8x128xf32>
    %c0_35 = arith.constant 0 : index
    %c0_36 = arith.constant 0 : index
    %68 = vector.load %arg14[%c0_35, %c0_36] : memref<32x128xf32, #tpu.memory_space<vmem>>, vector<32x128xf32>
    %cst_37 = arith.constant dense<0.000000e+00> : vector<8x128xf32>
    %69 = tpu.matmul %13, %68, %cst_37 {dimension_numbers = #tpu.dot_dimension_numbers<[1], [0], [0], [1], [0, 0, 1, 1], [], []>} : vector<8x32xf32>, vector<32x128xf32>, vector<8x128xf32> -> vector<8x128xf32>
    %70 = arith.addf %67, %69 : vector<8x128xf32>
    %c0_38 = arith.constant 0 : index
    %c0_39 = arith.constant 0 : index
    %71 = vector.load %arg15[%c0_38, %c0_39] : memref<1x128xf32, #tpu.memory_space<vmem>>, vector<1x128xf32>
    %72 = vector.broadcast %71 : vector<1x128xf32> to vector<8x128xf32>
    %73 = arith.addf %70, %72 : vector<8x128xf32>
    %74 = vector.extract_strided_slice %73 {offsets = [0, 0], sizes = [8, 32], strides = [1, 1]} : vector<8x128xf32> to vector<8x32xf32>
    %75 = arith.negf %74 : vector<8x32xf32>
    %76 = math.exp %75 : vector<8x32xf32>
    %cst_40 = arith.constant 1.000000e+00 : f32
    %77 = vector.broadcast %cst_40 : f32 to vector<8x32xf32>
    %78 = arith.addf %77, %76 : vector<8x32xf32>
    %79 = arith.divf %77, %78 : vector<8x32xf32>
    %80 = vector.extract_strided_slice %73 {offsets = [0, 32], sizes = [8, 32], strides = [1, 1]} : vector<8x128xf32> to vector<8x32xf32>
    %81 = arith.negf %80 : vector<8x32xf32>
    %82 = math.exp %81 : vector<8x32xf32>
    %cst_41 = arith.constant 1.000000e+00 : f32
    %83 = vector.broadcast %cst_41 : f32 to vector<8x32xf32>
    %84 = arith.addf %83, %82 : vector<8x32xf32>
    %85 = arith.divf %83, %84 : vector<8x32xf32>
    %86 = vector.extract_strided_slice %73 {offsets = [0, 64], sizes = [8, 32], strides = [1, 1]} : vector<8x128xf32> to vector<8x32xf32>
    %87 = math.tanh %86 : vector<8x32xf32>
    %88 = vector.extract_strided_slice %73 {offsets = [0, 96], sizes = [8, 32], strides = [1, 1]} : vector<8x128xf32> to vector<8x32xf32>
    %89 = arith.negf %88 : vector<8x32xf32>
    %90 = math.exp %89 : vector<8x32xf32>
    %cst_42 = arith.constant 1.000000e+00 : f32
    %91 = vector.broadcast %cst_42 : f32 to vector<8x32xf32>
    %92 = arith.addf %91, %90 : vector<8x32xf32>
    %93 = arith.divf %91, %92 : vector<8x32xf32>
    %94 = arith.mulf %85, %14 : vector<8x32xf32>
    %95 = arith.mulf %79, %87 : vector<8x32xf32>
    %96 = arith.addf %94, %95 : vector<8x32xf32>
    %97 = math.tanh %96 : vector<8x32xf32>
    %98 = arith.mulf %93, %97 : vector<8x32xf32>
    %99 = arith.extui %5 : i1 to i32
    %c0_i32_43 = arith.constant 0 : i32
    %100 = arith.cmpi ne, %99, %c0_i32_43 : i32
    scf.if %100 {
      %c0_45 = arith.constant 0 : index
      %c0_46 = arith.constant 0 : index
      %104 = vector.load %arg22[%c0_45, %c0_46] : memref<8x32xf32, #tpu.memory_space<vmem>>, vector<8x32xf32>
      tpu.vector_store %arg22[%c0_45, %c0_46], %98 {strides = array<i32>} : memref<8x32xf32, #tpu.memory_space<vmem>>, vector<8x32xf32>,
      %c0_47 = arith.constant 0 : index
      %c0_48 = arith.constant 0 : index
      %105 = vector.load %arg23[%c0_47, %c0_48] : memref<8x32xf32, #tpu.memory_space<vmem>>, vector<8x32xf32>
      tpu.vector_store %arg23[%c0_47, %c0_48], %96 {strides = array<i32>} : memref<8x32xf32, #tpu.memory_space<vmem>>, vector<8x32xf32>,
      %c0_49 = arith.constant 0 : index
      %c0_50 = arith.constant 0 : index
      %106 = vector.load %arg24[%c0_49, %c0_50] : memref<8x32xf32, #tpu.memory_space<vmem>>, vector<8x32xf32>
      %107 = arith.addf %106, %11 : vector<8x32xf32>
      %c0_51 = arith.constant 0 : index
      %c0_52 = arith.constant 0 : index
      %108 = vector.load %arg24[%c0_51, %c0_52] : memref<8x32xf32, #tpu.memory_space<vmem>>, vector<8x32xf32>
      tpu.vector_store %arg24[%c0_51, %c0_52], %107 {strides = array<i32>} : memref<8x32xf32, #tpu.memory_space<vmem>>, vector<8x32xf32>,
      %c8_i32 = arith.constant 8 : i32
      %109 = arith.muli %arg0, %c8_i32 : i32
      %110 = tpu.assume_multiple %109, 8 : i32
      %111 = arith.index_cast %110 : i32 to index
      %c0_53 = arith.constant 0 : index
      %112 = vector.load %arg25[%111, %c0_53] : memref<80x32xf32, #tpu.memory_space<vmem>>, vector<8x32xf32>
      tpu.vector_store %arg25[%111, %c0_53], %98 {strides = array<i32>} : memref<80x32xf32, #tpu.memory_space<vmem>>, vector<8x32xf32>,
    } else {
    }
    %c9_i32 = arith.constant 9 : i32
    %101 = arith.cmpi eq, %arg0, %c9_i32 : i32
    %102 = arith.extui %101 : i1 to i32
    %c0_i32_44 = arith.constant 0 : i32
    %103 = arith.cmpi ne, %102, %c0_i32_44 : i32
    scf.if %103 {
      %c0_45 = arith.constant 0 : index
      %c0_46 = arith.constant 0 : index
      %104 = vector.load %arg25[%c0_45, %c0_46] : memref<80x32xf32, #tpu.memory_space<vmem>>, vector<80x32xf32>
      %c0_47 = arith.constant 0 : index
      %c0_48 = arith.constant 0 : index
      %105 = vector.load %arg16[%c0_47, %c0_48] : memref<32x128xf32, #tpu.memory_space<vmem>>, vector<32x128xf32>
      %cst_49 = arith.constant dense<0.000000e+00> : vector<80x128xf32>
      %106 = tpu.matmul %104, %105, %cst_49 {dimension_numbers = #tpu.dot_dimension_numbers<[1], [0], [0], [1], [0, 0, 1, 1], [], []>} : vector<80x32xf32>, vector<32x128xf32>, vector<80x128xf32> -> vector<80x128xf32>
      %c0_50 = arith.constant 0 : index
      %c0_51 = arith.constant 0 : index
      %107 = vector.load %arg17[%c0_50, %c0_51] : memref<1x128xf32, #tpu.memory_space<vmem>>, vector<1x128xf32>
      %108 = vector.broadcast %107 : vector<1x128xf32> to vector<80x128xf32>
      %109 = arith.addf %106, %108 : vector<80x128xf32>
      %cst_52 = arith.constant dense<0xFF800000> : vector<80xf32>
      %110 = vector.multi_reduction <maximumf>, %109, %cst_52 [1] : vector<80x128xf32> to vector<80xf32>
      %111 = vector.shape_cast %110 : vector<80xf32> to vector<80x1xf32>
      %112 = vector.broadcast %111 : vector<80x1xf32> to vector<80x128xf32>
      %113 = arith.subf %109, %112 : vector<80x128xf32>
      %114 = math.exp %113 : vector<80x128xf32>
      %cst_53 = arith.constant dense<0.000000e+00> : vector<80xf32>
      %115 = vector.multi_reduction <add>, %114, %cst_53 [1] : vector<80x128xf32> to vector<80xf32>
      %116 = vector.shape_cast %115 : vector<80xf32> to vector<80x1xf32>
      %117 = math.log %116 : vector<80x1xf32>
      %118 = arith.addf %111, %117 : vector<80x1xf32>
      %119 = vector.broadcast %118 : vector<80x1xf32> to vector<80x128xf32>
      %120 = arith.subf %109, %119 : vector<80x128xf32>
      %c0_54 = arith.constant 0 : index
      %c0_55 = arith.constant 0 : index
      %121 = vector.load %arg18[%c0_54, %c0_55] : memref<80x128xf32, #tpu.memory_space<vmem>>, vector<80x128xf32>
      tpu.vector_store %arg18[%c0_54, %c0_55], %120 {strides = array<i32>} : memref<80x128xf32, #tpu.memory_space<vmem>>, vector<80x128xf32>,
    } else {
    }
    return
  }
  func.func @transform_0(%arg0: i32, %arg1: memref<10xi32, #tpu.memory_space<smem>>) -> (i32, i32) {
    %c0_i32 = arith.constant 0 : i32
    %c0_i32_0 = arith.constant 0 : i32
    %c0_i32_1 = arith.constant 0 : i32
    return %c0_i32, %c0_i32_0 : i32, i32
  }
  func.func @transform_1(%arg0: i32, %arg1: memref<10xi32, #tpu.memory_space<smem>>) -> (i32, i32) {
    %c0_i32 = arith.constant 0 : i32
    %c0_i32_0 = arith.constant 0 : i32
    %c0_i32_1 = arith.constant 0 : i32
    return %c0_i32, %c0_i32_0 : i32, i32
  }
  func.func @transform_2(%arg0: i32, %arg1: memref<10xi32, #tpu.memory_space<smem>>) -> (i32, i32) {
    %c0_i32 = arith.constant 0 : i32
    %c0_i32_0 = arith.constant 0 : i32
    %c0_i32_1 = arith.constant 0 : i32
    return %c0_i32, %c0_i32_0 : i32, i32
  }
  func.func @transform_3(%arg0: i32, %arg1: memref<10xi32, #tpu.memory_space<smem>>) -> (i32, i32) {
    %c0_i32 = arith.constant 0 : i32
    %c0_i32_0 = arith.constant 0 : i32
    %c0_i32_1 = arith.constant 0 : i32
    return %c0_i32, %c0_i32_0 : i32, i32
  }
  func.func @transform_4(%arg0: i32, %arg1: memref<10xi32, #tpu.memory_space<smem>>) -> (i32, i32) {
    %c0_i32 = arith.constant 0 : i32
    %c0_i32_0 = arith.constant 0 : i32
    %c0_i32_1 = arith.constant 0 : i32
    return %c0_i32, %c0_i32_0 : i32, i32
  }
  func.func @transform_5(%arg0: i32, %arg1: memref<10xi32, #tpu.memory_space<smem>>) -> (i32, i32) {
    %c0_i32 = arith.constant 0 : i32
    %c0_i32_0 = arith.constant 0 : i32
    %c0_i32_1 = arith.constant 0 : i32
    return %c0_i32, %c0_i32_0 : i32, i32
  }
  func.func @transform_6(%arg0: i32, %arg1: memref<10xi32, #tpu.memory_space<smem>>) -> (i32, i32, i32) {
    %c0_i32 = arith.constant 0 : i32
    %c0_i32_0 = arith.constant 0 : i32
    %c0_i32_1 = arith.constant 0 : i32
    %c0_i32_2 = arith.constant 0 : i32
    return %c0_i32, %c0_i32_0, %c0_i32_1 : i32, i32, i32
  }
  func.func @transform_7(%arg0: i32, %arg1: memref<10xi32, #tpu.memory_space<smem>>) -> (i32, i32, i32) {
    %c0_i32 = arith.constant 0 : i32
    %c0_i32_0 = arith.constant 0 : i32
    %c0_i32_1 = arith.constant 0 : i32
    %c0_i32_2 = arith.constant 0 : i32
    return %c0_i32, %c0_i32_0, %c0_i32_1 : i32, i32, i32
  }
  func.func @transform_8(%arg0: i32, %arg1: memref<10xi32, #tpu.memory_space<smem>>) -> (i32, i32) {
    %c0_i32 = arith.constant 0 : i32
    %c0_i32_0 = arith.constant 0 : i32
    %c0_i32_1 = arith.constant 0 : i32
    return %c0_i32, %c0_i32_0 : i32, i32
  }
  func.func @transform_9(%arg0: i32, %arg1: memref<10xi32, #tpu.memory_space<smem>>) -> (i32, i32) {
    %c0_i32 = arith.constant 0 : i32
    %c0_i32_0 = arith.constant 0 : i32
    %c0_i32_1 = arith.constant 0 : i32
    return %c0_i32, %c0_i32_0 : i32, i32
  }
  func.func @transform_10(%arg0: i32, %arg1: memref<10xi32, #tpu.memory_space<smem>>) -> (i32, i32) {
    %c0_i32 = arith.constant 0 : i32
    %c0_i32_0 = arith.constant 0 : i32
    %c0_i32_1 = arith.constant 0 : i32
    return %c0_i32, %c0_i32_0 : i32, i32
  }
  func.func @transform_11(%arg0: i32, %arg1: memref<10xi32, #tpu.memory_space<smem>>) -> (i32, i32) {
    %c0_i32 = arith.constant 0 : i32
    %c0_i32_0 = arith.constant 0 : i32
    %c0_i32_1 = arith.constant 0 : i32
    return %c0_i32, %c0_i32_0 : i32, i32
  }
  func.func @transform_12(%arg0: i32, %arg1: memref<10xi32, #tpu.memory_space<smem>>) -> (i32, i32) {
    %c0_i32 = arith.constant 0 : i32
    %c0_i32_0 = arith.constant 0 : i32
    %c0_i32_1 = arith.constant 0 : i32
    return %c0_i32, %c0_i32_0 : i32, i32
  }
  func.func @transform_13(%arg0: i32, %arg1: memref<10xi32, #tpu.memory_space<smem>>) -> (i32, i32) {
    %c0_i32 = arith.constant 0 : i32
    %c0_i32_0 = arith.constant 0 : i32
    %c0_i32_1 = arith.constant 0 : i32
    return %c0_i32, %c0_i32_0 : i32, i32
  }
  func.func @transform_14(%arg0: i32, %arg1: memref<10xi32, #tpu.memory_space<smem>>) -> (i32, i32) {
    %c0_i32 = arith.constant 0 : i32
    %c0_i32_0 = arith.constant 0 : i32
    %c0_i32_1 = arith.constant 0 : i32
    return %c0_i32, %c0_i32_0 : i32, i32
  }
  func.func @transform_15(%arg0: i32, %arg1: memref<10xi32, #tpu.memory_space<smem>>) -> (i32, i32) {
    %c0_i32 = arith.constant 0 : i32
    %c0_i32_0 = arith.constant 0 : i32
    %c0_i32_1 = arith.constant 0 : i32
    return %c0_i32, %c0_i32_0 : i32, i32
  }
  func.func @transform_16(%arg0: i32, %arg1: memref<10xi32, #tpu.memory_space<smem>>) -> (i32, i32) {
    %c0_i32 = arith.constant 0 : i32
    %c0_i32_0 = arith.constant 0 : i32
    %c0_i32_1 = arith.constant 0 : i32
    return %c0_i32, %c0_i32_0 : i32, i32
  }
}

</mosaic_0001>

<llo_original>
// kernel: forward.1
$region0: #{forward.1}
  #allocation0 [shape = 'u32[]', space=smem, size = 0x4, offset = 0x4, fixed_abs, tag = 'smem constant byte address 0x4 - core index']
  #allocation1 [shape = 'u32[144,128]{1,0:T(1,128)}', space=vmem, size = 0x12000, scoped, tag = 'internal scratch']
  #allocation2 [shape = 'f32[8,32]{1,0:T(8,128)}', space=vmem, size = 0x1000, scoped, tag = 'scratch operand']
  #allocation3 [shape = 'f32[8,16,32]{2,1,0:T(8,128)}', space=vmem, size = 0x10000, scoped, tag = 'scratch operand']
  #allocation4 [shape = 'f32[8,16,32]{2,1,0:T(8,128)}', space=vmem, size = 0x10000, scoped, tag = 'scratch operand']
  #allocation5 [shape = 'f32[8,32]{1,0:T(8,128)}', space=vmem, size = 0x1000, scoped, tag = 'scratch operand']
  #allocation6 [shape = 'f32[8,32]{1,0:T(8,128)}', space=vmem, size = 0x1000, scoped, tag = 'scratch operand']
  #allocation7 [shape = 'f32[8,32]{1,0:T(8,128)}', space=vmem, size = 0x1000, scoped, tag = 'scratch operand']
  #allocation8 [shape = 'f32[80,32]{1,0:T(8,128)}', space=vmem, size = 0xa000, scoped, tag = 'scratch operand']
  #allocation9 [shape = 's32[1]{0}', space=sflag, size = 0x4, scoped, tag = 'scoped memory for forward.1']
  #allocation10 [shape = 'u8[512]{0}', space=smem, size = 0x200, scoped, tag = 'prefetched SMEM operand 0']
  %s0 = inlined_call_operand.vmem [shape: s32[10], index: 0, kind: input, shape index: {}]
  %s1 = inlined_call_operand.vmem [shape: f32[8,64], index: 1, kind: input, shape index: {}]
  %s2 = inlined_call_operand.vmem [shape: f32[128,48], index: 2, kind: input, shape index: {}]
  %s3 = inlined_call_operand.vmem [shape: f32[64,32], index: 3, kind: input, shape index: {}]
  %s4 = inlined_call_operand.vmem [shape: f32[1,32], index: 4, kind: input, shape index: {}]
  %s5 = inlined_call_operand.vmem [shape: f32[48,32], index: 5, kind: input, shape index: {}]
  %s6 = inlined_call_operand.vmem [shape: f32[1,32], index: 6, kind: input, shape index: {}]
  %s7 = inlined_call_operand.vmem [shape: f32[10,8,32], index: 7, kind: input, shape index: {}]
  %s8 = inlined_call_operand.vmem [shape: f32[10,8,32], index: 8, kind: input, shape index: {}]
  %s9 = inlined_call_operand.vmem [shape: f32[32,32], index: 9, kind: input, shape index: {}]
  %s10 = inlined_call_operand.vmem [shape: f32[32,32], index: 10, kind: input, shape index: {}]
  %s11 = inlined_call_operand.vmem [shape: f32[1,32], index: 11, kind: input, shape index: {}]
  %s12 = inlined_call_operand.vmem [shape: f32[64,128], index: 12, kind: input, shape index: {}]
  %s13 = inlined_call_operand.vmem [shape: f32[32,128], index: 13, kind: input, shape index: {}]
  %s14 = inlined_call_operand.vmem [shape: f32[1,128], index: 14, kind: input, shape index: {}]
  %s15 = inlined_call_operand.vmem [shape: f32[32,128], index: 15, kind: input, shape index: {}]
  %s16 = inlined_call_operand.vmem [shape: f32[1,128], index: 16, kind: input, shape index: {}]
  %s17 = inlined_call_operand.vmem [shape: f32[80,128], index: 17, kind: output, shape index: {}]
  %s18 = sld [smem:[#allocation0]]
  $region109: #{forward.1} parent=0
    _
  %s20 = ssub.s32 1, %s18
  %s21 = scalar_select 0, %s20, %s18
  %s22 = sshll.u32 %s0, 4
  %s23 = int_to_ptr.vmem [resolvable:$true] %s22
  %25 = dma.vmem_to_smem %s23, 16, [#allocation10], [#allocation9]
  %26 = dma.done [#allocation9], 16
  %27 = sfence
  loop: start=0, step=1, limit=12
  $region2: #{forward.1} parent=0 // loop_pre_header
    _
  $region3: #{forward.1} parent=0 // loop_header
    %s29 = sphi 0, %s33
    %p30 = scmp.ge.s32.totalorder %s29, 12
    %s37 = sphi 0, %s37
    %s39 = sphi 0, %s37
    %s40 = sphi 0, %s39
    %s54 = sphi 0, %s40
    %s58 = sphi 0, %s58
    %s60 = sphi 0, %s58
    %s61 = sphi 0, %s60
    %s75 = sphi 0, %s61
    %s79 = sphi 0, %s79
    %s81 = sphi 0, %s79
    %s82 = sphi 0, %s81
    %s96 = sphi 0, %s82
    %s100 = sphi 0, %s100
    %s102 = sphi 0, %s100
    %s103 = sphi 0, %s102
    %s117 = sphi 0, %s103
    %s121 = sphi 0, %s121
    %s123 = sphi 0, %s121
    %s124 = sphi 0, %s123
    %s138 = sphi 0, %s124
    %s142 = sphi 0, %s142
    %s144 = sphi 0, %s142
    %s145 = sphi 0, %s144
    %s159 = sphi 0, %s145
    %s163 = sphi 0, %s163
    %s165 = sphi 0, %s163
    %s166 = sphi 0, %s165
    %s180 = sphi 0, %s166
    %s184 = sphi 0, %s184
    %s186 = sphi 0, %s184
    %s187 = sphi 0, %s186
    %s201 = sphi 0, %s187
    %s205 = sphi 0, %s205
    %s207 = sphi 0, %s205
    %s208 = sphi 0, %s207
    %s222 = sphi 0, %s208
    %s226 = sphi 0, %s226
    %s228 = sphi 0, %s226
    %s229 = sphi 0, %s228
    %s243 = sphi 0, %s229
    %s247 = sphi 0, %s247
    %s249 = sphi 0, %s247
    %s250 = sphi 0, %s249
    %s264 = sphi 0, %s250
    %s268 = sphi 0, %s268
    %s270 = sphi 0, %s268
    %s271 = sphi 0, %s270
    %s285 = sphi 0, %s271
    %s289 = sphi 0, %s289
    %s291 = sphi 0, %s289
    %s292 = sphi 0, %s291
    %s306 = sphi 0, %s292
    %s310 = sphi 0, %s310
    %s312 = sphi 0, %s310
    %s313 = sphi 0, %s312
    %s327 = sphi 0, %s313
    %s331 = sphi 0, %s331
    %s333 = sphi 0, %s331
    %s334 = sphi 0, %s333
    %s348 = sphi 0, %s334
    %s352 = sphi 0, %s352
    %s354 = sphi 0, %s352
    %s355 = sphi 0, %s354
    %s369 = sphi 0, %s355
    %s373 = sphi 0, %s373
    %s375 = sphi 0, %s373
    %s376 = sphi 0, %s375
    %s390 = sphi 0, %s376
  $region4: #{forward.1} parent=0 // loop_header_branch
    %32 = sbr.rel (%p30) target = $region8
  $region5: #{forward.1} parent=0 // loop_body
    %s34 = ssub.s32 %s29, 1
    %s35 = ssub.s32 %s29, 2
    %s36 = sadd.s32 %s29, 1
    %s38 = sadd.s32 %s37, 1
    %p41 = scmp.eq.s32.totalorder %s29, 9
    %p42 = scmp.ne.s32.totalorder %s37, %s39
    %p43 = scmp.eq.s32.totalorder %s29, 0
    %p44 = por %p42, %p43
    %p45 = scmp.ne.s32.totalorder %s37, %s39
    %p46 = scmp.eq.s32.totalorder %s34, 9
    %p47 = por %p45, %p46
    %p48 = scmp.ne.s32.totalorder %s39, %s40
    %p49 = scmp.eq.s32.totalorder %s34, 0
    %p50 = por %p48, %p49
    %p51 = scmp.ne.s32.totalorder %s39, %s40
    %p52 = scmp.eq.s32.totalorder %s35, 9
    %p53 = por %p51, %p52
    %p55 = scmp.ne.s32.totalorder %s40, %s54
    %p56 = scmp.eq.s32.totalorder %s35, 0
    %p57 = por %p55, %p56
    %s59 = sadd.s32 %s58, 1
    %p62 = scmp.eq.s32.totalorder %s29, 9
    %p63 = scmp.ne.s32.totalorder %s58, %s60
    %p64 = scmp.eq.s32.totalorder %s29, 0
    %p65 = por %p63, %p64
    %p66 = scmp.ne.s32.totalorder %s58, %s60
    %p67 = scmp.eq.s32.totalorder %s34, 9
    %p68 = por %p66, %p67
    %p69 = scmp.ne.s32.totalorder %s60, %s61
    %p70 = scmp.eq.s32.totalorder %s34, 0
    %p71 = por %p69, %p70
    %p72 = scmp.ne.s32.totalorder %s60, %s61
    %p73 = scmp.eq.s32.totalorder %s35, 9
    %p74 = por %p72, %p73
    %p76 = scmp.ne.s32.totalorder %s61, %s75
    %p77 = scmp.eq.s32.totalorder %s35, 0
    %p78 = por %p76, %p77
    %s80 = sadd.s32 %s79, 1
    %p83 = scmp.eq.s32.totalorder %s29, 9
    %p84 = scmp.ne.s32.totalorder %s79, %s81
    %p85 = scmp.eq.s32.totalorder %s29, 0
    %p86 = por %p84, %p85
    %p87 = scmp.ne.s32.totalorder %s79, %s81
    %p88 = scmp.eq.s32.totalorder %s34, 9
    %p89 = por %p87, %p88
    %p90 = scmp.ne.s32.totalorder %s81, %s82
    %p91 = scmp.eq.s32.totalorder %s34, 0
    %p92 = por %p90, %p91
    %p93 = scmp.ne.s32.totalorder %s81, %s82
    %p94 = scmp.eq.s32.totalorder %s35, 9
    %p95 = por %p93, %p94
    %p97 = scmp.ne.s32.totalorder %s82, %s96
    %p98 = scmp.eq.s32.totalorder %s35, 0
    %p99 = por %p97, %p98
    %s101 = sadd.s32 %s100, 1
    %p104 = scmp.eq.s32.totalorder %s29, 9
    %p105 = scmp.ne.s32.totalorder %s100, %s102
    %p106 = scmp.eq.s32.totalorder %s29, 0
    %p107 = por %p105, %p106
    %p108 = scmp.ne.s32.totalorder %s100, %s102
    %p109 = scmp.eq.s32.totalorder %s34, 9
    %p110 = por %p108, %p109
    %p111 = scmp.ne.s32.totalorder %s102, %s103
    %p112 = scmp.eq.s32.totalorder %s34, 0
    %p113 = por %p111, %p112
    %p114 = scmp.ne.s32.totalorder %s102, %s103
    %p115 = scmp.eq.s32.totalorder %s35, 9
    %p116 = por %p114, %p115
    %p118 = scmp.ne.s32.totalorder %s103, %s117
    %p119 = scmp.eq.s32.totalorder %s35, 0
    %p120 = por %p118, %p119
    %s122 = sadd.s32 %s121, 1
    %p125 = scmp.eq.s32.totalorder %s29, 9
    %p126 = scmp.ne.s32.totalorder %s121, %s123
    %p127 = scmp.eq.s32.totalorder %s29, 0
    %p128 = por %p126, %p127
    %p129 = scmp.ne.s32.totalorder %s121, %s123
    %p130 = scmp.eq.s32.totalorder %s34, 9
    %p131 = por %p129, %p130
    %p132 = scmp.ne.s32.totalorder %s123, %s124
    %p133 = scmp.eq.s32.totalorder %s34, 0
    %p134 = por %p132, %p133
    %p135 = scmp.ne.s32.totalorder %s123, %s124
    %p136 = scmp.eq.s32.totalorder %s35, 9
    %p137 = por %p135, %p136
    %p139 = scmp.ne.s32.totalorder %s124, %s138
    %p140 = scmp.eq.s32.totalorder %s35, 0
    %p141 = por %p139, %p140
    %s143 = sadd.s32 %s142, 1
    %p146 = scmp.eq.s32.totalorder %s29, 9
    %p147 = scmp.ne.s32.totalorder %s142, %s144
    %p148 = scmp.eq.s32.totalorder %s29, 0
    %p149 = por %p147, %p148
    %p150 = scmp.ne.s32.totalorder %s142, %s144
    %p151 = scmp.eq.s32.totalorder %s34, 9
    %p152 = por %p150, %p151
    %p153 = scmp.ne.s32.totalorder %s144, %s145
    %p154 = scmp.eq.s32.totalorder %s34, 0
    %p155 = por %p153, %p154
    %p156 = scmp.ne.s32.totalorder %s144, %s145
    %p157 = scmp.eq.s32.totalorder %s35, 9
    %p158 = por %p156, %p157
    %p160 = scmp.ne.s32.totalorder %s145, %s159
    %p161 = scmp.eq.s32.totalorder %s35, 0
    %p162 = por %p160, %p161
    %s164 = sadd.s32 %s163, 1
    %p167 = scmp.eq.s32.totalorder %s29, 9
    %p168 = scmp.ne.s32.totalorder %s163, %s165
    %p169 = scmp.eq.s32.totalorder %s29, 0
    %p170 = por %p168, %p169
    %p171 = scmp.ne.s32.totalorder %s163, %s165
    %p172 = scmp.eq.s32.totalorder %s34, 9
    %p173 = por %p171, %p172
    %p174 = scmp.ne.s32.totalorder %s165, %s166
    %p175 = scmp.eq.s32.totalorder %s34, 0
    %p176 = por %p174, %p175
    %p177 = scmp.ne.s32.totalorder %s165, %s166
    %p178 = scmp.eq.s32.totalorder %s35, 9
    %p179 = por %p177, %p178
    %p181 = scmp.ne.s32.totalorder %s166, %s180
    %p182 = scmp.eq.s32.totalorder %s35, 0
    %p183 = por %p181, %p182
    %s185 = sadd.s32 %s184, 1
    %p188 = scmp.eq.s32.totalorder %s29, 9
    %p189 = scmp.ne.s32.totalorder %s184, %s186
    %p190 = scmp.eq.s32.totalorder %s29, 0
    %p191 = por %p189, %p190
    %p192 = scmp.ne.s32.totalorder %s184, %s186
    %p193 = scmp.eq.s32.totalorder %s34, 9
    %p194 = por %p192, %p193
    %p195 = scmp.ne.s32.totalorder %s186, %s187
    %p196 = scmp.eq.s32.totalorder %s34, 0
    %p197 = por %p195, %p196
    %p198 = scmp.ne.s32.totalorder %s186, %s187
    %p199 = scmp.eq.s32.totalorder %s35, 9
    %p200 = por %p198, %p199
    %p202 = scmp.ne.s32.totalorder %s187, %s201
    %p203 = scmp.eq.s32.totalorder %s35, 0
    %p204 = por %p202, %p203
    %s206 = sadd.s32 %s205, 1
    %p209 = scmp.eq.s32.totalorder %s29, 9
    %p210 = scmp.ne.s32.totalorder %s205, %s207
    %p211 = scmp.eq.s32.totalorder %s29, 0
    %p212 = por %p210, %p211
    %p213 = scmp.ne.s32.totalorder %s205, %s207
    %p214 = scmp.eq.s32.totalorder %s34, 9
    %p215 = por %p213, %p214
    %p216 = scmp.ne.s32.totalorder %s207, %s208
    %p217 = scmp.eq.s32.totalorder %s34, 0
    %p218 = por %p216, %p217
    %p219 = scmp.ne.s32.totalorder %s207, %s208
    %p220 = scmp.eq.s32.totalorder %s35, 9
    %p221 = por %p219, %p220
    %p223 = scmp.ne.s32.totalorder %s208, %s222
    %p224 = scmp.eq.s32.totalorder %s35, 0
    %p225 = por %p223, %p224
    %s227 = sadd.s32 %s226, 1
    %p230 = scmp.eq.s32.totalorder %s29, 9
    %p231 = scmp.ne.s32.totalorder %s226, %s228
    %p232 = scmp.eq.s32.totalorder %s29, 0
    %p233 = por %p231, %p232
    %p234 = scmp.ne.s32.totalorder %s226, %s228
    %p235 = scmp.eq.s32.totalorder %s34, 9
    %p236 = por %p234, %p235
    %p237 = scmp.ne.s32.totalorder %s228, %s229
    %p238 = scmp.eq.s32.totalorder %s34, 0
    %p239 = por %p237, %p238
    %p240 = scmp.ne.s32.totalorder %s228, %s229
    %p241 = scmp.eq.s32.totalorder %s35, 9
    %p242 = por %p240, %p241
    %p244 = scmp.ne.s32.totalorder %s229, %s243
    %p245 = scmp.eq.s32.totalorder %s35, 0
    %p246 = por %p244, %p245
    %s248 = sadd.s32 %s247, 1
    %p251 = scmp.eq.s32.totalorder %s29, 9
    %p252 = scmp.ne.s32.totalorder %s247, %s249
    %p253 = scmp.eq.s32.totalorder %s29, 0
    %p254 = por %p252, %p253
    %p255 = scmp.ne.s32.totalorder %s247, %s249
    %p256 = scmp.eq.s32.totalorder %s34, 9
    %p257 = por %p255, %p256
    %p258 = scmp.ne.s32.totalorder %s249, %s250
    %p259 = scmp.eq.s32.totalorder %s34, 0
    %p260 = por %p258, %p259
    %p261 = scmp.ne.s32.totalorder %s249, %s250
    %p262 = scmp.eq.s32.totalorder %s35, 9
    %p263 = por %p261, %p262
    %p265 = scmp.ne.s32.totalorder %s250, %s264
    %p266 = scmp.eq.s32.totalorder %s35, 0
    %p267 = por %p265, %p266
    %s269 = sadd.s32 %s268, 1
    %p272 = scmp.eq.s32.totalorder %s29, 9
    %p273 = scmp.ne.s32.totalorder %s268, %s270
    %p274 = scmp.eq.s32.totalorder %s29, 0
    %p275 = por %p273, %p274
    %p276 = scmp.ne.s32.totalorder %s268, %s270
    %p277 = scmp.eq.s32.totalorder %s34, 9
    %p278 = por %p276, %p277
    %p279 = scmp.ne.s32.totalorder %s270, %s271
    %p280 = scmp.eq.s32.totalorder %s34, 0
    %p281 = por %p279, %p280
    %p282 = scmp.ne.s32.totalorder %s270, %s271
    %p283 = scmp.eq.s32.totalorder %s35, 9
    %p284 = por %p282, %p283
    %p286 = scmp.ne.s32.totalorder %s271, %s285
    %p287 = scmp.eq.s32.totalorder %s35, 0
    %p288 = por %p286, %p287
    %s290 = sadd.s32 %s289, 1
    %p293 = scmp.eq.s32.totalorder %s29, 9
    %p294 = scmp.ne.s32.totalorder %s289, %s291
    %p295 = scmp.eq.s32.totalorder %s29, 0
    %p296 = por %p294, %p295
    %p297 = scmp.ne.s32.totalorder %s289, %s291
    %p298 = scmp.eq.s32.totalorder %s34, 9
    %p299 = por %p297, %p298
    %p300 = scmp.ne.s32.totalorder %s291, %s292
    %p301 = scmp.eq.s32.totalorder %s34, 0
    %p302 = por %p300, %p301
    %p303 = scmp.ne.s32.totalorder %s291, %s292
    %p304 = scmp.eq.s32.totalorder %s35, 9
    %p305 = por %p303, %p304
    %p307 = scmp.ne.s32.totalorder %s292, %s306
    %p308 = scmp.eq.s32.totalorder %s35, 0
    %p309 = por %p307, %p308
    %s311 = sadd.s32 %s310, 1
    %p314 = scmp.eq.s32.totalorder %s29, 9
    %p315 = scmp.ne.s32.totalorder %s310, %s312
    %p316 = scmp.eq.s32.totalorder %s29, 0
    %p317 = por %p315, %p316
    %p318 = scmp.ne.s32.totalorder %s310, %s312
    %p319 = scmp.eq.s32.totalorder %s34, 9
    %p320 = por %p318, %p319
    %p321 = scmp.ne.s32.totalorder %s312, %s313
    %p322 = scmp.eq.s32.totalorder %s34, 0
    %p323 = por %p321, %p322
    %p324 = scmp.ne.s32.totalorder %s312, %s313
    %p325 = scmp.eq.s32.totalorder %s35, 9
    %p326 = por %p324, %p325
    %p328 = scmp.ne.s32.totalorder %s313, %s327
    %p329 = scmp.eq.s32.totalorder %s35, 0
    %p330 = por %p328, %p329
    %s332 = sadd.s32 %s331, 1
    %p335 = scmp.eq.s32.totalorder %s29, 9
    %p336 = scmp.ne.s32.totalorder %s331, %s333
    %p337 = scmp.eq.s32.totalorder %s29, 0
    %p338 = por %p336, %p337
    %p339 = scmp.ne.s32.totalorder %s331, %s333
    %p340 = scmp.eq.s32.totalorder %s34, 9
    %p341 = por %p339, %p340
    %p342 = scmp.ne.s32.totalorder %s333, %s334
    %p343 = scmp.eq.s32.totalorder %s34, 0
    %p344 = por %p342, %p343
    %p345 = scmp.ne.s32.totalorder %s333, %s334
    %p346 = scmp.eq.s32.totalorder %s35, 9
    %p347 = por %p345, %p346
    %p349 = scmp.ne.s32.totalorder %s334, %s348
    %p350 = scmp.eq.s32.totalorder %s35, 0
    %p351 = por %p349, %p350
    %s353 = sadd.s32 %s352, 1
    %p356 = scmp.eq.s32.totalorder %s29, 9
    %p357 = scmp.ne.s32.totalorder %s352, %s354
    %p358 = scmp.eq.s32.totalorder %s29, 0
    %p359 = por %p357, %p358
    %p360 = scmp.ne.s32.totalorder %s352, %s354
    %p361 = scmp.eq.s32.totalorder %s34, 9
    %p362 = por %p360, %p361
    %p363 = scmp.ne.s32.totalorder %s354, %s355
    %p364 = scmp.eq.s32.totalorder %s34, 0
    %p365 = por %p363, %p364
    %p366 = scmp.ne.s32.totalorder %s354, %s355
    %p367 = scmp.eq.s32.totalorder %s35, 9
    %p368 = por %p366, %p367
    %p370 = scmp.ne.s32.totalorder %s355, %s369
    %p371 = scmp.eq.s32.totalorder %s35, 0
    %p372 = por %p370, %p371
    %s374 = sadd.s32 %s373, 1
    %p377 = scmp.eq.s32.totalorder %s29, 9
    %p378 = scmp.ne.s32.totalorder %s373, %s375
    %p379 = scmp.eq.s32.totalorder %s29, 0
    %p380 = por %p378, %p379
    %p381 = scmp.ne.s32.totalorder %s373, %s375
    %p382 = scmp.eq.s32.totalorder %s34, 9
    %p383 = por %p381, %p382
    %p384 = scmp.ne.s32.totalorder %s375, %s376
    %p385 = scmp.eq.s32.totalorder %s34, 0
    %p386 = por %p384, %p385
    %p387 = scmp.ne.s32.totalorder %s375, %s376
    %p388 = scmp.eq.s32.totalorder %s35, 9
    %p389 = por %p387, %p388
    %p391 = scmp.ne.s32.totalorder %s376, %s390
    %p392 = scmp.eq.s32.totalorder %s35, 0
    %p393 = por %p391, %p392
    %p394 = scmp.le.s32.totalorder 1, %s29
    %p395 = scmp.lt.s32.totalorder %s29, 11
    %p396 = pnand %p394, %p395
    %p397 = pneg %p396
    // Predicated region
    $region9: #{forward.1} parent=5 // pred_check
      _
    $region10: #{forward.1} parent=5 // pred_check_branch
      %399 = sbr.rel (%p396) target = $region12
    $region11: #{forward.1} parent=5 // pred_region
      %s400 = ssub.s32 %s29, 1
      // Predicated region
      $region13: #{forward.1} parent=11 // pred_check
        %p401 = pneg %p50
      $region14: #{forward.1} parent=11 // pred_check_branch
        %403 = sbr.rel (%p401) target = $region16
      $region15: #{forward.1} parent=11 // pred_region
        _
      $region16: #{forward.1} parent=11 // pred_fallthru
        _
      // Predicated region
      $region17: #{forward.1} parent=11 // pred_check
        %p404 = pneg %p71
      $region18: #{forward.1} parent=11 // pred_check_branch
        %406 = sbr.rel (%p404) target = $region20
      $region19: #{forward.1} parent=11 // pred_region
        _
      $region20: #{forward.1} parent=11 // pred_fallthru
        _
      // Predicated region
      $region21: #{forward.1} parent=11 // pred_check
        %p407 = pneg %p92
      $region22: #{forward.1} parent=11 // pred_check_branch
        %409 = sbr.rel (%p407) target = $region24
      $region23: #{forward.1} parent=11 // pred_region
        _
      $region24: #{forward.1} parent=11 // pred_fallthru
        _
      // Predicated region
      $region25: #{forward.1} parent=11 // pred_check
        %p410 = pneg %p113
      $region26: #{forward.1} parent=11 // pred_check_branch
        %412 = sbr.rel (%p410) target = $region28
      $region27: #{forward.1} parent=11 // pred_region
        _
      $region28: #{forward.1} parent=11 // pred_fallthru
        _
      // Predicated region
      $region29: #{forward.1} parent=11 // pred_check
        %p413 = pneg %p134
      $region30: #{forward.1} parent=11 // pred_check_branch
        %415 = sbr.rel (%p413) target = $region32
      $region31: #{forward.1} parent=11 // pred_region
        _
      $region32: #{forward.1} parent=11 // pred_fallthru
        _
      // Predicated region
      $region33: #{forward.1} parent=11 // pred_check
        %p416 = pneg %p155
      $region34: #{forward.1} parent=11 // pred_check_branch
        %418 = sbr.rel (%p416) target = $region36
      $region35: #{forward.1} parent=11 // pred_region
        _
      $region36: #{forward.1} parent=11 // pred_fallthru
        _
      // Predicated region
      $region37: #{forward.1} parent=11 // pred_check
        %p419 = pneg %p176
      $region38: #{forward.1} parent=11 // pred_check_branch
        %421 = sbr.rel (%p419) target = $region40
      $region39: #{forward.1} parent=11 // pred_region
        _
      $region40: #{forward.1} parent=11 // pred_fallthru
        _
      // Predicated region
      $region41: #{forward.1} parent=11 // pred_check
        %p422 = pneg %p197
      $region42: #{forward.1} parent=11 // pred_check_branch
        %424 = sbr.rel (%p422) target = $region44
      $region43: #{forward.1} parent=11 // pred_region
        _
      $region44: #{forward.1} parent=11 // pred_fallthru
        _
      // Predicated region
      $region45: #{forward.1} parent=11 // pred_check
        %p425 = pneg %p218
      $region46: #{forward.1} parent=11 // pred_check_branch
        %427 = sbr.rel (%p425) target = $region48
      $region47: #{forward.1} parent=11 // pred_region
        _
      $region48: #{forward.1} parent=11 // pred_fallthru
        _
      // Predicated region
      $region49: #{forward.1} parent=11 // pred_check
        %p428 = pneg %p239
      $region50: #{forward.1} parent=11 // pred_check_branch
        %430 = sbr.rel (%p428) target = $region52
      $region51: #{forward.1} parent=11 // pred_region
        _
      $region52: #{forward.1} parent=11 // pred_fallthru
        _
      // Predicated region
      $region53: #{forward.1} parent=11 // pred_check
        %p431 = pneg %p260
      $region54: #{forward.1} parent=11 // pred_check_branch
        %433 = sbr.rel (%p431) target = $region56
      $region55: #{forward.1} parent=11 // pred_region
        _
      $region56: #{forward.1} parent=11 // pred_fallthru
        _
      // Predicated region
      $region57: #{forward.1} parent=11 // pred_check
        %p434 = pneg %p281
      $region58: #{forward.1} parent=11 // pred_check_branch
        %436 = sbr.rel (%p434) target = $region60
      $region59: #{forward.1} parent=11 // pred_region
        _
      $region60: #{forward.1} parent=11 // pred_fallthru
        _
      // Predicated region
      $region61: #{forward.1} parent=11 // pred_check
        %p437 = pneg %p302
      $region62: #{forward.1} parent=11 // pred_check_branch
        %439 = sbr.rel (%p437) target = $region64
      $region63: #{forward.1} parent=11 // pred_region
        _
      $region64: #{forward.1} parent=11 // pred_fallthru
        _
      // Predicated region
      $region65: #{forward.1} parent=11 // pred_check
        %p440 = pneg %p323
      $region66: #{forward.1} parent=11 // pred_check_branch
        %442 = sbr.rel (%p440) target = $region68
      $region67: #{forward.1} parent=11 // pred_region
        _
      $region68: #{forward.1} parent=11 // pred_fallthru
        _
      // Predicated region
      $region69: #{forward.1} parent=11 // pred_check
        %p443 = pneg %p344
      $region70: #{forward.1} parent=11 // pred_check_branch
        %445 = sbr.rel (%p443) target = $region72
      $region71: #{forward.1} parent=11 // pred_region
        _
      $region72: #{forward.1} parent=11 // pred_fallthru
        _
      // Predicated region
      $region73: #{forward.1} parent=11 // pred_check
        %p446 = pneg %p365
      $region74: #{forward.1} parent=11 // pred_check_branch
        %448 = sbr.rel (%p446) target = $region76
      $region75: #{forward.1} parent=11 // pred_region
        _
      $region76: #{forward.1} parent=11 // pred_fallthru
        _
    $region12: #{forward.1} parent=5 // pred_fallthru
      _
    %p449 = scmp.lt.s32.totalorder %s29, 10
    // Predicated region
    $region77: #{forward.1} parent=5 // pred_check
      %p450 = pneg %p449
    $region78: #{forward.1} parent=5 // pred_check_branch
      %452 = sbr.rel (%p450) target = $region80
    $region79: #{forward.1} parent=5 // pred_region
      _
    $region80: #{forward.1} parent=5 // pred_fallthru
      _
    %p453 = scmp.le.s32.totalorder 1, %s29
    %p454 = scmp.lt.s32.totalorder %s29, 11
    %p455 = pnand %p453, %p454
    %p456 = pneg %p455
    // Predicated region
    $region81: #{forward.1} parent=5 // pred_check
      _
    $region82: #{forward.1} parent=5 // pred_check_branch
      %458 = sbr.rel (%p455) target = $region84
    $region83: #{forward.1} parent=5 // pred_region
      %s459 = ssub.s32 %s29, 1
      %p460 = pneg %p50
      %p461 = pneg %p47
      %p462 = pneg %p71
      %p463 = pneg %p68
      %p464 = pneg %p92
      %p465 = pneg %p89
      %p466 = pneg %p113
      %p467 = pneg %p110
      %p468 = pneg %p134
      %p469 = pneg %p131
      %p470 = pneg %p155
      %p471 = pneg %p152
      %p472 = pneg %p176
      %p473 = pneg %p173
      %p474 = pneg %p197
      %p475 = pneg %p194
      %p476 = pneg %p218
      %p477 = pneg %p215
      %p478 = pneg %p239
      %p479 = pneg %p236
      %p480 = pneg %p260
      %p481 = pneg %p257
      %p482 = pneg %p281
      %p483 = pneg %p278
      %p484 = pneg %p302
      %p485 = pneg %p299
      %p486 = pneg %p323
      %p487 = pneg %p320
      %p488 = pneg %p344
      %p489 = pneg %p341
      %p490 = pneg %p365
      %p491 = pneg %p362
      %p492 = pneg %p386
      %p493 = pneg %p383
      %p494 = scmp.eq.s32.totalorder %s34, 0
      // Predicated region
      $region85: #{forward.1} parent=83 // pred_check
        %p495 = pneg %p494
      $region86: #{forward.1} parent=83 // pred_check_branch
        %497 = sbr.rel (%p495) target = $region88
      $region87: #{forward.1} parent=83 // pred_region
        %v498 = vld [vmem:[%s1] sm:$0xff]
        %v499 = vld [vmem:[%s3] sm:$0xff]
        %v500 = vld [vmem:[%s3 + $0x8] sm:$0xff]
        %v501 = vld [vmem:[%s3 + $0x10] sm:$0xff]
        %v502 = vld [vmem:[%s3 + $0x18] sm:$0xff]
        %v503 = vld [vmem:[%s3 + $0x20] sm:$0xff]
        %v504 = vld [vmem:[%s3 + $0x28] sm:$0xff]
        %v505 = vld [vmem:[%s3 + $0x30] sm:$0xff]
        %v506 = vld [vmem:[%s3 + $0x38] sm:$0xff]
        %v507 = vld [vmem:[%s4] sm:$0x1]
        %v509 = vlaneseq
        %v510 = vshrl.u32 %v509, 7
        %v511 = vsub.s32 0, %v510
        %v512 = vrot.slane %v507, %v511
        %vm514 = vcmask 523264
        %v516 = vsel %vm514, %v498, 0
        %518 = vmatprep.subr.mxu0 0.0
        %519 = vmatpush1.msra.mxu0 0.0
        %520 = vmatprep.subr.mxu0 0.0
        %521 = vmatpush1.msra.mxu0 0.0
        %522 = vmatprep.subr.mxu0 0.0
        %523 = vmatpush1.msra.mxu0 0.0
        %524 = vmatprep.subr.mxu0 0.0
        %525 = vmatpush1.msra.mxu0 0.0
        %526 = vmatprep.subr.mxu0 0.0
        %527 = vmatpush1.msra.mxu0 0.0
        %528 = vmatprep.subr.mxu0 0.0
        %529 = vmatpush1.msra.mxu0 0.0
        %530 = vmatprep.subr.mxu0 0.0
        %531 = vmatpush1.msra.mxu0 0.0
        %532 = vmatprep.subr.mxu0 0.0
        %533 = vmatpush1.msra.mxu0 0.0
        %534 = vmatprep.subr.mxu0 0.0
        %535 = vmatpush1.msra.mxu0 %v506
        %536 = vmatprep.subr.mxu0 0.0
        %537 = vmatpush1.msra.mxu0 %v505
        %538 = vmatprep.subr.mxu0 0.0
        %539 = vmatpush1.msra.mxu0 %v504
        %540 = vmatprep.subr.mxu0 0.0
        %541 = vmatpush1.msra.mxu0 %v503
        %542 = vmatprep.subr.mxu0 0.0
        %543 = vmatpush1.msra.mxu0 %v502
        %544 = vmatprep.subr.mxu0 0.0
        %545 = vmatpush1.msra.mxu0 %v501
        %546 = vmatprep.subr.mxu0 0.0
        %547 = vmatpush1.msra.mxu0 %v500
        %548 = vmatprep.subr.mxu0 0.0
        %549 = vmatpush1.msra.mxu0 %v499
        %550 = vmatprep.subr.mxu0 0.0
        %551 = vmatpush2.msra.mxu0 0.0
        %552 = vmatprep.subr.mxu0 0.0
        %553 = vmatpush2.msra.mxu0 0.0
        %554 = vmatprep.subr.mxu0 0.0
        %555 = vmatpush2.msra.mxu0 0.0
        %556 = vmatprep.subr.mxu0 0.0
        %557 = vmatpush2.msra.mxu0 0.0
        %558 = vmatprep.subr.mxu0 0.0
        %559 = vmatpush2.msra.mxu0 0.0
        %560 = vmatprep.subr.mxu0 0.0
        %561 = vmatpush2.msra.mxu0 0.0
        %562 = vmatprep.subr.mxu0 0.0
        %563 = vmatpush2.msra.mxu0 0.0
        %564 = vmatprep.subr.mxu0 0.0
        %565 = vmatpush2.msra.mxu0 0.0
        %566 = vmatprep.subr.mxu0 0.0
        %567 = vmatpush2.msra.mxu0 0.0
        %568 = vmatprep.subr.mxu0 0.0
        %569 = vmatpush2.msra.mxu0 0.0
        %570 = vmatprep.subr.mxu0 0.0
        %571 = vmatpush2.msra.mxu0 0.0
        %572 = vmatprep.subr.mxu0 0.0
        %573 = vmatpush2.msra.mxu0 0.0
        %574 = vmatprep.subr.mxu0 0.0
        %575 = vmatpush2.msra.mxu0 0.0
        %576 = vmatprep.subr.mxu0 0.0
        %577 = vmatpush2.msra.mxu0 0.0
        %578 = vmatprep.subr.mxu0 0.0
        %579 = vmatpush2.msra.mxu0 0.0
        %580 = vmatprep.subr.mxu0 0.0
        %581 = vmatpush2.msra.mxu0 0.0
        %582 = vmatprep.mubr.f32.mxu0 0.0
        %583 = vmatmul.mubr.f32.gmra.mxu0 %v516
        %v584 = vpop.f32.mrf.mxu0
        %v585 = vadd.f32 %v512, %v584
        %v586 = vpop.f32.mrf.mxu0
        %587 = vdwg.mxu0
        %v588 = vmax.f32 %v585, 0.0
        %vm589 = vcmask 261120
        %590 = vst.msk [vmem:[#allocation2] sm:$0xff] %vm589, %v588
        %591 = vst.msk [vmem:[#allocation5] sm:$0xff] %vm589, %v588
        %592 = vst.msk [vmem:[#allocation6] sm:$0xff] %vm589, %v588
        %593 = vst.msk [vmem:[#allocation7] sm:$0xff] %vm589, 0.0
        %594 = vst.msk [vmem:[#allocation8] sm:$0xff] %vm589, 0.0
        %595 = vst.msk [vmem:[#allocation8 + $0x8] sm:$0xff] %vm589, 0.0
        %596 = vst.msk [vmem:[#allocation8 + $0x10] sm:$0xff] %vm589, 0.0
        %597 = vst.msk [vmem:[#allocation8 + $0x18] sm:$0xff] %vm589, 0.0
        %598 = vst.msk [vmem:[#allocation8 + $0x20] sm:$0xff] %vm589, 0.0
        %599 = vst.msk [vmem:[#allocation8 + $0x28] sm:$0xff] %vm589, 0.0
        %600 = vst.msk [vmem:[#allocation8 + $0x30] sm:$0xff] %vm589, 0.0
        %601 = vst.msk [vmem:[#allocation8 + $0x38] sm:$0xff] %vm589, 0.0
        %602 = vst.msk [vmem:[#allocation8 + $0x40] sm:$0xff] %vm589, 0.0
        %603 = vst.msk [vmem:[#allocation8 + $0x48] sm:$0xff] %vm589, 0.0
        %v604 = vld [vmem:[%s2] sm:$0xff]
        %v605 = vld [vmem:[%s2 + $0x8] sm:$0xff]
        %v606 = vld [vmem:[%s2 + $0x10] sm:$0xff]
        %v607 = vld [vmem:[%s2 + $0x18] sm:$0xff]
        %v608 = vld [vmem:[%s2 + $0x20] sm:$0xff]
        %v609 = vld [vmem:[%s2 + $0x28] sm:$0xff]
        %v610 = vld [vmem:[%s2 + $0x30] sm:$0xff]
        %v611 = vld [vmem:[%s2 + $0x38] sm:$0xff]
        %v612 = vld [vmem:[%s2 + $0x40] sm:$0xff]
        %v613 = vld [vmem:[%s2 + $0x48] sm:$0xff]
        %v614 = vld [vmem:[%s2 + $0x50] sm:$0xff]
        %v615 = vld [vmem:[%s2 + $0x58] sm:$0xff]
        %v616 = vld [vmem:[%s2 + $0x60] sm:$0xff]
        %v617 = vld [vmem:[%s2 + $0x68] sm:$0xff]
        %v618 = vld [vmem:[%s2 + $0x70] sm:$0xff]
        %v619 = vld [vmem:[%s2 + $0x78] sm:$0xff]
        %v620 = vld [vmem:[%s5] sm:$0xff]
        %v621 = vld [vmem:[%s5 + $0x8] sm:$0xff]
        %v622 = vld [vmem:[%s5 + $0x10] sm:$0xff]
        %v623 = vld [vmem:[%s5 + $0x18] sm:$0xff]
        %v624 = vld [vmem:[%s5 + $0x20] sm:$0xff]
        %v625 = vld [vmem:[%s5 + $0x28] sm:$0xff]
        %v626 = vld [vmem:[%s6] sm:$0x1]
        %v628 = vlaneseq
        %v629 = vshrl.u32 %v628, 7
        %v630 = vsub.s32 0, %v629
        %v631 = vrot.slane %v626, %v630
        %vm633 = vcmask 392192
        %v635 = vsel %vm633, %v604, 0
        %v638 = vsel %vm633, %v605, 0
        %v641 = vsel %vm633, %v606, 0
        %v644 = vsel %vm633, %v607, 0
        %v647 = vsel %vm633, %v608, 0
        %v650 = vsel %vm633, %v609, 0
        %v653 = vsel %vm633, %v610, 0
        %v656 = vsel %vm633, %v611, 0
        %v659 = vsel %vm633, %v612, 0
        %v662 = vsel %vm633, %v613, 0
        %v665 = vsel %vm633, %v614, 0
        %v668 = vsel %vm633, %v615, 0
        %v671 = vsel %vm633, %v616, 0
        %v674 = vsel %vm633, %v617, 0
        %v677 = vsel %vm633, %v618, 0
        %v680 = vsel %vm633, %v619, 0
        %682 = vmatprep.subr.mxu0 0.0
        %683 = vmatpush1.msra.mxu0 0.0
        %684 = vmatprep.subr.mxu0 0.0
        %685 = vmatpush1.msra.mxu0 0.0
        %686 = vmatprep.subr.mxu0 0.0
        %687 = vmatpush1.msra.mxu0 0.0
        %688 = vmatprep.subr.mxu0 0.0
        %689 = vmatpush1.msra.mxu0 0.0
        %690 = vmatprep.subr.mxu0 0.0
        %691 = vmatpush1.msra.mxu0 0.0
        %692 = vmatprep.subr.mxu0 0.0
        %693 = vmatpush1.msra.mxu0 0.0
        %694 = vmatprep.subr.mxu0 0.0
        %695 = vmatpush1.msra.mxu0 0.0
        %696 = vmatprep.subr.mxu0 0.0
        %697 = vmatpush1.msra.mxu0 0.0
        %698 = vmatprep.subr.mxu0 0.0
        %699 = vmatpush1.msra.mxu0 0.0
        %700 = vmatprep.subr.mxu0 0.0
        %701 = vmatpush1.msra.mxu0 0.0
        %702 = vmatprep.subr.mxu0 0.0
        %703 = vmatpush1.msra.mxu0 %v625
        %704 = vmatprep.subr.mxu0 0.0
        %705 = vmatpush1.msra.mxu0 %v624
        %706 = vmatprep.subr.mxu0 0.0
        %707 = vmatpush1.msra.mxu0 %v623
        %708 = vmatprep.subr.mxu0 0.0
        %709 = vmatpush1.msra.mxu0 %v622
        %710 = vmatprep.subr.mxu0 0.0
        %711 = vmatpush1.msra.mxu0 %v621
        %712 = vmatprep.subr.mxu0 0.0
        %713 = vmatpush1.msra.mxu0 %v620
        %714 = vmatprep.subr.mxu0 0.0
        %715 = vmatpush2.msra.mxu0 0.0
        %716 = vmatprep.subr.mxu0 0.0
        %717 = vmatpush2.msra.mxu0 0.0
        %718 = vmatprep.subr.mxu0 0.0
        %719 = vmatpush2.msra.mxu0 0.0
        %720 = vmatprep.subr.mxu0 0.0
        %721 = vmatpush2.msra.mxu0 0.0
        %722 = vmatprep.subr.mxu0 0.0
        %723 = vmatpush2.msra.mxu0 0.0
        %724 = vmatprep.subr.mxu0 0.0
        %725 = vmatpush2.msra.mxu0 0.0
        %726 = vmatprep.subr.mxu0 0.0
        %727 = vmatpush2.msra.mxu0 0.0
        %728 = vmatprep.subr.mxu0 0.0
        %729 = vmatpush2.msra.mxu0 0.0
        %730 = vmatprep.subr.mxu0 0.0
        %731 = vmatpush2.msra.mxu0 0.0
        %732 = vmatprep.subr.mxu0 0.0
        %733 = vmatpush2.msra.mxu0 0.0
        %734 = vmatprep.subr.mxu0 0.0
        %735 = vmatpush2.msra.mxu0 0.0
        %736 = vmatprep.subr.mxu0 0.0
        %737 = vmatpush2.msra.mxu0 0.0
        %738 = vmatprep.subr.mxu0 0.0
        %739 = vmatpush2.msra.mxu0 0.0
        %740 = vmatprep.subr.mxu0 0.0
        %741 = vmatpush2.msra.mxu0 0.0
        %742 = vmatprep.subr.mxu0 0.0
        %743 = vmatpush2.msra.mxu0 0.0
        %744 = vmatprep.subr.mxu0 0.0
        %745 = vmatpush2.msra.mxu0 0.0
        %746 = vmatprep.mubr.f32.mxu0 0.0
        %747 = vmatmul.mubr.f32.gmra.mxu0 %v635
        %v748 = vpop.f32.mrf.mxu0
        %v749 = vadd.f32 %v631, %v748
        %v750 = vpop.f32.mrf.mxu0
        %751 = vmatprep.mubr.f32.mxu0 0.0
        %752 = vmatmul.mubr.f32.gmra.mxu0 %v638
        %v753 = vpop.f32.mrf.mxu0
        %v754 = vadd.f32 %v631, %v753
        %v755 = vpop.f32.mrf.mxu0
        %756 = vmatprep.mubr.f32.mxu0 0.0
        %757 = vmatmul.mubr.f32.gmra.mxu0 %v641
        %v758 = vpop.f32.mrf.mxu0
        %v759 = vadd.f32 %v631, %v758
        %v760 = vpop.f32.mrf.mxu0
        %761 = vmatprep.mubr.f32.mxu0 0.0
        %762 = vmatmul.mubr.f32.gmra.mxu0 %v644
        %v763 = vpop.f32.mrf.mxu0
        %v764 = vadd.f32 %v631, %v763
        %v765 = vpop.f32.mrf.mxu0
        %766 = vmatprep.mubr.f32.mxu0 0.0
        %767 = vmatmul.mubr.f32.gmra.mxu0 %v647
        %v768 = vpop.f32.mrf.mxu0
        %v769 = vadd.f32 %v631, %v768
        %v770 = vpop.f32.mrf.mxu0
        %771 = vmatprep.mubr.f32.mxu0 0.0
        %772 = vmatmul.mubr.f32.gmra.mxu0 %v650
        %v773 = vpop.f32.mrf.mxu0
        %v774 = vadd.f32 %v631, %v773
        %v775 = vpop.f32.mrf.mxu0
        %776 = vmatprep.mubr.f32.mxu0 0.0
        %777 = vmatmul.mubr.f32.gmra.mxu0 %v653
        %v778 = vpop.f32.mrf.mxu0
        %v779 = vadd.f32 %v631, %v778
        %v780 = vpop.f32.mrf.mxu0
        %781 = vmatprep.mubr.f32.mxu0 0.0
        %782 = vmatmul.mubr.f32.gmra.mxu0 %v656
        %v783 = vpop.f32.mrf.mxu0
        %v784 = vadd.f32 %v631, %v783
        %v785 = vpop.f32.mrf.mxu0
        %786 = vmatprep.mubr.f32.mxu0 0.0
        %787 = vmatmul.mubr.f32.gmra.mxu0 %v659
        %v788 = vpop.f32.mrf.mxu0
        %v789 = vadd.f32 %v631, %v788
        %v790 = vpop.f32.mrf.mxu0
        %791 = vmatprep.mubr.f32.mxu0 0.0
        %792 = vmatmul.mubr.f32.gmra.mxu0 %v662
        %v793 = vpop.f32.mrf.mxu0
        %v794 = vadd.f32 %v631, %v793
        %v795 = vpop.f32.mrf.mxu0
        %796 = vmatprep.mubr.f32.mxu0 0.0
        %797 = vmatmul.mubr.f32.gmra.mxu0 %v665
        %v798 = vpop.f32.mrf.mxu0
        %v799 = vadd.f32 %v631, %v798
        %v800 = vpop.f32.mrf.mxu0
        %801 = vmatprep.mubr.f32.mxu0 0.0
        %802 = vmatmul.mubr.f32.gmra.mxu0 %v668
        %v803 = vpop.f32.mrf.mxu0
        %v804 = vadd.f32 %v631, %v803
        %v805 = vpop.f32.mrf.mxu0
        %806 = vmatprep.mubr.f32.mxu0 0.0
        %807 = vmatmul.mubr.f32.gmra.mxu0 %v671
        %v808 = vpop.f32.mrf.mxu0
        %v809 = vadd.f32 %v631, %v808
        %v810 = vpop.f32.mrf.mxu0
        %811 = vmatprep.mubr.f32.mxu0 0.0
        %812 = vmatmul.mubr.f32.gmra.mxu0 %v674
        %v813 = vpop.f32.mrf.mxu0
        %v814 = vadd.f32 %v631, %v813
        %v815 = vpop.f32.mrf.mxu0
        %816 = vmatprep.mubr.f32.mxu0 0.0
        %817 = vmatmul.mubr.f32.gmra.mxu0 %v677
        %v818 = vpop.f32.mrf.mxu0
        %v819 = vadd.f32 %v631, %v818
        %v820 = vpop.f32.mrf.mxu0
        %821 = vmatprep.mubr.f32.mxu0 0.0
        %822 = vmatmul.mubr.f32.gmra.mxu0 %v680
        %v823 = vpop.f32.mrf.mxu0
        %v824 = vadd.f32 %v631, %v823
        %v825 = vpop.f32.mrf.mxu0
        %826 = vdwg.mxu0
        %v827 = vmax.f32 %v749, 0.0
        %v828 = vmax.f32 %v754, 0.0
        %v829 = vmax.f32 %v759, 0.0
        %v830 = vmax.f32 %v764, 0.0
        %v831 = vmax.f32 %v769, 0.0
        %v832 = vmax.f32 %v774, 0.0
        %v833 = vmax.f32 %v779, 0.0
        %v834 = vmax.f32 %v784, 0.0
        %v835 = vmax.f32 %v789, 0.0
        %v836 = vmax.f32 %v794, 0.0
        %v837 = vmax.f32 %v799, 0.0
        %v838 = vmax.f32 %v804, 0.0
        %v839 = vmax.f32 %v809, 0.0
        %v840 = vmax.f32 %v814, 0.0
        %v841 = vmax.f32 %v819, 0.0
        %v842 = vmax.f32 %v824, 0.0
        %v843 = vld [vmem:[%s9] sm:$0xff]
        %v844 = vld [vmem:[%s9 + $0x8] sm:$0xff]
        %v845 = vld [vmem:[%s9 + $0x10] sm:$0xff]
        %v846 = vld [vmem:[%s9 + $0x18] sm:$0xff]
        %v848 = vsel %vm589, %v827, 0
        %v851 = vsel %vm589, %v828, 0
        %v854 = vsel %vm589, %v829, 0
        %v857 = vsel %vm589, %v830, 0
        %v860 = vsel %vm589, %v831, 0
        %v863 = vsel %vm589, %v832, 0
        %v866 = vsel %vm589, %v833, 0
        %v869 = vsel %vm589, %v834, 0
        %v872 = vsel %vm589, %v835, 0
        %v875 = vsel %vm589, %v836, 0
        %v878 = vsel %vm589, %v837, 0
        %v881 = vsel %vm589, %v838, 0
        %v884 = vsel %vm589, %v839, 0
        %v887 = vsel %vm589, %v840, 0
        %v890 = vsel %vm589, %v841, 0
        %v893 = vsel %vm589, %v842, 0
        %895 = vmatprep.subr.mxu0 0.0
        %896 = vmatpush1.msra.mxu0 0.0
        %897 = vmatprep.subr.mxu0 0.0
        %898 = vmatpush1.msra.mxu0 0.0
        %899 = vmatprep.subr.mxu0 0.0
        %900 = vmatpush1.msra.mxu0 0.0
        %901 = vmatprep.subr.mxu0 0.0
        %902 = vmatpush1.msra.mxu0 0.0
        %903 = vmatprep.subr.mxu0 0.0
        %904 = vmatpush1.msra.mxu0 0.0
        %905 = vmatprep.subr.mxu0 0.0
        %906 = vmatpush1.msra.mxu0 0.0
        %907 = vmatprep.subr.mxu0 0.0
        %908 = vmatpush1.msra.mxu0 0.0
        %909 = vmatprep.subr.mxu0 0.0
        %910 = vmatpush1.msra.mxu0 0.0
        %911 = vmatprep.subr.mxu0 0.0
        %912 = vmatpush1.msra.mxu0 0.0
        %913 = vmatprep.subr.mxu0 0.0
        %914 = vmatpush1.msra.mxu0 0.0
        %915 = vmatprep.subr.mxu0 0.0
        %916 = vmatpush1.msra.mxu0 0.0
        %917 = vmatprep.subr.mxu0 0.0
        %918 = vmatpush1.msra.mxu0 0.0
        %919 = vmatprep.subr.mxu0 0.0
        %920 = vmatpush1.msra.mxu0 %v846
        %921 = vmatprep.subr.mxu0 0.0
        %922 = vmatpush1.msra.mxu0 %v845
        %923 = vmatprep.subr.mxu0 0.0
        %924 = vmatpush1.msra.mxu0 %v844
        %925 = vmatprep.subr.mxu0 0.0
        %926 = vmatpush1.msra.mxu0 %v843
        %927 = vmatprep.subr.mxu0 0.0
        %928 = vmatpush2.msra.mxu0 0.0
        %929 = vmatprep.subr.mxu0 0.0
        %930 = vmatpush2.msra.mxu0 0.0
        %931 = vmatprep.subr.mxu0 0.0
        %932 = vmatpush2.msra.mxu0 0.0
        %933 = vmatprep.subr.mxu0 0.0
        %934 = vmatpush2.msra.mxu0 0.0
        %935 = vmatprep.subr.mxu0 0.0
        %936 = vmatpush2.msra.mxu0 0.0
        %937 = vmatprep.subr.mxu0 0.0
        %938 = vmatpush2.msra.mxu0 0.0
        %939 = vmatprep.subr.mxu0 0.0
        %940 = vmatpush2.msra.mxu0 0.0
        %941 = vmatprep.subr.mxu0 0.0
        %942 = vmatpush2.msra.mxu0 0.0
        %943 = vmatprep.subr.mxu0 0.0
        %944 = vmatpush2.msra.mxu0 0.0
        %945 = vmatprep.subr.mxu0 0.0
        %946 = vmatpush2.msra.mxu0 0.0
        %947 = vmatprep.subr.mxu0 0.0
        %948 = vmatpush2.msra.mxu0 0.0
        %949 = vmatprep.subr.mxu0 0.0
        %950 = vmatpush2.msra.mxu0 0.0
        %951 = vmatprep.subr.mxu0 0.0
        %952 = vmatpush2.msra.mxu0 0.0
        %953 = vmatprep.subr.mxu0 0.0
        %954 = vmatpush2.msra.mxu0 0.0
        %955 = vmatprep.subr.mxu0 0.0
        %956 = vmatpush2.msra.mxu0 0.0
        %957 = vmatprep.subr.mxu0 0.0
        %958 = vmatpush2.msra.mxu0 0.0
        %959 = vmatprep.mubr.f32.mxu0 0.0
        %960 = vmatmul.mubr.f32.gmra.mxu0 %v848
        %v961 = vpop.f32.mrf.mxu0
        %v962 = vadd.f32 0.0, %v961
        %v963 = vpop.f32.mrf.mxu0
        %964 = vmatprep.mubr.f32.mxu0 0.0
        %965 = vmatmul.mubr.f32.gmra.mxu0 %v851
        %v966 = vpop.f32.mrf.mxu0
        %v967 = vadd.f32 0.0, %v966
        %v968 = vpop.f32.mrf.mxu0
        %969 = vmatprep.mubr.f32.mxu0 0.0
        %970 = vmatmul.mubr.f32.gmra.mxu0 %v854
        %v971 = vpop.f32.mrf.mxu0
        %v972 = vadd.f32 0.0, %v971
        %v973 = vpop.f32.mrf.mxu0
        %974 = vmatprep.mubr.f32.mxu0 0.0
        %975 = vmatmul.mubr.f32.gmra.mxu0 %v857
        %v976 = vpop.f32.mrf.mxu0
        %v977 = vadd.f32 0.0, %v976
        %v978 = vpop.f32.mrf.mxu0
        %979 = vmatprep.mubr.f32.mxu0 0.0
        %980 = vmatmul.mubr.f32.gmra.mxu0 %v860
        %v981 = vpop.f32.mrf.mxu0
        %v982 = vadd.f32 0.0, %v981
        %v983 = vpop.f32.mrf.mxu0
        %984 = vmatprep.mubr.f32.mxu0 0.0
        %985 = vmatmul.mubr.f32.gmra.mxu0 %v863
        %v986 = vpop.f32.mrf.mxu0
        %v987 = vadd.f32 0.0, %v986
        %v988 = vpop.f32.mrf.mxu0
        %989 = vmatprep.mubr.f32.mxu0 0.0
        %990 = vmatmul.mubr.f32.gmra.mxu0 %v866
        %v991 = vpop.f32.mrf.mxu0
        %v992 = vadd.f32 0.0, %v991
        %v993 = vpop.f32.mrf.mxu0
        %994 = vmatprep.mubr.f32.mxu0 0.0
        %995 = vmatmul.mubr.f32.gmra.mxu0 %v869
        %v996 = vpop.f32.mrf.mxu0
        %v997 = vadd.f32 0.0, %v996
        %v998 = vpop.f32.mrf.mxu0
        %999 = vmatprep.mubr.f32.mxu0 0.0
        %1000 = vmatmul.mubr.f32.gmra.mxu0 %v872
        %v1001 = vpop.f32.mrf.mxu0
        %v1002 = vadd.f32 0.0, %v1001
        %v1003 = vpop.f32.mrf.mxu0
        %1004 = vmatprep.mubr.f32.mxu0 0.0
        %1005 = vmatmul.mubr.f32.gmra.mxu0 %v875
        %v1006 = vpop.f32.mrf.mxu0
        %v1007 = vadd.f32 0.0, %v1006
        %v1008 = vpop.f32.mrf.mxu0
        %1009 = vmatprep.mubr.f32.mxu0 0.0
        %1010 = vmatmul.mubr.f32.gmra.mxu0 %v878
        %v1011 = vpop.f32.mrf.mxu0
        %v1012 = vadd.f32 0.0, %v1011
        %v1013 = vpop.f32.mrf.mxu0
        %1014 = vmatprep.mubr.f32.mxu0 0.0
        %1015 = vmatmul.mubr.f32.gmra.mxu0 %v881
        %v1016 = vpop.f32.mrf.mxu0
        %v1017 = vadd.f32 0.0, %v1016
        %v1018 = vpop.f32.mrf.mxu0
        %1019 = vmatprep.mubr.f32.mxu0 0.0
        %1020 = vmatmul.mubr.f32.gmra.mxu0 %v884
        %v1021 = vpop.f32.mrf.mxu0
        %v1022 = vadd.f32 0.0, %v1021
        %v1023 = vpop.f32.mrf.mxu0
        %1024 = vmatprep.mubr.f32.mxu0 0.0
        %1025 = vmatmul.mubr.f32.gmra.mxu0 %v887
        %v1026 = vpop.f32.mrf.mxu0
        %v1027 = vadd.f32 0.0, %v1026
        %v1028 = vpop.f32.mrf.mxu0
        %1029 = vmatprep.mubr.f32.mxu0 0.0
        %1030 = vmatmul.mubr.f32.gmra.mxu0 %v890
        %v1031 = vpop.f32.mrf.mxu0
        %v1032 = vadd.f32 0.0, %v1031
        %v1033 = vpop.f32.mrf.mxu0
        %1034 = vmatprep.mubr.f32.mxu0 0.0
        %1035 = vmatmul.mubr.f32.gmra.mxu0 %v893
        %v1036 = vpop.f32.mrf.mxu0
        %v1037 = vadd.f32 0.0, %v1036
        %v1038 = vpop.f32.mrf.mxu0
        %1039 = vdwg.mxu0
        %1040 = vst.msk [vmem:[#allocation3] sm:$0xff] %vm589, %v827
        %1041 = vst.msk [vmem:[#allocation3 + $0x8] sm:$0xff] %vm589, %v828
        %1042 = vst.msk [vmem:[#allocation4] sm:$0xff] %vm589, %v962
        %1043 = vst.msk [vmem:[#allocation4 + $0x8] sm:$0xff] %vm589, %v967
        %s1044 = scalar_lea.vmem [#allocation3], 16
        %1045 = vst.msk [vmem:[%s1044] sm:$0xff] %vm589, %v829
        %1046 = vst.msk [vmem:[%s1044 + $0x8] sm:$0xff] %vm589, %v830
        %s1047 = scalar_lea.vmem [#allocation4], 16
        %1048 = vst.msk [vmem:[%s1047] sm:$0xff] %vm589, %v972
        %1049 = vst.msk [vmem:[%s1047 + $0x8] sm:$0xff] %vm589, %v977
        %s1050 = scalar_lea.vmem [#allocation3], 32
        %1051 = vst.msk [vmem:[%s1050] sm:$0xff] %vm589, %v831
        %1052 = vst.msk [vmem:[%s1050 + $0x8] sm:$0xff] %vm589, %v832
        %s1053 = scalar_lea.vmem [#allocation4], 32
        %1054 = vst.msk [vmem:[%s1053] sm:$0xff] %vm589, %v982
        %1055 = vst.msk [vmem:[%s1053 + $0x8] sm:$0xff] %vm589, %v987
        %s1056 = scalar_lea.vmem [#allocation3], 48
        %1057 = vst.msk [vmem:[%s1056] sm:$0xff] %vm589, %v833
        %1058 = vst.msk [vmem:[%s1056 + $0x8] sm:$0xff] %vm589, %v834
        %s1059 = scalar_lea.vmem [#allocation4], 48
        %1060 = vst.msk [vmem:[%s1059] sm:$0xff] %vm589, %v992
        %1061 = vst.msk [vmem:[%s1059 + $0x8] sm:$0xff] %vm589, %v997
        %s1062 = scalar_lea.vmem [#allocation3], 64
        %1063 = vst.msk [vmem:[%s1062] sm:$0xff] %vm589, %v835
        %1064 = vst.msk [vmem:[%s1062 + $0x8] sm:$0xff] %vm589, %v836
        %s1065 = scalar_lea.vmem [#allocation4], 64
        %1066 = vst.msk [vmem:[%s1065] sm:$0xff] %vm589, %v1002
        %1067 = vst.msk [vmem:[%s1065 + $0x8] sm:$0xff] %vm589, %v1007
        %s1068 = scalar_lea.vmem [#allocation3], 80
        %1069 = vst.msk [vmem:[%s1068] sm:$0xff] %vm589, %v837
        %1070 = vst.msk [vmem:[%s1068 + $0x8] sm:$0xff] %vm589, %v838
        %s1071 = scalar_lea.vmem [#allocation4], 80
        %1072 = vst.msk [vmem:[%s1071] sm:$0xff] %vm589, %v1012
        %1073 = vst.msk [vmem:[%s1071 + $0x8] sm:$0xff] %vm589, %v1017
        %s1074 = scalar_lea.vmem [#allocation3], 96
        %1075 = vst.msk [vmem:[%s1074] sm:$0xff] %vm589, %v839
        %1076 = vst.msk [vmem:[%s1074 + $0x8] sm:$0xff] %vm589, %v840
        %s1077 = scalar_lea.vmem [#allocation4], 96
        %1078 = vst.msk [vmem:[%s1077] sm:$0xff] %vm589, %v1022
        %1079 = vst.msk [vmem:[%s1077 + $0x8] sm:$0xff] %vm589, %v1027
        %s1080 = scalar_lea.vmem [#allocation3], 112
        %1081 = vst.msk [vmem:[%s1080] sm:$0xff] %vm589, %v841
        %1082 = vst.msk [vmem:[%s1080 + $0x8] sm:$0xff] %vm589, %v842
        %s1083 = scalar_lea.vmem [#allocation4], 112
        %1084 = vst.msk [vmem:[%s1083] sm:$0xff] %vm589, %v1032
        %1085 = vst.msk [vmem:[%s1083 + $0x8] sm:$0xff] %vm589, %v1037
      $region88: #{forward.1} parent=83 // pred_fallthru
        _
      %s1086 = sld [smem:[#allocation10 + %s34]]
      %p1087 = scmp.gt.s32.totalorder %s1086, 0
      %s1088 = smul.u32 %s34, 8
      %s1089 = scalar_lea.vmem %s7, %s1088
      %v1090 = vld [vmem:[%s1089] sm:$0xff]
      %s1091 = scalar_lea.vmem %s8, %s1088
      %v1092 = vld [vmem:[%s1091] sm:$0xff]
      %v1093 = vld [vmem:[#allocation2] sm:$0xff]
      %v1094 = vld [vmem:[#allocation5] sm:$0xff]
      %v1095 = vld [vmem:[#allocation6] sm:$0xff]
      %s1096 = ssub.s32 %s34, 1
      %p1097 = scmp.gt.s32.totalorder %s1096, 1
      %s1098 = scalar_select %p1097, %s1096, 1
      %v1099 = vstv %s1098
      %v1100 = vcvt.s32.f32 %v1099
      %v1101 = vld [vmem:[#allocation7] sm:$0xff]
      %v1102 = vrcp.pop %v1100
      %v1103 = vmul.f32 %v1101, %v1102
      %p1104 = scmp.le.s32.totalorder %s34, 1
      %s1105 = scalar_select %p1104, 1, 0
      %v1106 = vstv %s1105
      %vm1107 = vcmp.eq.s32.totalorder %v1106, 1
      %v1108 = vsel %vm1107, %v1092, %v1103
      %v1109 = vmul.f32 %v1093, %v1108
      %vm1110 = vcmask 261120
      %v1111 = vsel %vm1110, %v1109, -inf
      %1112 = vmax.xlane.f32.xlu0 %v1111
      %v1113 = vpop.xlane.xlu0 %1112
      %v1114 = vsub.f32 %v1109, %v1113
      %v1115 = vmul.f32 %v1114, 1.442695
      %v1116 = vpow.pop %v1115
      %v1117 = vsel %vm1110, %v1116, 0.0
      %1118 = vadd.xlane.f32.xlu0 %v1117
      %v1119 = vpop.xlane.xlu0 %1118
      %v1120 = vrcp.pop %v1119
      %v1121 = vmul.f32 %v1116, %v1120
      %v1122 = vadd.f32 %v1090, %v1121
      %s1123 = scalar_select %p494, 1, 0
      %v1124 = vstv %s1123
      %vm1125 = vcmp.eq.s32.totalorder %v1124, 1
      %v1126 = vsel %vm1125, %v1093, %v1122
      %v1127 = vld [vmem:[%s10] sm:$0xff]
      %v1128 = vld [vmem:[%s10 + $0x8] sm:$0xff]
      %v1129 = vld [vmem:[%s10 + $0x10] sm:$0xff]
      %v1130 = vld [vmem:[%s10 + $0x18] sm:$0xff]
      %v1132 = vsel %vm1110, %v1094, 0
      %1134 = vmatprep.subr.mxu0 0.0
      %1135 = vmatpush1.msra.mxu0 0.0
      %1136 = vmatprep.subr.mxu0 0.0
      %1137 = vmatpush1.msra.mxu0 0.0
      %1138 = vmatprep.subr.mxu0 0.0
      %1139 = vmatpush1.msra.mxu0 0.0
      %1140 = vmatprep.subr.mxu0 0.0
      %1141 = vmatpush1.msra.mxu0 0.0
      %1142 = vmatprep.subr.mxu0 0.0
      %1143 = vmatpush1.msra.mxu0 0.0
      %1144 = vmatprep.subr.mxu0 0.0
      %1145 = vmatpush1.msra.mxu0 0.0
      %1146 = vmatprep.subr.mxu0 0.0
      %1147 = vmatpush1.msra.mxu0 0.0
      %1148 = vmatprep.subr.mxu0 0.0
      %1149 = vmatpush1.msra.mxu0 0.0
      %1150 = vmatprep.subr.mxu0 0.0
      %1151 = vmatpush1.msra.mxu0 0.0
      %1152 = vmatprep.subr.mxu0 0.0
      %1153 = vmatpush1.msra.mxu0 0.0
      %1154 = vmatprep.subr.mxu0 0.0
      %1155 = vmatpush1.msra.mxu0 0.0
      %1156 = vmatprep.subr.mxu0 0.0
      %1157 = vmatpush1.msra.mxu0 0.0
      %1158 = vmatprep.subr.mxu0 0.0
      %1159 = vmatpush1.msra.mxu0 %v1130
      %1160 = vmatprep.subr.mxu0 0.0
      %1161 = vmatpush1.msra.mxu0 %v1129
      %1162 = vmatprep.subr.mxu0 0.0
      %1163 = vmatpush1.msra.mxu0 %v1128
      %1164 = vmatprep.subr.mxu0 0.0
      %1165 = vmatpush1.msra.mxu0 %v1127
      %1166 = vmatprep.subr.mxu0 0.0
      %1167 = vmatpush2.msra.mxu0 0.0
      %1168 = vmatprep.subr.mxu0 0.0
      %1169 = vmatpush2.msra.mxu0 0.0
      %1170 = vmatprep.subr.mxu0 0.0
      %1171 = vmatpush2.msra.mxu0 0.0
      %1172 = vmatprep.subr.mxu0 0.0
      %1173 = vmatpush2.msra.mxu0 0.0
      %1174 = vmatprep.subr.mxu0 0.0
      %1175 = vmatpush2.msra.mxu0 0.0
      %1176 = vmatprep.subr.mxu0 0.0
      %1177 = vmatpush2.msra.mxu0 0.0
      %1178 = vmatprep.subr.mxu0 0.0
      %1179 = vmatpush2.msra.mxu0 0.0
      %1180 = vmatprep.subr.mxu0 0.0
      %1181 = vmatpush2.msra.mxu0 0.0
      %1182 = vmatprep.subr.mxu0 0.0
      %1183 = vmatpush2.msra.mxu0 0.0
      %1184 = vmatprep.subr.mxu0 0.0
      %1185 = vmatpush2.msra.mxu0 0.0
      %1186 = vmatprep.subr.mxu0 0.0
      %1187 = vmatpush2.msra.mxu0 0.0
      %1188 = vmatprep.subr.mxu0 0.0
      %1189 = vmatpush2.msra.mxu0 0.0
      %1190 = vmatprep.subr.mxu0 0.0
      %1191 = vmatpush2.msra.mxu0 0.0
      %1192 = vmatprep.subr.mxu0 0.0
      %1193 = vmatpush2.msra.mxu0 0.0
      %1194 = vmatprep.subr.mxu0 0.0
      %1195 = vmatpush2.msra.mxu0 0.0
      %1196 = vmatprep.subr.mxu0 0.0
      %1197 = vmatpush2.msra.mxu0 0.0
      %1198 = vmatprep.mubr.f32.mxu0 0.0
      %1199 = vmatmul.mubr.f32.gmra.mxu0 %v1132
      %v1200 = vpop.f32.mrf.mxu0
      %v1201 = vadd.f32 0.0, %v1200
      %v1202 = vpop.f32.mrf.mxu0
      %1203 = vdwg.mxu0
      %v1204 = vld [vmem:[#allocation4] sm:$0xff]
      %v1205 = vld [vmem:[#allocation4 + $0x8] sm:$0xff]
      %v1206 = vld [vmem:[#allocation4 + $0x10] sm:$0xff]
      %v1207 = vld [vmem:[#allocation4 + $0x18] sm:$0xff]
      %v1208 = vld [vmem:[#allocation4 + $0x20] sm:$0xff]
      %v1209 = vld [vmem:[#allocation4 + $0x28] sm:$0xff]
      %v1210 = vld [vmem:[#allocation4 + $0x30] sm:$0xff]
      %v1211 = vld [vmem:[#allocation4 + $0x38] sm:$0xff]
      %v1212 = vld [vmem:[#allocation4 + $0x40] sm:$0xff]
      %v1213 = vld [vmem:[#allocation4 + $0x48] sm:$0xff]
      %v1214 = vld [vmem:[#allocation4 + $0x50] sm:$0xff]
      %v1215 = vld [vmem:[#allocation4 + $0x58] sm:$0xff]
      %v1216 = vld [vmem:[#allocation4 + $0x60] sm:$0xff]
      %v1217 = vld [vmem:[#allocation4 + $0x68] sm:$0xff]
      %v1218 = vld [vmem:[#allocation4 + $0x70] sm:$0xff]
      %v1219 = vld [vmem:[#allocation4 + $0x78] sm:$0xff]
      %v1221 = vcombine.high %v1201, %v1201
      %v1223 = vunpack.c.l.s4 1966171168
      %v1224 = vunpack.c.0.s8 %v1223
      %v1225 = vlaneseq
      %v1226 = vshrl.u32 %v1225, 7
      %v1227 = vsub.s32 %v1224, %v1226
      %v1228 = vrot.slane %v1201, %v1227
      %v1230 = vunpack.c.l.s4 1966171168
      %v1231 = vunpack.c.0.s8 %v1230
      %v1232 = vlaneseq
      %v1233 = vshrl.u32 %v1232, 7
      %v1234 = vsub.s32 %v1231, %v1233
      %v1235 = vrot.slane %v1221, %v1234
      %v1236 = vcombine.high %v1228, %v1228
      %v1237 = vcombine.high %v1235, %v1235
      %v1239 = vunpack.c.l.s4 1966171168
      %v1240 = vunpack.c.0.s8 %v1239
      %v1241 = vlaneseq
      %v1242 = vshrl.u32 %v1241, 7
      %v1243 = vsub.s32 %v1240, %v1242
      %v1244 = vrot.slane %v1228, %v1243
      %v1246 = vunpack.c.l.s4 1966171168
      %v1247 = vunpack.c.0.s8 %v1246
      %v1248 = vlaneseq
      %v1249 = vshrl.u32 %v1248, 7
      %v1250 = vsub.s32 %v1247, %v1249
      %v1251 = vrot.slane %v1235, %v1250
      %v1253 = vunpack.c.l.s4 1966171168
      %v1254 = vunpack.c.0.s8 %v1253
      %v1255 = vlaneseq
      %v1256 = vshrl.u32 %v1255, 7
      %v1257 = vsub.s32 %v1254, %v1256
      %v1258 = vrot.slane %v1236, %v1257
      %v1260 = vunpack.c.l.s4 1966171168
      %v1261 = vunpack.c.0.s8 %v1260
      %v1262 = vlaneseq
      %v1263 = vshrl.u32 %v1262, 7
      %v1264 = vsub.s32 %v1261, %v1263
      %v1265 = vrot.slane %v1237, %v1264
      %v1266 = vcombine.high %v1244, %v1244
      %v1267 = vcombine.high %v1251, %v1251
      %v1268 = vcombine.high %v1258, %v1258
      %v1269 = vcombine.high %v1265, %v1265
      %v1270 = vlaneseq
      %v1271 = vshrl.u32 %v1270, 7
      %v1272 = vsub.s32 0, %v1271
      %v1273 = vrot.slane %v1244, %v1272
      %v1274 = vlaneseq
      %v1275 = vshrl.u32 %v1274, 7
      %v1276 = vsub.s32 0, %v1275
      %v1277 = vrot.slane %v1258, %v1276
      %v1278 = vlaneseq
      %v1279 = vshrl.u32 %v1278, 7
      %v1280 = vsub.s32 0, %v1279
      %v1281 = vrot.slane %v1266, %v1280
      %v1282 = vlaneseq
      %v1283 = vshrl.u32 %v1282, 7
      %v1284 = vsub.s32 0, %v1283
      %v1285 = vrot.slane %v1268, %v1284
      %v1286 = vlaneseq
      %v1287 = vshrl.u32 %v1286, 7
      %v1288 = vsub.s32 0, %v1287
      %v1289 = vrot.slane %v1251, %v1288
      %v1290 = vlaneseq
      %v1291 = vshrl.u32 %v1290, 7
      %v1292 = vsub.s32 0, %v1291
      %v1293 = vrot.slane %v1265, %v1292
      %v1294 = vlaneseq
      %v1295 = vshrl.u32 %v1294, 7
      %v1296 = vsub.s32 0, %v1295
      %v1297 = vrot.slane %v1267, %v1296
      %v1298 = vlaneseq
      %v1299 = vshrl.u32 %v1298, 7
      %v1300 = vsub.s32 0, %v1299
      %v1301 = vrot.slane %v1269, %v1300
      %v1310 = vadd.f32 %v1204, %v1273
      %v1311 = vadd.f32 %v1205, %v1273
      %v1312 = vadd.f32 %v1206, %v1277
      %v1313 = vadd.f32 %v1207, %v1277
      %v1314 = vadd.f32 %v1208, %v1281
      %v1315 = vadd.f32 %v1209, %v1281
      %v1316 = vadd.f32 %v1210, %v1285
      %v1317 = vadd.f32 %v1211, %v1285
      %v1318 = vadd.f32 %v1212, %v1289
      %v1319 = vadd.f32 %v1213, %v1289
      %v1320 = vadd.f32 %v1214, %v1293
      %v1321 = vadd.f32 %v1215, %v1293
      %v1322 = vadd.f32 %v1216, %v1297
      %v1323 = vadd.f32 %v1217, %v1297
      %v1324 = vadd.f32 %v1218, %v1301
      %v1325 = vadd.f32 %v1219, %v1301
      %v1326 = vtanh.pop %v1310
      %v1327 = vtanh.pop %v1311
      %v1328 = vtanh.pop %v1312
      %v1329 = vtanh.pop %v1313
      %v1330 = vtanh.pop %v1314
      %v1331 = vtanh.pop %v1315
      %v1332 = vtanh.pop %v1316
      %v1333 = vtanh.pop %v1317
      %v1334 = vtanh.pop %v1318
      %v1335 = vtanh.pop %v1319
      %v1336 = vtanh.pop %v1320
      %v1337 = vtanh.pop %v1321
      %v1338 = vtanh.pop %v1322
      %v1339 = vtanh.pop %v1323
      %v1340 = vtanh.pop %v1324
      %v1341 = vtanh.pop %v1325
      %v1342 = vld [vmem:[%s11] sm:$0x1]
      %v1344 = vlaneseq
      %v1345 = vshrl.u32 %v1344, 7
      %v1346 = vsub.s32 0, %v1345
      %v1347 = vrot.slane %v1342, %v1346
      %v1349 = vmul.f32 %v1326, %v1347
      %v1350 = vmul.f32 %v1327, %v1347
      %v1351 = vmul.f32 %v1328, %v1347
      %v1352 = vmul.f32 %v1329, %v1347
      %v1353 = vmul.f32 %v1330, %v1347
      %v1354 = vmul.f32 %v1331, %v1347
      %v1355 = vmul.f32 %v1332, %v1347
      %v1356 = vmul.f32 %v1333, %v1347
      %v1357 = vmul.f32 %v1334, %v1347
      %v1358 = vmul.f32 %v1335, %v1347
      %v1359 = vmul.f32 %v1336, %v1347
      %v1360 = vmul.f32 %v1337, %v1347
      %v1361 = vmul.f32 %v1338, %v1347
      %v1362 = vmul.f32 %v1339, %v1347
      %v1363 = vmul.f32 %v1340, %v1347
      %v1364 = vmul.f32 %v1341, %v1347
      %v1365 = vsel %vm1110, %v1349, 0.0
      %1366 = vadd.xlane.f32.xlu0 %v1365
      %v1367 = vpop.xlane.xlu0 %1366
      %v1368 = vsel %vm1110, %v1350, 0.0
      %1369 = vadd.xlane.f32.xlu0 %v1368
      %v1370 = vpop.xlane.xlu0 %1369
      %v1371 = vsel %vm1110, %v1351, 0.0
      %1372 = vadd.xlane.f32.xlu0 %v1371
      %v1373 = vpop.xlane.xlu0 %1372
      %v1374 = vsel %vm1110, %v1352, 0.0
      %1375 = vadd.xlane.f32.xlu0 %v1374
      %v1376 = vpop.xlane.xlu0 %1375
      %v1377 = vsel %vm1110, %v1353, 0.0
      %1378 = vadd.xlane.f32.xlu0 %v1377
      %v1379 = vpop.xlane.xlu0 %1378
      %v1380 = vsel %vm1110, %v1354, 0.0
      %1381 = vadd.xlane.f32.xlu0 %v1380
      %v1382 = vpop.xlane.xlu0 %1381
      %v1383 = vsel %vm1110, %v1355, 0.0
      %1384 = vadd.xlane.f32.xlu0 %v1383
      %v1385 = vpop.xlane.xlu0 %1384
      %v1386 = vsel %vm1110, %v1356, 0.0
      %1387 = vadd.xlane.f32.xlu0 %v1386
      %v1388 = vpop.xlane.xlu0 %1387
      %v1389 = vsel %vm1110, %v1357, 0.0
      %1390 = vadd.xlane.f32.xlu0 %v1389
      %v1391 = vpop.xlane.xlu0 %1390
      %v1392 = vsel %vm1110, %v1358, 0.0
      %1393 = vadd.xlane.f32.xlu0 %v1392
      %v1394 = vpop.xlane.xlu0 %1393
      %v1395 = vsel %vm1110, %v1359, 0.0
      %1396 = vadd.xlane.f32.xlu0 %v1395
      %v1397 = vpop.xlane.xlu0 %1396
      %v1398 = vsel %vm1110, %v1360, 0.0
      %1399 = vadd.xlane.f32.xlu0 %v1398
      %v1400 = vpop.xlane.xlu0 %1399
      %v1401 = vsel %vm1110, %v1361, 0.0
      %1402 = vadd.xlane.f32.xlu0 %v1401
      %v1403 = vpop.xlane.xlu0 %1402
      %v1404 = vsel %vm1110, %v1362, 0.0
      %1405 = vadd.xlane.f32.xlu0 %v1404
      %v1406 = vpop.xlane.xlu0 %1405
      %v1407 = vsel %vm1110, %v1363, 0.0
      %1408 = vadd.xlane.f32.xlu0 %v1407
      %v1409 = vpop.xlane.xlu0 %1408
      %v1410 = vsel %vm1110, %v1364, 0.0
      %1411 = vadd.xlane.f32.xlu0 %v1410
      %v1412 = vpop.xlane.xlu0 %1411
      %v1429 = vlaneseq
      %v1430 = vand.u32 %v1429, 127
      %v1431 = vlaneseq
      %v1432 = vshrl.u32 %v1431, 7
      %v1433 = vsub.s32 %v1430, %v1432
      %v1434 = vrot.slane %v1367, %v1433
      %v1435 = vadd.s32 %v1430, 4294967288
      %v1436 = vlaneseq
      %v1437 = vshrl.u32 %v1436, 7
      %v1438 = vsub.s32 %v1435, %v1437
      %v1439 = vrot.slane %v1370, %v1438
      %vm1440 = vcmask 130112
      %v1441 = vsel %vm1440, %v1439, %v1434
      %v1442 = vlaneseq
      %v1443 = vshrl.u32 %v1442, 7
      %v1444 = vsub.s32 %v1430, %v1443
      %v1445 = vrot.slane %v1373, %v1444
      %v1446 = vlaneseq
      %v1447 = vshrl.u32 %v1446, 7
      %v1448 = vsub.s32 %v1435, %v1447
      %v1449 = vrot.slane %v1376, %v1448
      %v1450 = vsel %vm1440, %v1449, %v1445
      %v1451 = vlaneseq
      %v1452 = vshrl.u32 %v1451, 7
      %v1453 = vsub.s32 %v1430, %v1452
      %v1454 = vrot.slane %v1379, %v1453
      %v1455 = vlaneseq
      %v1456 = vshrl.u32 %v1455, 7
      %v1457 = vsub.s32 %v1435, %v1456
      %v1458 = vrot.slane %v1382, %v1457
      %v1459 = vsel %vm1440, %v1458, %v1454
      %v1460 = vlaneseq
      %v1461 = vshrl.u32 %v1460, 7
      %v1462 = vsub.s32 %v1430, %v1461
      %v1463 = vrot.slane %v1385, %v1462
      %v1464 = vlaneseq
      %v1465 = vshrl.u32 %v1464, 7
      %v1466 = vsub.s32 %v1435, %v1465
      %v1467 = vrot.slane %v1388, %v1466
      %v1468 = vsel %vm1440, %v1467, %v1463
      %v1469 = vlaneseq
      %v1470 = vshrl.u32 %v1469, 7
      %v1471 = vsub.s32 %v1430, %v1470
      %v1472 = vrot.slane %v1391, %v1471
      %v1473 = vlaneseq
      %v1474 = vshrl.u32 %v1473, 7
      %v1475 = vsub.s32 %v1435, %v1474
      %v1476 = vrot.slane %v1394, %v1475
      %v1477 = vsel %vm1440, %v1476, %v1472
      %v1478 = vlaneseq
      %v1479 = vshrl.u32 %v1478, 7
      %v1480 = vsub.s32 %v1430, %v1479
      %v1481 = vrot.slane %v1397, %v1480
      %v1482 = vlaneseq
      %v1483 = vshrl.u32 %v1482, 7
      %v1484 = vsub.s32 %v1435, %v1483
      %v1485 = vrot.slane %v1400, %v1484
      %v1486 = vsel %vm1440, %v1485, %v1481
      %v1487 = vlaneseq
      %v1488 = vshrl.u32 %v1487, 7
      %v1489 = vsub.s32 %v1430, %v1488
      %v1490 = vrot.slane %v1403, %v1489
      %v1491 = vlaneseq
      %v1492 = vshrl.u32 %v1491, 7
      %v1493 = vsub.s32 %v1435, %v1492
      %v1494 = vrot.slane %v1406, %v1493
      %v1495 = vsel %vm1440, %v1494, %v1490
      %v1496 = vlaneseq
      %v1497 = vshrl.u32 %v1496, 7
      %v1498 = vsub.s32 %v1430, %v1497
      %v1499 = vrot.slane %v1409, %v1498
      %v1500 = vlaneseq
      %v1501 = vshrl.u32 %v1500, 7
      %v1502 = vsub.s32 %v1435, %v1501
      %v1503 = vrot.slane %v1412, %v1502
      %v1504 = vsel %vm1440, %v1503, %v1499
      %vm1505 = vcmask 1041409
      %v1506 = vsel %vm1505, %v1450, %v1441
      %vm1507 = vcmask 1042434
      %v1508 = vsel %vm1507, %v1459, %v1506
      %vm1509 = vcmask 1043459
      %v1510 = vsel %vm1509, %v1468, %v1508
      %vm1511 = vcmask 1044484
      %v1512 = vsel %vm1511, %v1477, %v1510
      %vm1513 = vcmask 1045509
      %v1514 = vsel %vm1513, %v1486, %v1512
      %vm1515 = vcmask 1046534
      %v1516 = vsel %vm1515, %v1495, %v1514
      %vm1517 = vcmask 1047559
      %v1518 = vsel %vm1517, %v1504, %v1516
      %vm1520 = vcmask 130048
      %v1521 = vsel %vm1520, %v1518, -inf
      %1522 = vmax.xlane.f32.xlu0 %v1521
      %v1523 = vpop.xlane.xlu0 %1522
      %v1525 = vlaneseq
      %v1526 = vshrl.u32 %v1525, 7
      %v1527 = vsub.s32 0, %v1526
      %v1528 = vrot.slane %v1523, %v1527
      %v1529 = vlaneseq
      %v1530 = vshrl.u32 %v1529, 7
      %v1531 = vsub.s32 1, %v1530
      %v1532 = vrot.slane %v1523, %v1531
      %v1533 = vlaneseq
      %v1534 = vshrl.u32 %v1533, 7
      %v1535 = vsub.s32 2, %v1534
      %v1536 = vrot.slane %v1523, %v1535
      %v1537 = vlaneseq
      %v1538 = vshrl.u32 %v1537, 7
      %v1539 = vsub.s32 3, %v1538
      %v1540 = vrot.slane %v1523, %v1539
      %v1541 = vlaneseq
      %v1542 = vshrl.u32 %v1541, 7
      %v1543 = vsub.s32 4, %v1542
      %v1544 = vrot.slane %v1523, %v1543
      %v1545 = vlaneseq
      %v1546 = vshrl.u32 %v1545, 7
      %v1547 = vsub.s32 5, %v1546
      %v1548 = vrot.slane %v1523, %v1547
      %v1549 = vlaneseq
      %v1550 = vshrl.u32 %v1549, 7
      %v1551 = vsub.s32 6, %v1550
      %v1552 = vrot.slane %v1523, %v1551
      %v1553 = vlaneseq
      %v1554 = vshrl.u32 %v1553, 7
      %v1555 = vsub.s32 7, %v1554
      %v1556 = vrot.slane %v1523, %v1555
      %v1565 = vsub.f32 %v1367, %v1528
      %v1566 = vsub.f32 %v1370, %v1528
      %v1567 = vsub.f32 %v1373, %v1532
      %v1568 = vsub.f32 %v1376, %v1532
      %v1569 = vsub.f32 %v1379, %v1536
      %v1570 = vsub.f32 %v1382, %v1536
      %v1571 = vsub.f32 %v1385, %v1540
      %v1572 = vsub.f32 %v1388, %v1540
      %v1573 = vsub.f32 %v1391, %v1544
      %v1574 = vsub.f32 %v1394, %v1544
      %v1575 = vsub.f32 %v1397, %v1548
      %v1576 = vsub.f32 %v1400, %v1548
      %v1577 = vsub.f32 %v1403, %v1552
      %v1578 = vsub.f32 %v1406, %v1552
      %v1579 = vsub.f32 %v1409, %v1556
      %v1580 = vsub.f32 %v1412, %v1556
      %v1581 = vmul.f32 %v1565, 1.442695
      %v1582 = vpow.pop %v1581
      %v1583 = vmul.f32 %v1566, 1.442695
      %v1584 = vpow.pop %v1583
      %v1585 = vmul.f32 %v1567, 1.442695
      %v1586 = vpow.pop %v1585
      %v1587 = vmul.f32 %v1568, 1.442695
      %v1588 = vpow.pop %v1587
      %v1589 = vmul.f32 %v1569, 1.442695
      %v1590 = vpow.pop %v1589
      %v1591 = vmul.f32 %v1570, 1.442695
      %v1592 = vpow.pop %v1591
      %v1593 = vmul.f32 %v1571, 1.442695
      %v1594 = vpow.pop %v1593
      %v1595 = vmul.f32 %v1572, 1.442695
      %v1596 = vpow.pop %v1595
      %v1597 = vmul.f32 %v1573, 1.442695
      %v1598 = vpow.pop %v1597
      %v1599 = vmul.f32 %v1574, 1.442695
      %v1600 = vpow.pop %v1599
      %v1601 = vmul.f32 %v1575, 1.442695
      %v1602 = vpow.pop %v1601
      %v1603 = vmul.f32 %v1576, 1.442695
      %v1604 = vpow.pop %v1603
      %v1605 = vmul.f32 %v1577, 1.442695
      %v1606 = vpow.pop %v1605
      %v1607 = vmul.f32 %v1578, 1.442695
      %v1608 = vpow.pop %v1607
      %v1609 = vmul.f32 %v1579, 1.442695
      %v1610 = vpow.pop %v1609
      %v1611 = vmul.f32 %v1580, 1.442695
      %v1612 = vpow.pop %v1611
      %1629 = vset.pattern.permute.xlu0 0
      %1630 = vperm.xlu0 %1629, %v1582
      %v1631 = vpop.permute.xlu0 %1630
      %1632 = vset.pattern.permute.xlu0 0
      %1633 = vperm.xlu0 %1632, %v1584
      %v1634 = vpop.permute.xlu0 %1633
      %1635 = vset.pattern.permute.xlu0 0
      %1636 = vperm.xlu0 %1635, %v1586
      %v1637 = vpop.permute.xlu0 %1636
      %1638 = vset.pattern.permute.xlu0 0
      %1639 = vperm.xlu0 %1638, %v1588
      %v1640 = vpop.permute.xlu0 %1639
      %1641 = vset.pattern.permute.xlu0 0
      %1642 = vperm.xlu0 %1641, %v1590
      %v1643 = vpop.permute.xlu0 %1642
      %1644 = vset.pattern.permute.xlu0 0
      %1645 = vperm.xlu0 %1644, %v1592
      %v1646 = vpop.permute.xlu0 %1645
      %1647 = vset.pattern.permute.xlu0 0
      %1648 = vperm.xlu0 %1647, %v1594
      %v1649 = vpop.permute.xlu0 %1648
      %1650 = vset.pattern.permute.xlu0 0
      %1651 = vperm.xlu0 %1650, %v1596
      %v1652 = vpop.permute.xlu0 %1651
      %1653 = vset.pattern.permute.xlu0 0
      %1654 = vperm.xlu0 %1653, %v1598
      %v1655 = vpop.permute.xlu0 %1654
      %1656 = vset.pattern.permute.xlu0 0
      %1657 = vperm.xlu0 %1656, %v1600
      %v1658 = vpop.permute.xlu0 %1657
      %1659 = vset.pattern.permute.xlu0 0
      %1660 = vperm.xlu0 %1659, %v1602
      %v1661 = vpop.permute.xlu0 %1660
      %1662 = vset.pattern.permute.xlu0 0
      %1663 = vperm.xlu0 %1662, %v1604
      %v1664 = vpop.permute.xlu0 %1663
      %1665 = vset.pattern.permute.xlu0 0
      %1666 = vperm.xlu0 %1665, %v1606
      %v1667 = vpop.permute.xlu0 %1666
      %1668 = vset.pattern.permute.xlu0 0
      %1669 = vperm.xlu0 %1668, %v1608
      %v1670 = vpop.permute.xlu0 %1669
      %1671 = vset.pattern.permute.xlu0 0
      %1672 = vperm.xlu0 %1671, %v1610
      %v1673 = vpop.permute.xlu0 %1672
      %1674 = vset.pattern.permute.xlu0 0
      %1675 = vperm.xlu0 %1674, %v1612
      %v1676 = vpop.permute.xlu0 %1675
      %v1677 = vlaneseq
      %v1678 = vshrl.u32 %v1677, 7
      %v1679 = vsub.s32 %v1430, %v1678
      %v1680 = vrot.slane %v1631, %v1679
      %v1681 = vlaneseq
      %v1682 = vshrl.u32 %v1681, 7
      %v1683 = vsub.s32 %v1435, %v1682
      %v1684 = vrot.slane %v1634, %v1683
      %v1685 = vsel %vm1440, %v1684, %v1680
      %v1686 = vlaneseq
      %v1687 = vshrl.u32 %v1686, 7
      %v1688 = vsub.s32 %v1430, %v1687
      %v1689 = vrot.slane %v1637, %v1688
      %v1690 = vlaneseq
      %v1691 = vshrl.u32 %v1690, 7
      %v1692 = vsub.s32 %v1435, %v1691
      %v1693 = vrot.slane %v1640, %v1692
      %v1694 = vsel %vm1440, %v1693, %v1689
      %v1695 = vlaneseq
      %v1696 = vshrl.u32 %v1695, 7
      %v1697 = vsub.s32 %v1430, %v1696
      %v1698 = vrot.slane %v1643, %v1697
      %v1699 = vlaneseq
      %v1700 = vshrl.u32 %v1699, 7
      %v1701 = vsub.s32 %v1435, %v1700
      %v1702 = vrot.slane %v1646, %v1701
      %v1703 = vsel %vm1440, %v1702, %v1698
      %v1704 = vlaneseq
      %v1705 = vshrl.u32 %v1704, 7
      %v1706 = vsub.s32 %v1430, %v1705
      %v1707 = vrot.slane %v1649, %v1706
      %v1708 = vlaneseq
      %v1709 = vshrl.u32 %v1708, 7
      %v1710 = vsub.s32 %v1435, %v1709
      %v1711 = vrot.slane %v1652, %v1710
      %v1712 = vsel %vm1440, %v1711, %v1707
      %v1713 = vlaneseq
      %v1714 = vshrl.u32 %v1713, 7
      %v1715 = vsub.s32 %v1430, %v1714
      %v1716 = vrot.slane %v1655, %v1715
      %v1717 = vlaneseq
      %v1718 = vshrl.u32 %v1717, 7
      %v1719 = vsub.s32 %v1435, %v1718
      %v1720 = vrot.slane %v1658, %v1719
      %v1721 = vsel %vm1440, %v1720, %v1716
      %v1722 = vlaneseq
      %v1723 = vshrl.u32 %v1722, 7
      %v1724 = vsub.s32 %v1430, %v1723
      %v1725 = vrot.slane %v1661, %v1724
      %v1726 = vlaneseq
      %v1727 = vshrl.u32 %v1726, 7
      %v1728 = vsub.s32 %v1435, %v1727
      %v1729 = vrot.slane %v1664, %v1728
      %v1730 = vsel %vm1440, %v1729, %v1725
      %v1731 = vlaneseq
      %v1732 = vshrl.u32 %v1731, 7
      %v1733 = vsub.s32 %v1430, %v1732
      %v1734 = vrot.slane %v1667, %v1733
      %v1735 = vlaneseq
      %v1736 = vshrl.u32 %v1735, 7
      %v1737 = vsub.s32 %v1435, %v1736
      %v1738 = vrot.slane %v1670, %v1737
      %v1739 = vsel %vm1440, %v1738, %v1734
      %v1740 = vlaneseq
      %v1741 = vshrl.u32 %v1740, 7
      %v1742 = vsub.s32 %v1430, %v1741
      %v1743 = vrot.slane %v1673, %v1742
      %v1744 = vlaneseq
      %v1745 = vshrl.u32 %v1744, 7
      %v1746 = vsub.s32 %v1435, %v1745
      %v1747 = vrot.slane %v1676, %v1746
      %v1748 = vsel %vm1440, %v1747, %v1743
      %v1749 = vsel %vm1505, %v1694, %v1685
      %v1750 = vsel %vm1507, %v1703, %v1749
      %v1751 = vsel %vm1509, %v1712, %v1750
      %v1752 = vsel %vm1511, %v1721, %v1751
      %v1753 = vsel %vm1513, %v1730, %v1752
      %v1754 = vsel %vm1515, %v1739, %v1753
      %v1755 = vsel %vm1517, %v1748, %v1754
      %v1757 = vsel %vm1520, %v1755, 0.0
      %1758 = vadd.xlane.f32.xlu0 %v1757
      %v1759 = vpop.xlane.xlu0 %1758
      %v1760 = vrcp.pop %v1759
      %v1762 = vlaneseq
      %v1763 = vshrl.u32 %v1762, 7
      %v1764 = vsub.s32 0, %v1763
      %v1765 = vrot.slane %v1760, %v1764
      %v1766 = vlaneseq
      %v1767 = vshrl.u32 %v1766, 7
      %v1768 = vsub.s32 1, %v1767
      %v1769 = vrot.slane %v1760, %v1768
      %v1770 = vlaneseq
      %v1771 = vshrl.u32 %v1770, 7
      %v1772 = vsub.s32 2, %v1771
      %v1773 = vrot.slane %v1760, %v1772
      %v1774 = vlaneseq
      %v1775 = vshrl.u32 %v1774, 7
      %v1776 = vsub.s32 3, %v1775
      %v1777 = vrot.slane %v1760, %v1776
      %v1778 = vlaneseq
      %v1779 = vshrl.u32 %v1778, 7
      %v1780 = vsub.s32 4, %v1779
      %v1781 = vrot.slane %v1760, %v1780
      %v1782 = vlaneseq
      %v1783 = vshrl.u32 %v1782, 7
      %v1784 = vsub.s32 5, %v1783
      %v1785 = vrot.slane %v1760, %v1784
      %v1786 = vlaneseq
      %v1787 = vshrl.u32 %v1786, 7
      %v1788 = vsub.s32 6, %v1787
      %v1789 = vrot.slane %v1760, %v1788
      %v1790 = vlaneseq
      %v1791 = vshrl.u32 %v1790, 7
      %v1792 = vsub.s32 7, %v1791
      %v1793 = vrot.slane %v1760, %v1792
      %v1802 = vmul.f32 %v1582, %v1765
      %v1803 = vmul.f32 %v1584, %v1765
      %v1804 = vmul.f32 %v1586, %v1769
      %v1805 = vmul.f32 %v1588, %v1769
      %v1806 = vmul.f32 %v1590, %v1773
      %v1807 = vmul.f32 %v1592, %v1773
      %v1808 = vmul.f32 %v1594, %v1777
      %v1809 = vmul.f32 %v1596, %v1777
      %v1810 = vmul.f32 %v1598, %v1781
      %v1811 = vmul.f32 %v1600, %v1781
      %v1812 = vmul.f32 %v1602, %v1785
      %v1813 = vmul.f32 %v1604, %v1785
      %v1814 = vmul.f32 %v1606, %v1789
      %v1815 = vmul.f32 %v1608, %v1789
      %v1816 = vmul.f32 %v1610, %v1793
      %v1817 = vmul.f32 %v1612, %v1793
      %v1818 = vld [vmem:[#allocation3] sm:$0xff]
      %v1819 = vld [vmem:[#allocation3 + $0x8] sm:$0xff]
      %v1820 = vld [vmem:[#allocation3 + $0x10] sm:$0xff]
      %v1821 = vld [vmem:[#allocation3 + $0x18] sm:$0xff]
      %v1822 = vld [vmem:[#allocation3 + $0x20] sm:$0xff]
      %v1823 = vld [vmem:[#allocation3 + $0x28] sm:$0xff]
      %v1824 = vld [vmem:[#allocation3 + $0x30] sm:$0xff]
      %v1825 = vld [vmem:[#allocation3 + $0x38] sm:$0xff]
      %v1826 = vld [vmem:[#allocation3 + $0x40] sm:$0xff]
      %v1827 = vld [vmem:[#allocation3 + $0x48] sm:$0xff]
      %v1828 = vld [vmem:[#allocation3 + $0x50] sm:$0xff]
      %v1829 = vld [vmem:[#allocation3 + $0x58] sm:$0xff]
      %v1830 = vld [vmem:[#allocation3 + $0x60] sm:$0xff]
      %v1831 = vld [vmem:[#allocation3 + $0x68] sm:$0xff]
      %v1832 = vld [vmem:[#allocation3 + $0x70] sm:$0xff]
      %v1833 = vld [vmem:[#allocation3 + $0x78] sm:$0xff]
      %1835 = vset.pattern.permute.xlu0 0
      %1836 = vperm.xlu0 %1835, %v1802
      %v1837 = vpop.permute.xlu0 %1836
      %1840 = vset.pattern.permute.xlu0 0
      %1841 = vperm.xlu0 %1840, %v1803
      %v1842 = vpop.permute.xlu0 %1841
      %1845 = vset.pattern.permute.xlu0 0
      %1846 = vperm.xlu0 %1845, %v1804
      %v1847 = vpop.permute.xlu0 %1846
      %1850 = vset.pattern.permute.xlu0 0
      %1851 = vperm.xlu0 %1850, %v1805
      %v1852 = vpop.permute.xlu0 %1851
      %1855 = vset.pattern.permute.xlu0 0
      %1856 = vperm.xlu0 %1855, %v1806
      %v1857 = vpop.permute.xlu0 %1856
      %1860 = vset.pattern.permute.xlu0 0
      %1861 = vperm.xlu0 %1860, %v1807
      %v1862 = vpop.permute.xlu0 %1861
      %1865 = vset.pattern.permute.xlu0 0
      %1866 = vperm.xlu0 %1865, %v1808
      %v1867 = vpop.permute.xlu0 %1866
      %1870 = vset.pattern.permute.xlu0 0
      %1871 = vperm.xlu0 %1870, %v1809
      %v1872 = vpop.permute.xlu0 %1871
      %1875 = vset.pattern.permute.xlu0 0
      %1876 = vperm.xlu0 %1875, %v1810
      %v1877 = vpop.permute.xlu0 %1876
      %1880 = vset.pattern.permute.xlu0 0
      %1881 = vperm.xlu0 %1880, %v1811
      %v1882 = vpop.permute.xlu0 %1881
      %1885 = vset.pattern.permute.xlu0 0
      %1886 = vperm.xlu0 %1885, %v1812
      %v1887 = vpop.permute.xlu0 %1886
      %1890 = vset.pattern.permute.xlu0 0
      %1891 = vperm.xlu0 %1890, %v1813
      %v1892 = vpop.permute.xlu0 %1891
      %1895 = vset.pattern.permute.xlu0 0
      %1896 = vperm.xlu0 %1895, %v1814
      %v1897 = vpop.permute.xlu0 %1896
      %1900 = vset.pattern.permute.xlu0 0
      %1901 = vperm.xlu0 %1900, %v1815
      %v1902 = vpop.permute.xlu0 %1901
      %1905 = vset.pattern.permute.xlu0 0
      %1906 = vperm.xlu0 %1905, %v1816
      %v1907 = vpop.permute.xlu0 %1906
      %1910 = vset.pattern.permute.xlu0 0
      %1911 = vperm.xlu0 %1910, %v1817
      %v1912 = vpop.permute.xlu0 %1911
      %v1914 = vmul.f32 %v1837, %v1818
      %v1915 = vmul.f32 %v1842, %v1819
      %v1916 = vmul.f32 %v1847, %v1820
      %v1917 = vmul.f32 %v1852, %v1821
      %v1918 = vmul.f32 %v1857, %v1822
      %v1919 = vmul.f32 %v1862, %v1823
      %v1920 = vmul.f32 %v1867, %v1824
      %v1921 = vmul.f32 %v1872, %v1825
      %v1922 = vmul.f32 %v1877, %v1826
      %v1923 = vmul.f32 %v1882, %v1827
      %v1924 = vmul.f32 %v1887, %v1828
      %v1925 = vmul.f32 %v1892, %v1829
      %v1926 = vmul.f32 %v1897, %v1830
      %v1927 = vmul.f32 %v1902, %v1831
      %v1928 = vmul.f32 %v1907, %v1832
      %v1929 = vmul.f32 %v1912, %v1833
      %v1930 = vsel %vm1110, %v1914, 0.0
      %v1931 = vsel %vm1110, %v1915, 0.0
      %v1932 = vadd.f32 %v1930, %v1931
      %v1933 = vrot.slane %v1932, 4
      %v1934 = vadd.f32 %v1932, %v1933
      %v1935 = vrot.slane %v1934, 2
      %v1936 = vadd.f32 %v1934, %v1935
      %v1937 = vrot.slane %v1936, 1
      %v1938 = vadd.f32 %v1936, %v1937
      %v1939 = vsel %vm1110, %v1916, 0.0
      %v1940 = vsel %vm1110, %v1917, 0.0
      %v1941 = vadd.f32 %v1939, %v1940
      %v1942 = vrot.slane %v1941, 4
      %v1943 = vadd.f32 %v1941, %v1942
      %v1944 = vrot.slane %v1943, 2
      %v1945 = vadd.f32 %v1943, %v1944
      %v1946 = vrot.slane %v1945, 1
      %v1947 = vadd.f32 %v1945, %v1946
      %v1948 = vsel %vm1110, %v1918, 0.0
      %v1949 = vsel %vm1110, %v1919, 0.0
      %v1950 = vadd.f32 %v1948, %v1949
      %v1951 = vrot.slane %v1950, 4
      %v1952 = vadd.f32 %v1950, %v1951
      %v1953 = vrot.slane %v1952, 2
      %v1954 = vadd.f32 %v1952, %v1953
      %v1955 = vrot.slane %v1954, 1
      %v1956 = vadd.f32 %v1954, %v1955
      %v1957 = vsel %vm1110, %v1920, 0.0
      %v1958 = vsel %vm1110, %v1921, 0.0
      %v1959 = vadd.f32 %v1957, %v1958
      %v1960 = vrot.slane %v1959, 4
      %v1961 = vadd.f32 %v1959, %v1960
      %v1962 = vrot.slane %v1961, 2
      %v1963 = vadd.f32 %v1961, %v1962
      %v1964 = vrot.slane %v1963, 1
      %v1965 = vadd.f32 %v1963, %v1964
      %v1966 = vsel %vm1110, %v1922, 0.0
      %v1967 = vsel %vm1110, %v1923, 0.0
      %v1968 = vadd.f32 %v1966, %v1967
      %v1969 = vrot.slane %v1968, 4
      %v1970 = vadd.f32 %v1968, %v1969
      %v1971 = vrot.slane %v1970, 2
      %v1972 = vadd.f32 %v1970, %v1971
      %v1973 = vrot.slane %v1972, 1
      %v1974 = vadd.f32 %v1972, %v1973
      %v1975 = vsel %vm1110, %v1924, 0.0
      %v1976 = vsel %vm1110, %v1925, 0.0
      %v1977 = vadd.f32 %v1975, %v1976
      %v1978 = vrot.slane %v1977, 4
      %v1979 = vadd.f32 %v1977, %v1978
      %v1980 = vrot.slane %v1979, 2
      %v1981 = vadd.f32 %v1979, %v1980
      %v1982 = vrot.slane %v1981, 1
      %v1983 = vadd.f32 %v1981, %v1982
      %v1984 = vsel %vm1110, %v1926, 0.0
      %v1985 = vsel %vm1110, %v1927, 0.0
      %v1986 = vadd.f32 %v1984, %v1985
      %v1987 = vrot.slane %v1986, 4
      %v1988 = vadd.f32 %v1986, %v1987
      %v1989 = vrot.slane %v1988, 2
      %v1990 = vadd.f32 %v1988, %v1989
      %v1991 = vrot.slane %v1990, 1
      %v1992 = vadd.f32 %v1990, %v1991
      %v1993 = vsel %vm1110, %v1928, 0.0
      %v1994 = vsel %vm1110, %v1929, 0.0
      %v1995 = vadd.f32 %v1993, %v1994
      %v1996 = vrot.slane %v1995, 4
      %v1997 = vadd.f32 %v1995, %v1996
      %v1998 = vrot.slane %v1997, 2
      %v1999 = vadd.f32 %v1997, %v1998
      %v2000 = vrot.slane %v1999, 1
      %v2001 = vadd.f32 %v1999, %v2000
      %v2010 = vsel %vm1505, %v1947, %v1938
      %v2011 = vsel %vm1507, %v1956, %v2010
      %v2012 = vsel %vm1509, %v1965, %v2011
      %v2013 = vsel %vm1511, %v1974, %v2012
      %v2014 = vsel %vm1513, %v1983, %v2013
      %v2015 = vsel %vm1515, %v1992, %v2014
      %v2016 = vsel %vm1517, %v2001, %v2015
      %2017 = vrot.lane.b32.xlu0 %v2016, 32
      %v2018 = vpop.permute.xlu0 %2017
      %v2020 = vsel %vm1110, %v1126, %v2018
      %v2021 = vld [vmem:[%s12] sm:$0xff]
      %v2022 = vld [vmem:[%s12 + $0x8] sm:$0xff]
      %v2023 = vld [vmem:[%s12 + $0x10] sm:$0xff]
      %v2024 = vld [vmem:[%s12 + $0x18] sm:$0xff]
      %v2025 = vld [vmem:[%s12 + $0x20] sm:$0xff]
      %v2026 = vld [vmem:[%s12 + $0x28] sm:$0xff]
      %v2027 = vld [vmem:[%s12 + $0x30] sm:$0xff]
      %v2028 = vld [vmem:[%s12 + $0x38] sm:$0xff]
      %v2029 = vld [vmem:[%s13] sm:$0xff]
      %v2030 = vld [vmem:[%s13 + $0x8] sm:$0xff]
      %v2031 = vld [vmem:[%s13 + $0x10] sm:$0xff]
      %v2032 = vld [vmem:[%s13 + $0x18] sm:$0xff]
      %2033 = vmatprep.subr.mxu0 0.0
      %2034 = vmatpush1.msra.mxu0 0.0
      %2035 = vmatprep.subr.mxu0 0.0
      %2036 = vmatpush1.msra.mxu0 0.0
      %2037 = vmatprep.subr.mxu0 0.0
      %2038 = vmatpush1.msra.mxu0 0.0
      %2039 = vmatprep.subr.mxu0 0.0
      %2040 = vmatpush1.msra.mxu0 0.0
      %2041 = vmatprep.subr.mxu0 0.0
      %2042 = vmatpush1.msra.mxu0 0.0
      %2043 = vmatprep.subr.mxu0 0.0
      %2044 = vmatpush1.msra.mxu0 0.0
      %2045 = vmatprep.subr.mxu0 0.0
      %2046 = vmatpush1.msra.mxu0 0.0
      %2047 = vmatprep.subr.mxu0 0.0
      %2048 = vmatpush1.msra.mxu0 0.0
      %2049 = vmatprep.subr.mxu0 0.0
      %2050 = vmatpush1.msra.mxu0 0.0
      %2051 = vmatprep.subr.mxu0 0.0
      %2052 = vmatpush1.msra.mxu0 0.0
      %2053 = vmatprep.subr.mxu0 0.0
      %2054 = vmatpush1.msra.mxu0 0.0
      %2055 = vmatprep.subr.mxu0 0.0
      %2056 = vmatpush1.msra.mxu0 0.0
      %2057 = vmatprep.subr.mxu0 0.0
      %2058 = vmatpush1.msra.mxu0 %v2032
      %2059 = vmatprep.subr.mxu0 0.0
      %2060 = vmatpush1.msra.mxu0 %v2031
      %2061 = vmatprep.subr.mxu0 0.0
      %2062 = vmatpush1.msra.mxu0 %v2030
      %2063 = vmatprep.subr.mxu0 0.0
      %2064 = vmatpush1.msra.mxu0 %v2029
      %2065 = vmatprep.subr.mxu0 0.0
      %2066 = vmatpush2.msra.mxu0 0.0
      %2067 = vmatprep.subr.mxu0 0.0
      %2068 = vmatpush2.msra.mxu0 0.0
      %2069 = vmatprep.subr.mxu0 0.0
      %2070 = vmatpush2.msra.mxu0 0.0
      %2071 = vmatprep.subr.mxu0 0.0
      %2072 = vmatpush2.msra.mxu0 0.0
      %2073 = vmatprep.subr.mxu0 0.0
      %2074 = vmatpush2.msra.mxu0 0.0
      %2075 = vmatprep.subr.mxu0 0.0
      %2076 = vmatpush2.msra.mxu0 0.0
      %2077 = vmatprep.subr.mxu0 0.0
      %2078 = vmatpush2.msra.mxu0 0.0
      %2079 = vmatprep.subr.mxu0 0.0
      %2080 = vmatpush2.msra.mxu0 0.0
      %2081 = vmatprep.subr.mxu0 0.0
      %2082 = vmatpush2.msra.mxu0 0.0
      %2083 = vmatprep.subr.mxu0 0.0
      %2084 = vmatpush2.msra.mxu0 0.0
      %2085 = vmatprep.subr.mxu0 0.0
      %2086 = vmatpush2.msra.mxu0 0.0
      %2087 = vmatprep.subr.mxu0 0.0
      %2088 = vmatpush2.msra.mxu0 0.0
      %2089 = vmatprep.subr.mxu0 0.0
      %2090 = vmatpush2.msra.mxu0 0.0
      %2091 = vmatprep.subr.mxu0 0.0
      %2092 = vmatpush2.msra.mxu0 0.0
      %2093 = vmatprep.subr.mxu0 0.0
      %2094 = vmatpush2.msra.mxu0 0.0
      %2095 = vmatprep.subr.mxu0 0.0
      %2096 = vmatpush2.msra.mxu0 0.0
      %2097 = vmatprep.mubr.f32.mxu0 0.0
      %2098 = vmatmul.mubr.f32.gmra.mxu0 %v1132
      %v2099 = vpop.f32.mrf.mxu0
      %v2100 = vadd.f32 0.0, %v2099
      %v2101 = vpop.f32.mrf.mxu0
      %2102 = vdwg.mxu0
      %vm2103 = vcmask 523264
      %v2105 = vsel %vm2103, %v2020, 0
      %2107 = vmatprep.subr.mxu0 0.0
      %2108 = vmatpush1.msra.mxu0 0.0
      %2109 = vmatprep.subr.mxu0 0.0
      %2110 = vmatpush1.msra.mxu0 0.0
      %2111 = vmatprep.subr.mxu0 0.0
      %2112 = vmatpush1.msra.mxu0 0.0
      %2113 = vmatprep.subr.mxu0 0.0
      %2114 = vmatpush1.msra.mxu0 0.0
      %2115 = vmatprep.subr.mxu0 0.0
      %2116 = vmatpush1.msra.mxu0 0.0
      %2117 = vmatprep.subr.mxu0 0.0
      %2118 = vmatpush1.msra.mxu0 0.0
      %2119 = vmatprep.subr.mxu0 0.0
      %2120 = vmatpush1.msra.mxu0 0.0
      %2121 = vmatprep.subr.mxu0 0.0
      %2122 = vmatpush1.msra.mxu0 0.0
      %2123 = vmatprep.subr.mxu0 0.0
      %2124 = vmatpush1.msra.mxu0 %v2028
      %2125 = vmatprep.subr.mxu0 0.0
      %2126 = vmatpush1.msra.mxu0 %v2027
      %2127 = vmatprep.subr.mxu0 0.0
      %2128 = vmatpush1.msra.mxu0 %v2026
      %2129 = vmatprep.subr.mxu0 0.0
      %2130 = vmatpush1.msra.mxu0 %v2025
      %2131 = vmatprep.subr.mxu0 0.0
      %2132 = vmatpush1.msra.mxu0 %v2024
      %2133 = vmatprep.subr.mxu0 0.0
      %2134 = vmatpush1.msra.mxu0 %v2023
      %2135 = vmatprep.subr.mxu0 0.0
      %2136 = vmatpush1.msra.mxu0 %v2022
      %2137 = vmatprep.subr.mxu0 0.0
      %2138 = vmatpush1.msra.mxu0 %v2021
      %2139 = vmatprep.subr.mxu0 0.0
      %2140 = vmatpush2.msra.mxu0 0.0
      %2141 = vmatprep.subr.mxu0 0.0
      %2142 = vmatpush2.msra.mxu0 0.0
      %2143 = vmatprep.subr.mxu0 0.0
      %2144 = vmatpush2.msra.mxu0 0.0
      %2145 = vmatprep.subr.mxu0 0.0
      %2146 = vmatpush2.msra.mxu0 0.0
      %2147 = vmatprep.subr.mxu0 0.0
      %2148 = vmatpush2.msra.mxu0 0.0
      %2149 = vmatprep.subr.mxu0 0.0
      %2150 = vmatpush2.msra.mxu0 0.0
      %2151 = vmatprep.subr.mxu0 0.0
      %2152 = vmatpush2.msra.mxu0 0.0
      %2153 = vmatprep.subr.mxu0 0.0
      %2154 = vmatpush2.msra.mxu0 0.0
      %2155 = vmatprep.subr.mxu0 0.0
      %2156 = vmatpush2.msra.mxu0 0.0
      %2157 = vmatprep.subr.mxu0 0.0
      %2158 = vmatpush2.msra.mxu0 0.0
      %2159 = vmatprep.subr.mxu0 0.0
      %2160 = vmatpush2.msra.mxu0 0.0
      %2161 = vmatprep.subr.mxu0 0.0
      %2162 = vmatpush2.msra.mxu0 0.0
      %2163 = vmatprep.subr.mxu0 0.0
      %2164 = vmatpush2.msra.mxu0 0.0
      %2165 = vmatprep.subr.mxu0 0.0
      %2166 = vmatpush2.msra.mxu0 0.0
      %2167 = vmatprep.subr.mxu0 0.0
      %2168 = vmatpush2.msra.mxu0 0.0
      %2169 = vmatprep.subr.mxu0 0.0
      %2170 = vmatpush2.msra.mxu0 0.0
      %2171 = vmatprep.mubr.f32.mxu0 0.0
      %2172 = vmatmul.mubr.f32.gmra.mxu0 %v2105
      %v2173 = vpop.f32.mrf.mxu0
      %v2174 = vadd.f32 %v2100, %v2173
      %v2175 = vpop.f32.mrf.mxu0
      %2176 = vdwg.mxu0
      %v2177 = vld [vmem:[%s14] sm:$0x1]
      %v2179 = vlaneseq
      %v2180 = vshrl.u32 %v2179, 7
      %v2181 = vsub.s32 0, %v2180
      %v2182 = vrot.slane %v2177, %v2181
      %v2184 = vadd.f32 %v2174, %v2182
      %v2185 = vxor.u32 %v2184, 2147483648
      %v2186 = vmul.f32 %v2185, 1.442695
      %v2187 = vpow.pop %v2186
      %v2188 = vadd.f32 %v2187, 1.0
      %v2189 = vrcp.pop %v2188
      %v2190 = vmul.f32 1.0, %v2189
      %v2191 = vtanh.pop %v2184
      %2193 = vrot.lane.b32.xlu0 %v1095, 32
      %v2194 = vpop.permute.xlu0 %2193
      %v2196 = vmul.f32 %v2190, %v2194
      %2198 = vrot.lane.b32.xlu0 %v2191, 64
      %v2199 = vpop.permute.xlu0 %2198
      %v2201 = vmul.f32 %v2190, %v2199
      %2203 = vrot.lane.b32.xlu0 %v2201, 32
      %v2204 = vpop.permute.xlu0 %2203
      %v2206 = vadd.f32 %v2196, %v2204
      %v2207 = vtanh.pop %v2206
      %2209 = vrot.lane.b32.xlu0 %v2207, 64
      %v2210 = vpop.permute.xlu0 %2209
      %v2212 = vmul.f32 %v2190, %v2210
      // Predicated region
      $region89: #{forward.1} parent=83 // pred_check
        %p2213 = pneg %p1087
      $region90: #{forward.1} parent=83 // pred_check_branch
        %2215 = sbr.rel (%p2213) target = $region92
      $region91: #{forward.1} parent=83 // pred_region
        %2217 = vrot.lane.b32.xlu0 %v2212, 32
        %v2218 = vpop.permute.xlu0 %2217
        %2220 = vst.msk [vmem:[#allocation5] sm:$0xff] %vm1110, %v2218
        %2222 = vrot.lane.b32.xlu0 %v2206, 96
        %v2223 = vpop.permute.xlu0 %2222
        %2225 = vst.msk [vmem:[#allocation6] sm:$0xff] %vm1110, %v2223
        %v2226 = vld [vmem:[#allocation7] sm:$0xff]
        %v2227 = vadd.f32 %v2226, %v1092
        %2228 = vst.msk [vmem:[#allocation7] sm:$0xff] %vm1110, %v2227
        %s2229 = scalar_lea.vmem [#allocation8], %s1088
        %2230 = vst.msk [vmem:[%s2229] sm:$0xff] %vm1110, %v2218
      $region92: #{forward.1} parent=83 // pred_fallthru
        _
      %p2231 = scmp.eq.s32.totalorder %s34, 9
      // Predicated region
      $region93: #{forward.1} parent=83 // pred_check
        %p2232 = pneg %p2231
      $region94: #{forward.1} parent=83 // pred_check_branch
        %2234 = sbr.rel (%p2232) target = $region96
      $region95: #{forward.1} parent=83 // pred_region
        %v2235 = vld [vmem:[#allocation8] sm:$0xff]
        %v2236 = vld [vmem:[#allocation8 + $0x8] sm:$0xff]
        %v2237 = vld [vmem:[#allocation8 + $0x10] sm:$0xff]
        %v2238 = vld [vmem:[#allocation8 + $0x18] sm:$0xff]
        %v2239 = vld [vmem:[#allocation8 + $0x20] sm:$0xff]
        %v2240 = vld [vmem:[#allocation8 + $0x28] sm:$0xff]
        %v2241 = vld [vmem:[#allocation8 + $0x30] sm:$0xff]
        %v2242 = vld [vmem:[#allocation8 + $0x38] sm:$0xff]
        %v2243 = vld [vmem:[#allocation8 + $0x40] sm:$0xff]
        %v2244 = vld [vmem:[#allocation8 + $0x48] sm:$0xff]
        %v2245 = vld [vmem:[%s15] sm:$0xff]
        %v2246 = vld [vmem:[%s15 + $0x8] sm:$0xff]
        %v2247 = vld [vmem:[%s15 + $0x10] sm:$0xff]
        %v2248 = vld [vmem:[%s15 + $0x18] sm:$0xff]
        %v2249 = vld [vmem:[%s16] sm:$0x1]
        %v2251 = vlaneseq
        %v2252 = vshrl.u32 %v2251, 7
        %v2253 = vsub.s32 0, %v2252
        %v2254 = vrot.slane %v2249, %v2253
        %v2257 = vsel %vm1110, %v2235, 0
        %v2260 = vsel %vm1110, %v2236, 0
        %v2263 = vsel %vm1110, %v2237, 0
        %v2266 = vsel %vm1110, %v2238, 0
        %v2269 = vsel %vm1110, %v2239, 0
        %v2272 = vsel %vm1110, %v2240, 0
        %v2275 = vsel %vm1110, %v2241, 0
        %v2278 = vsel %vm1110, %v2242, 0
        %v2281 = vsel %vm1110, %v2243, 0
        %v2284 = vsel %vm1110, %v2244, 0
        %2286 = vmatprep.subr.mxu0 0.0
        %2287 = vmatpush1.msra.mxu0 0.0
        %2288 = vmatprep.subr.mxu0 0.0
        %2289 = vmatpush1.msra.mxu0 0.0
        %2290 = vmatprep.subr.mxu0 0.0
        %2291 = vmatpush1.msra.mxu0 0.0
        %2292 = vmatprep.subr.mxu0 0.0
        %2293 = vmatpush1.msra.mxu0 0.0
        %2294 = vmatprep.subr.mxu0 0.0
        %2295 = vmatpush1.msra.mxu0 0.0
        %2296 = vmatprep.subr.mxu0 0.0
        %2297 = vmatpush1.msra.mxu0 0.0
        %2298 = vmatprep.subr.mxu0 0.0
        %2299 = vmatpush1.msra.mxu0 0.0
        %2300 = vmatprep.subr.mxu0 0.0
        %2301 = vmatpush1.msra.mxu0 0.0
        %2302 = vmatprep.subr.mxu0 0.0
        %2303 = vmatpush1.msra.mxu0 0.0
        %2304 = vmatprep.subr.mxu0 0.0
        %2305 = vmatpush1.msra.mxu0 0.0
        %2306 = vmatprep.subr.mxu0 0.0
        %2307 = vmatpush1.msra.mxu0 0.0
        %2308 = vmatprep.subr.mxu0 0.0
        %2309 = vmatpush1.msra.mxu0 0.0
        %2310 = vmatprep.subr.mxu0 0.0
        %2311 = vmatpush1.msra.mxu0 %v2248
        %2312 = vmatprep.subr.mxu0 0.0
        %2313 = vmatpush1.msra.mxu0 %v2247
        %2314 = vmatprep.subr.mxu0 0.0
        %2315 = vmatpush1.msra.mxu0 %v2246
        %2316 = vmatprep.subr.mxu0 0.0
        %2317 = vmatpush1.msra.mxu0 %v2245
        %2318 = vmatprep.subr.mxu0 0.0
        %2319 = vmatpush2.msra.mxu0 0.0
        %2320 = vmatprep.subr.mxu0 0.0
        %2321 = vmatpush2.msra.mxu0 0.0
        %2322 = vmatprep.subr.mxu0 0.0
        %2323 = vmatpush2.msra.mxu0 0.0
        %2324 = vmatprep.subr.mxu0 0.0
        %2325 = vmatpush2.msra.mxu0 0.0
        %2326 = vmatprep.subr.mxu0 0.0
        %2327 = vmatpush2.msra.mxu0 0.0
        %2328 = vmatprep.subr.mxu0 0.0
        %2329 = vmatpush2.msra.mxu0 0.0
        %2330 = vmatprep.subr.mxu0 0.0
        %2331 = vmatpush2.msra.mxu0 0.0
        %2332 = vmatprep.subr.mxu0 0.0
        %2333 = vmatpush2.msra.mxu0 0.0
        %2334 = vmatprep.subr.mxu0 0.0
        %2335 = vmatpush2.msra.mxu0 0.0
        %2336 = vmatprep.subr.mxu0 0.0
        %2337 = vmatpush2.msra.mxu0 0.0
        %2338 = vmatprep.subr.mxu0 0.0
        %2339 = vmatpush2.msra.mxu0 0.0
        %2340 = vmatprep.subr.mxu0 0.0
        %2341 = vmatpush2.msra.mxu0 0.0
        %2342 = vmatprep.subr.mxu0 0.0
        %2343 = vmatpush2.msra.mxu0 0.0
        %2344 = vmatprep.subr.mxu0 0.0
        %2345 = vmatpush2.msra.mxu0 0.0
        %2346 = vmatprep.subr.mxu0 0.0
        %2347 = vmatpush2.msra.mxu0 0.0
        %2348 = vmatprep.subr.mxu0 0.0
        %2349 = vmatpush2.msra.mxu0 0.0
        %2350 = vmatprep.mubr.f32.mxu0 0.0
        %2351 = vmatmul.mubr.f32.gmra.mxu0 %v2257
        %v2352 = vpop.f32.mrf.mxu0
        %v2353 = vadd.f32 %v2254, %v2352
        %v2354 = vpop.f32.mrf.mxu0
        %2355 = vmatprep.mubr.f32.mxu0 0.0
        %2356 = vmatmul.mubr.f32.gmra.mxu0 %v2260
        %v2357 = vpop.f32.mrf.mxu0
        %v2358 = vadd.f32 %v2254, %v2357
        %v2359 = vpop.f32.mrf.mxu0
        %2360 = vmatprep.mubr.f32.mxu0 0.0
        %2361 = vmatmul.mubr.f32.gmra.mxu0 %v2263
        %v2362 = vpop.f32.mrf.mxu0
        %v2363 = vadd.f32 %v2254, %v2362
        %v2364 = vpop.f32.mrf.mxu0
        %2365 = vmatprep.mubr.f32.mxu0 0.0
        %2366 = vmatmul.mubr.f32.gmra.mxu0 %v2266
        %v2367 = vpop.f32.mrf.mxu0
        %v2368 = vadd.f32 %v2254, %v2367
        %v2369 = vpop.f32.mrf.mxu0
        %2370 = vmatprep.mubr.f32.mxu0 0.0
        %2371 = vmatmul.mubr.f32.gmra.mxu0 %v2269
        %v2372 = vpop.f32.mrf.mxu0
        %v2373 = vadd.f32 %v2254, %v2372
        %v2374 = vpop.f32.mrf.mxu0
        %2375 = vmatprep.mubr.f32.mxu0 0.0
        %2376 = vmatmul.mubr.f32.gmra.mxu0 %v2272
        %v2377 = vpop.f32.mrf.mxu0
        %v2378 = vadd.f32 %v2254, %v2377
        %v2379 = vpop.f32.mrf.mxu0
        %2380 = vmatprep.mubr.f32.mxu0 0.0
        %2381 = vmatmul.mubr.f32.gmra.mxu0 %v2275
        %v2382 = vpop.f32.mrf.mxu0
        %v2383 = vadd.f32 %v2254, %v2382
        %v2384 = vpop.f32.mrf.mxu0
        %2385 = vmatprep.mubr.f32.mxu0 0.0
        %2386 = vmatmul.mubr.f32.gmra.mxu0 %v2278
        %v2387 = vpop.f32.mrf.mxu0
        %v2388 = vadd.f32 %v2254, %v2387
        %v2389 = vpop.f32.mrf.mxu0
        %2390 = vmatprep.mubr.f32.mxu0 0.0
        %2391 = vmatmul.mubr.f32.gmra.mxu0 %v2281
        %v2392 = vpop.f32.mrf.mxu0
        %v2393 = vadd.f32 %v2254, %v2392
        %v2394 = vpop.f32.mrf.mxu0
        %2395 = vmatprep.mubr.f32.mxu0 0.0
        %2396 = vmatmul.mubr.f32.gmra.mxu0 %v2284
        %v2397 = vpop.f32.mrf.mxu0
        %v2398 = vadd.f32 %v2254, %v2397
        %v2399 = vpop.f32.mrf.mxu0
        %2400 = vdwg.mxu0
        %2401 = vmax.xlane.f32.xlu0 %v2353
        %v2402 = vpop.xlane.xlu0 %2401
        %2403 = vmax.xlane.f32.xlu0 %v2358
        %v2404 = vpop.xlane.xlu0 %2403
        %2405 = vmax.xlane.f32.xlu0 %v2363
        %v2406 = vpop.xlane.xlu0 %2405
        %2407 = vmax.xlane.f32.xlu0 %v2368
        %v2408 = vpop.xlane.xlu0 %2407
        %2409 = vmax.xlane.f32.xlu0 %v2373
        %v2410 = vpop.xlane.xlu0 %2409
        %2411 = vmax.xlane.f32.xlu0 %v2378
        %v2412 = vpop.xlane.xlu0 %2411
        %2413 = vmax.xlane.f32.xlu0 %v2383
        %v2414 = vpop.xlane.xlu0 %2413
        %2415 = vmax.xlane.f32.xlu0 %v2388
        %v2416 = vpop.xlane.xlu0 %2415
        %2417 = vmax.xlane.f32.xlu0 %v2393
        %v2418 = vpop.xlane.xlu0 %2417
        %2419 = vmax.xlane.f32.xlu0 %v2398
        %v2420 = vpop.xlane.xlu0 %2419
        %v2421 = vsub.f32 %v2353, %v2402
        %v2422 = vsub.f32 %v2358, %v2404
        %v2423 = vsub.f32 %v2363, %v2406
        %v2424 = vsub.f32 %v2368, %v2408
        %v2425 = vsub.f32 %v2373, %v2410
        %v2426 = vsub.f32 %v2378, %v2412
        %v2427 = vsub.f32 %v2383, %v2414
        %v2428 = vsub.f32 %v2388, %v2416
        %v2429 = vsub.f32 %v2393, %v2418
        %v2430 = vsub.f32 %v2398, %v2420
        %v2431 = vmul.f32 %v2421, 1.442695
        %v2432 = vpow.pop %v2431
        %v2433 = vmul.f32 %v2422, 1.442695
        %v2434 = vpow.pop %v2433
        %v2435 = vmul.f32 %v2423, 1.442695
        %v2436 = vpow.pop %v2435
        %v2437 = vmul.f32 %v2424, 1.442695
        %v2438 = vpow.pop %v2437
        %v2439 = vmul.f32 %v2425, 1.442695
        %v2440 = vpow.pop %v2439
        %v2441 = vmul.f32 %v2426, 1.442695
        %v2442 = vpow.pop %v2441
        %v2443 = vmul.f32 %v2427, 1.442695
        %v2444 = vpow.pop %v2443
        %v2445 = vmul.f32 %v2428, 1.442695
        %v2446 = vpow.pop %v2445
        %v2447 = vmul.f32 %v2429, 1.442695
        %v2448 = vpow.pop %v2447
        %v2449 = vmul.f32 %v2430, 1.442695
        %v2450 = vpow.pop %v2449
        %2451 = vadd.xlane.f32.xlu0 %v2432
        %v2452 = vpop.xlane.xlu0 %2451
        %2453 = vadd.xlane.f32.xlu0 %v2434
        %v2454 = vpop.xlane.xlu0 %2453
        %2455 = vadd.xlane.f32.xlu0 %v2436
        %v2456 = vpop.xlane.xlu0 %2455
        %2457 = vadd.xlane.f32.xlu0 %v2438
        %v2458 = vpop.xlane.xlu0 %2457
        %2459 = vadd.xlane.f32.xlu0 %v2440
        %v2460 = vpop.xlane.xlu0 %2459
        %2461 = vadd.xlane.f32.xlu0 %v2442
        %v2462 = vpop.xlane.xlu0 %2461
        %2463 = vadd.xlane.f32.xlu0 %v2444
        %v2464 = vpop.xlane.xlu0 %2463
        %2465 = vadd.xlane.f32.xlu0 %v2446
        %v2466 = vpop.xlane.xlu0 %2465
        %2467 = vadd.xlane.f32.xlu0 %v2448
        %v2468 = vpop.xlane.xlu0 %2467
        %2469 = vadd.xlane.f32.xlu0 %v2450
        %v2470 = vpop.xlane.xlu0 %2469
        %v2471 = vlog2.pop %v2452
        %v2472 = vmul.f32 %v2471, 0.6931472
        %v2473 = vlog2.pop %v2454
        %v2474 = vmul.f32 %v2473, 0.6931472
        %v2475 = vlog2.pop %v2456
        %v2476 = vmul.f32 %v2475, 0.6931472
        %v2477 = vlog2.pop %v2458
        %v2478 = vmul.f32 %v2477, 0.6931472
        %v2479 = vlog2.pop %v2460
        %v2480 = vmul.f32 %v2479, 0.6931472
        %v2481 = vlog2.pop %v2462
        %v2482 = vmul.f32 %v2481, 0.6931472
        %v2483 = vlog2.pop %v2464
        %v2484 = vmul.f32 %v2483, 0.6931472
        %v2485 = vlog2.pop %v2466
        %v2486 = vmul.f32 %v2485, 0.6931472
        %v2487 = vlog2.pop %v2468
        %v2488 = vmul.f32 %v2487, 0.6931472
        %v2489 = vlog2.pop %v2470
        %v2490 = vmul.f32 %v2489, 0.6931472
        %v2491 = vadd.f32 %v2402, %v2472
        %v2492 = vadd.f32 %v2404, %v2474
        %v2493 = vadd.f32 %v2406, %v2476
        %v2494 = vadd.f32 %v2408, %v2478
        %v2495 = vadd.f32 %v2410, %v2480
        %v2496 = vadd.f32 %v2412, %v2482
        %v2497 = vadd.f32 %v2414, %v2484
        %v2498 = vadd.f32 %v2416, %v2486
        %v2499 = vadd.f32 %v2418, %v2488
        %v2500 = vadd.f32 %v2420, %v2490
        %v2501 = vsub.f32 %v2353, %v2491
        %v2502 = vsub.f32 %v2358, %v2492
        %v2503 = vsub.f32 %v2363, %v2493
        %v2504 = vsub.f32 %v2368, %v2494
        %v2505 = vsub.f32 %v2373, %v2495
        %v2506 = vsub.f32 %v2378, %v2496
        %v2507 = vsub.f32 %v2383, %v2497
        %v2508 = vsub.f32 %v2388, %v2498
        %v2509 = vsub.f32 %v2393, %v2499
        %v2510 = vsub.f32 %v2398, %v2500
        %2511 = vst [vmem:[%s17] sm:$0xff] %v2501
        %2512 = vst [vmem:[%s17 + $0x8] sm:$0xff] %v2502
        %2513 = vst [vmem:[%s17 + $0x10] sm:$0xff] %v2503
        %2514 = vst [vmem:[%s17 + $0x18] sm:$0xff] %v2504
        %2515 = vst [vmem:[%s17 + $0x20] sm:$0xff] %v2505
        %2516 = vst [vmem:[%s17 + $0x28] sm:$0xff] %v2506
        %2517 = vst [vmem:[%s17 + $0x30] sm:$0xff] %v2507
        %2518 = vst [vmem:[%s17 + $0x38] sm:$0xff] %v2508
        %2519 = vst [vmem:[%s17 + $0x40] sm:$0xff] %v2509
        %2520 = vst [vmem:[%s17 + $0x48] sm:$0xff] %v2510
      $region96: #{forward.1} parent=83 // pred_fallthru
        _
      // Predicated region
      $region97: #{forward.1} parent=83 // pred_check
        %p2521 = pneg %p383
      $region98: #{forward.1} parent=83 // pred_check_branch
        %2523 = sbr.rel (%p2521) target = $region100
      $region99: #{forward.1} parent=83 // pred_region
        _
      $region100: #{forward.1} parent=83 // pred_fallthru
        _
      // Predicated region
      $region101: #{forward.1} parent=83 // pred_check
        %p2524 = pneg %p383
      $region102: #{forward.1} parent=83 // pred_check_branch
        %2526 = sbr.rel (%p2524) target = $region104
      $region103: #{forward.1} parent=83 // pred_region
        _
      $region104: #{forward.1} parent=83 // pred_fallthru
        _
    $region84: #{forward.1} parent=5 // pred_fallthru
      _
    %p2527 = scmp.le.s32.totalorder 2, %s29
    // Predicated region
    $region105: #{forward.1} parent=5 // pred_check
      %p2528 = pneg %p2527
    $region106: #{forward.1} parent=5 // pred_check_branch
      %2530 = sbr.rel (%p2528) target = $region108
    $region107: #{forward.1} parent=5 // pred_region
      %s2531 = ssub.s32 %s29, 2
    $region108: #{forward.1} parent=5 // pred_fallthru
      _
  $region6: #{forward.1} parent=0 // loop_footer
    %s33 = sadd.s32 1, %s29
  $region7: #{forward.1} parent=0 // loop_footer_branch
    %28 = sbr.rel target = $region3
  $region8: #{forward.1} parent=0 // loop_exit
    _

</llo_original>
